<compile_context>
chip_gen: v7x
topology: tpu7x:2x2x1
jax: 0.10.0
libtpu: 0.0.40
codegen_flags: <defaults>
</compile_context>

<pallas_src>
import numpy as np
import jax
import jax.numpy as jnp
from jax import lax
from jax.experimental import pallas as pl
from jax.experimental.pallas import tpu as pltpu

# ---------------- small synthetic ViT configuration ----------------
IMG_IN = 20          # raw input spatial size (before resize)
IMG_SIZE = 16        # analogue of 224
PATCH = 8            # analogue of 14
GRID = IMG_SIZE // PATCH
N_PATCH = GRID * GRID            # 4
SEQ = N_PATCH + 1                # 5 (cls + patches)
SEQ_PAD = 8                      # pad to a sublane multiple
WIDTH = 32           # analogue of 1024
HEADS = 4
HEAD_DIM = WIDTH // HEADS
LAYERS = 2           # analogue of 24
OUT_DIM = 24         # analogue of 768
OUT_PAD = 128        # lane-dense output store, sliced host-side
EPS = 1e-5

TB = 2               # images processed per grid step (batch block)
M_TOK = TB * SEQ_PAD # rows in the resident token slab

DIMG = 3 * IMG_IN * IMG_IN                      # flattened raw image length
DIMG_PAD = ((DIMG + 127) // 128) * 128          # pad to lane multiple (zero-padded)

INV_SQRT_D = 1.0 / float(np.sqrt(HEAD_DIM))

CLIP_MEAN = np.array([0.48145466, 0.4578275, 0.40821073], np.float32)
CLIP_STD = np.array([0.26862954, 0.26130258, 0.27577711], np.float32)


# ---------------- bicubic resize weight matrices (host-side, static) -------
def _cubic(s, a=-0.75):
    s = np.abs(s)
    return np.where(
        s <= 1.0, (a + 2.0) * s**3 - (a + 3.0) * s**2 + 1.0,
        np.where(s < 2.0, a * s**3 - 5.0 * a * s**2 + 8.0 * a * s - 4.0 * a, 0.0))


def bicubic_matrix(n_out, n_in):
    """Dense (n_out, n_in) matrix equivalent to torch bicubic, align_corners=True."""
    R = np.zeros((n_out, n_in), np.float64)
    if n_out == 1:
        src = np.zeros((1,))
    else:
        src = np.arange(n_out) * (n_in - 1) / (n_out - 1)
    x0 = np.floor(src).astype(np.int64)
    t = src - x0
    for off in (-1, 0, 1, 2):
        w = _cubic(t - off)
        idx = np.clip(x0 + off, 0, n_in - 1)   # border replicate (index clamp)
        for i in range(n_out):
            R[i, idx[i]] += w[i]
    return R.astype(np.float32)


# ---------------- parameters (deterministic synthetic init, PyTorch layout) -
def init_params(key):
    keys = jax.random.split(key, 4 + LAYERS)
    d_patch = 3 * PATCH * PATCH
    p = {
        # conv1 weight flattened with PyTorch order (c_in, kh, kw) -> (d_patch, WIDTH)
        'w_patch': jax.random.normal(keys[0], (d_patch, WIDTH), jnp.float32) * 0.02,
        'cls': jax.random.normal(keys[1], (1, WIDTH), jnp.float32) * 0.02,
        'pos': jax.random.normal(keys[2], (SEQ, WIDTH), jnp.float32) * 0.02,
        'ln_pre_g': jnp.ones((1, WIDTH), jnp.float32),
        'ln_pre_b': jnp.zeros((1, WIDTH), jnp.float32),
        'ln_post_g': jnp.ones((1, WIDTH), jnp.float32),
        'ln_post_b': jnp.zeros((1, WIDTH), jnp.float32),
        'proj': jax.random.normal(keys[3], (WIDTH, OUT_DIM), jnp.float32) * 0.05,
    }
    layers = []
    for l in range(LAYERS):
        lk = jax.random.split(keys[4 + l], 4)
        layers.append({
            'ln1_g': jnp.ones((1, WIDTH), jnp.float32),
            'ln1_b': jnp.zeros((1, WIDTH), jnp.float32),
            'w_qkv': jax.random.normal(lk[0], (WIDTH, 3 * WIDTH), jnp.float32) * 0.05,
            'b_qkv': jnp.zeros((1, 3 * WIDTH), jnp.float32),
            'w_o': jax.random.normal(lk[1], (WIDTH, WIDTH), jnp.float32) * 0.05,
            'b_o': jnp.zeros((1, WIDTH), jnp.float32),
            'ln2_g': jnp.ones((1, WIDTH), jnp.float32),
            'ln2_b': jnp.zeros((1, WIDTH), jnp.float32),
            'w_fc': jax.random.normal(lk[2], (WIDTH, 4 * WIDTH), jnp.float32) * 0.05,
            'b_fc': jnp.zeros((1, 4 * WIDTH), jnp.float32),
            'w_pr': jax.random.normal(lk[3], (4 * WIDTH, WIDTH), jnp.float32) * 0.05,
            'b_pr': jnp.zeros((1, WIDTH), jnp.float32),
        })
    p['layers'] = layers
    return p


# ---------------- host-side packing for the fused kernel -------------------
def pack_params(params):
    RY = bicubic_matrix(IMG_SIZE, IMG_IN)                 # (16, IMG_IN)
    RX = bicubic_matrix(IMG_SIZE, IMG_IN)                 # (16, IMG_IN)
    scale = (0.5 / CLIP_STD).astype(np.float32)           # fold (x+1)/2 + normalize
    offset = ((0.5 - CLIP_MEAN) / CLIP_STD).astype(np.float32)

    wp = np.asarray(params['w_patch']).reshape(3, PATCH, PATCH, WIDTH)  # [c,py,px,k]
    RYp = RY.reshape(GRID, PATCH, IMG_IN)                 # [gy, py, ih]
    RXp = RX.reshape(GRID, PATCH, IMG_IN)                 # [gx, px, iw]
    # Exact fold of (bicubic resize -> affine normalize -> stride-PATCH conv):
    # emb[b, n, k] = img_flat[b, :] @ w_pre[:, n*WIDTH + k] + emb_const[k]
    M = np.einsum('gpi,hqj,cpqk->ghcijk', RYp, RXp, wp, optimize=True)
    M = M * scale[None, None, :, None, None, None]
    w_pre = M.reshape(N_PATCH, DIMG, WIDTH).astype(np.float32)
    w_pre = np.pad(w_pre, ((0, 0), (0, DIMG_PAD - DIMG), (0, 0)))
    # lane-dense layout (DIMG_PAD, N_PATCH*WIDTH): all patch embeddings in ONE matmul
    w_pre = np.ascontiguousarray(w_pre.transpose(1, 0, 2)).reshape(
        DIMG_PAD, N_PATCH * WIDTH)
    emb_const = np.einsum('c,cpqk->k', offset, wp).astype(np.float32)   # (WIDTH,)

    # cls + pos (+ affine const) folded; padded to SEQ_PAD rows; tiled over TB images
    tok0 = np.zeros((SEQ_PAD, WIDTH), np.float32)
    tok0[:SEQ] = np.asarray(params['pos'])
    tok0[0] += np.asarray(params['cls'])[0]
    tok0[1:SEQ] += emb_const[None, :]
    tok0 = np.tile(tok0, (TB, 1))                          # (TB*SEQ_PAD, WIDTH)

    # block-diagonal attention mask: keys valid only inside the same image and s<SEQ
    bi = np.arange(M_TOK) // SEQ_PAD
    si = np.arange(M_TOK) % SEQ_PAD
    valid_key = si < SEQ
    mask = np.where((bi[:, None] == bi[None, :]) & valid_key[None, :],
                    0.0, -1e30).astype(np.float32)         # (M_TOK, M_TOK)

    ln_pre = np.stack([np.asarray(params['ln_pre_g'])[0],
                       np.asarray(params['ln_pre_b'])[0]], axis=0)      # (2, W)
    ln_post = np.stack([np.asarray(params['ln_post_g'])[0],
                        np.asarray(params['ln_post_b'])[0]], axis=0)    # (2, W)

    def stack(key):
        return np.stack([np.asarray(lp[key]) for lp in params['layers']])

    wqkv = stack('w_qkv')                                  # (L, W, 3W) fused QKV
    bqkv = stack('b_qkv').reshape(LAYERS, 1, 3 * WIDTH)
    wo = stack('w_o')                                      # (L, W, W)
    bo = stack('b_o').reshape(LAYERS, 1, WIDTH)
    lnl = np.stack([
        np.concatenate([np.asarray(lp['ln1_g']), np.asarray(lp['ln1_b']),
                        np.asarray(lp['ln2_g']), np.asarray(lp['ln2_b'])], axis=0)
        for lp in params['layers']])                       # (L, 4, W)
    wfc = stack('w_fc')                                    # (L, W, 4W)
    bfc = stack('b_fc').reshape(LAYERS, 1, 4 * WIDTH)
    wpr = stack('w_pr')                                    # (L, 4W, W)
    bpr = stack('b_pr').reshape(LAYERS, 1, WIDTH)

    proj = np.zeros((WIDTH, OUT_PAD), np.float32)          # lane-dense final projection
    proj[:, :OUT_DIM] = np.asarray(params['proj'])

    f32, bf16 = jnp.float32, jnp.bfloat16
    return dict(
        w_pre=jnp.asarray(w_pre, bf16),
        tok0=jnp.asarray(tok0, f32),
        mask=jnp.asarray(mask, f32),
        ln_pre=jnp.asarray(ln_pre, f32),
        ln_layers=jnp.asarray(lnl, f32),
        w_qkv=jnp.asarray(wqkv, bf16), b_qkv=jnp.asarray(bqkv, f32),
        w_o=jnp.asarray(wo, bf16), b_o=jnp.asarray(bo, f32),
        w_fc=jnp.asarray(wfc, bf16), b_fc=jnp.asarray(bfc, f32),
        w_pr=jnp.asarray(wpr, bf16), b_pr=jnp.asarray(bpr, f32),
        ln_post=jnp.asarray(ln_post, f32),
        proj=jnp.asarray(proj, bf16),
    )


# ---------------- the single fused kernel ----------------------------------
def _clip_fused_kernel(img_ref, wpre_ref, tok0_ref, mask_ref, lnpre_ref, lnlyr_ref,
                       wqkv_ref, bqkv_ref, wo_ref, bo_ref,
                       wfc_ref, bfc_ref, wpr_ref, bpr_ref,
                       lnpost_ref, proj_ref, out_ref):

    def layernorm(v, g, b):                     # f32 elementwise (v5e-safe)
        mu = jnp.mean(v, axis=-1, keepdims=True)
        var = jnp.mean(jnp.square(v - mu), axis=-1, keepdims=True)
        return (v - mu) * lax.rsqrt(var + EPS) * g + b

    # ---- fused (bicubic resize -> (x+1)/2 -> mean/std norm -> patch conv): one matmul
    img = img_ref[0].astype(jnp.bfloat16)                         # (TB, DIMG_PAD)
    emb = jnp.dot(img, wpre_ref[...],
                  preferred_element_type=jnp.float32)             # (TB, N_PATCH*WIDTH)

    # ---- build the full (TB*SEQ_PAD, WIDTH) token slab in registers (no per-row stores)
    zero1 = jnp.zeros((1, WIDTH), jnp.float32)
    zpad = jnp.zeros((SEQ_PAD - SEQ, WIDTH), jnp.float32)
    pieces = []
    for b in range(TB):                                           # static, tiny
        pieces.append(zero1)                                      # cls slot (value in tok0)
        for n in range(N_PATCH):
            pieces.append(emb[b:b + 1, n * WIDTH:(n + 1) * WIDTH])
        pieces.append(zpad)                                       # padded rows
    tok = jnp.concatenate(pieces, axis=0) + tok0_ref[...]         # + cls/pos/affine-const
    tok = layernorm(tok, lnpre_ref[0:1, :], lnpre_ref[1:2, :])    # ln_pre

    mask = mask_ref[...]                                          # (M_TOK, M_TOK)

    # ---- all residual attention blocks inside the kernel (no per-layer grid steps)
    # TODO(synk): switch to lax.fori_loop with dynamic ref indexing at real ViT depth.
    for l in range(LAYERS):
        ln = lnlyr_ref[l]                                         # (4, WIDTH)

        # -- attention --
        h = layernorm(tok, ln[0:1, :], ln[1:2, :]).astype(jnp.bfloat16)
        qkv = jnp.dot(h, wqkv_ref[l],
                      preferred_element_type=jnp.float32) + bqkv_ref[l]   # (M_TOK, 3W)
        ctx = []
        for hh in range(HEADS):                                   # static unroll
            q = qkv[:, hh * HEAD_DIM:(hh + 1) * HEAD_DIM] * INV_SQRT_D
            k = qkv[:, WIDTH + hh * HEAD_DIM:WIDTH + (hh + 1) * HEAD_DIM]
            v = qkv[:, 2 * WIDTH + hh * HEAD_DIM:2 * WIDTH + (hh + 1) * HEAD_DIM]
            s = lax.dot_general(q, k, (((1,), (1,)), ((), ())),
                                preferred_element_type=jnp.float32) + mask
            s = s - jnp.max(s, axis=-1, keepdims=True)
            p = jnp.exp(s)
            p = p / jnp.sum(p, axis=-1, keepdims=True)            # exact softmax (f32)
            ctx.append(jnp.dot(p, v, preferred_element_type=jnp.float32))
        ctx = jnp.concatenate(ctx, axis=-1).astype(jnp.bfloat16)  # (M_TOK, WIDTH)
        attn = jnp.dot(ctx, wo_ref[l],
                       preferred_element_type=jnp.float32) + bo_ref[l]
        x = tok + attn

        # -- MLP with QuickGELU (CLIP) --
        h2 = layernorm(x, ln[2:3, :], ln[3:4, :]).astype(jnp.bfloat16)
        hid = jnp.dot(h2, wfc_ref[l],
                      preferred_element_type=jnp.float32) + bfc_ref[l]
        hid = hid * jax.nn.sigmoid(1.702 * hid)                   # f32 elementwise
        tok = x + jnp.dot(hid.astype(jnp.bfloat16), wpr_ref[l],
                          preferred_element_type=jnp.float32) + bpr_ref[l]

    # ---- ln_post on the per-image class tokens, final projection (lane-dense store)
    cls_tok = jnp.concatenate(
        [tok[b * SEQ_PAD:b * SEQ_PAD + 1, :] for b in range(TB)], axis=0)  # (TB, WIDTH)
    cls_n = layernorm(cls_tok, lnpost_ref[0:1, :], lnpost_ref[1:2, :]).astype(jnp.bfloat16)
    out_ref[0] = jnp.dot(cls_n, proj_ref[...], preferred_element_type=jnp.float32)


# ---------------- full forward (FrozenCLIPVisionEmbedder_Justin.forward) ---
def clip_vision_forward(packed, x):
    # x: NCHW float32 in [-1, 1]
    B = x.shape[0]
    assert B % TB == 0, "batch must be a multiple of the batch block TB"
    img = x.reshape(B, DIMG).astype(jnp.float32)                  # contiguous NCHW flatten
    img = jnp.pad(img, ((0, 0), (0, DIMG_PAD - DIMG)))
    img = img.reshape(B // TB, TB, DIMG_PAD)

    def const(arr):
        nd = arr.ndim
        return pl.BlockSpec(arr.shape, lambda b, _nd=nd: (0,) * _nd)

    out = pl.pallas_call(
        _clip_fused_kernel,
        out_shape=jax.ShapeDtypeStruct((B // TB, TB, OUT_PAD), jnp.float32),
        grid=(B // TB,),
        in_specs=[
            pl.BlockSpec((1, TB, DIMG_PAD), lambda b: (b, 0, 0)),  # per-step image block
            const(packed['w_pre']),        # fused preprocess + patch embed (bf16)
            const(packed['tok0']),         # cls + pos + affine const, tiled (f32)
            const(packed['mask']),         # block-diagonal attention mask (f32)
            const(packed['ln_pre']),       # ln_pre gamma/beta
            const(packed['ln_layers']),    # per-layer ln1/ln2 gamma/beta
            const(packed['w_qkv']), const(packed['b_qkv']),
            const(packed['w_o']), const(packed['b_o']),
            const(packed['w_fc']), const(packed['b_fc']),
            const(packed['w_pr']), const(packed['b_pr']),
            const(packed['ln_post']),
            const(packed['proj']),
        ],
        out_specs=pl.BlockSpec((1, TB, OUT_PAD), lambda b: (b, 0, 0)),
        compiler_params=pltpu.CompilerParams(
            dimension_semantics=("parallel",)),                   # batch blocks across TCs
    )(img, packed['w_pre'], packed['tok0'], packed['mask'], packed['ln_pre'],
      packed['ln_layers'], packed['w_qkv'], packed['b_qkv'], packed['w_o'],
      packed['b_o'], packed['w_fc'], packed['b_fc'], packed['w_pr'],
      packed['b_pr'], packed['ln_post'], packed['proj'])

    return out.reshape(B, OUT_PAD)[:, :OUT_DIM].astype(jnp.float32)   # .float()


if __name__ == "__main__":
    key = jax.random.PRNGKey(0)
    kx, kp = jax.random.split(key)
    B = 2 * TB                                   # 4 images -> 2 grid steps (both v7x TCs)
    x = jax.random.uniform(kx, (B, 3, IMG_IN, IMG_IN), jnp.float32, -1.0, 1.0)
    params = init_params(kp)
    packed = pack_params(params)

    fwd = jax.jit(clip_vision_forward)
    out = fwd(packed, x)
    jax.block_until_ready(out)

    assert out.shape == (B, OUT_DIM), out.shape
    assert out.dtype == jnp.float32, out.dtype
    assert bool(jnp.all(jnp.isfinite(out)))
    print("KERNEL_OK")
</pallas_src>

<mosaic_0001>
module attributes {stable_mosaic.version = 11 : i64} {
  func.func @_clip_fused_kernel(%arg0: i32, %arg1: memref<1x2x1280xf32, #tpu.memory_space<vmem>>, %arg2: memref<1280x128xbf16, #tpu.memory_space<vmem>>, %arg3: memref<16x32xf32, #tpu.memory_space<vmem>>, %arg4: memref<16x16xf32, #tpu.memory_space<vmem>>, %arg5: memref<2x32xf32, #tpu.memory_space<vmem>>, %arg6: memref<2x4x32xf32, #tpu.memory_space<vmem>>, %arg7: memref<2x32x96xbf16, #tpu.memory_space<vmem>>, %arg8: memref<2x1x96xf32, #tpu.memory_space<vmem>>, %arg9: memref<2x32x32xbf16, #tpu.memory_space<vmem>>, %arg10: memref<2x1x32xf32, #tpu.memory_space<vmem>>, %arg11: memref<2x32x128xbf16, #tpu.memory_space<vmem>>, %arg12: memref<2x1x128xf32, #tpu.memory_space<vmem>>, %arg13: memref<2x128x32xbf16, #tpu.memory_space<vmem>>, %arg14: memref<2x1x32xf32, #tpu.memory_space<vmem>>, %arg15: memref<2x32xf32, #tpu.memory_space<vmem>>, %arg16: memref<32x128xbf16, #tpu.memory_space<vmem>>, %arg17: memref<1x2x128xf32, #tpu.memory_space<vmem>>) attributes {dimension_semantics = [#tpu.dimension_semantics<parallel>], iteration_bounds = array<i64: 2>, scalar_prefetch = 0 : i64, scratch_operands = 0 : i64, tpu.core_type = #tpu.core_type<tc>, window_params = [{transform_indices = @transform_0, window_bounds = array<i64: 1, 2, 1280>}, {pipeline_mode = #tpu.pipeline_mode<synchronous>, transform_indices = @transform_1, window_bounds = array<i64: 1280, 128>}, {pipeline_mode = #tpu.pipeline_mode<synchronous>, transform_indices = @transform_2, window_bounds = array<i64: 16, 32>}, {pipeline_mode = #tpu.pipeline_mode<synchronous>, transform_indices = @transform_3, window_bounds = array<i64: 16, 16>}, {pipeline_mode = #tpu.pipeline_mode<synchronous>, transform_indices = @transform_4, window_bounds = array<i64: 2, 32>}, {pipeline_mode = #tpu.pipeline_mode<synchronous>, transform_indices = @transform_5, window_bounds = array<i64: 2, 4, 32>}, {pipeline_mode = #tpu.pipeline_mode<synchronous>, transform_indices = @transform_6, window_bounds = array<i64: 2, 32, 96>}, {pipeline_mode = #tpu.pipeline_mode<synchronous>, transform_indices = @transform_7, window_bounds = array<i64: 2, 1, 96>}, {pipeline_mode = #tpu.pipeline_mode<synchronous>, transform_indices = @transform_8, window_bounds = array<i64: 2, 32, 32>}, {pipeline_mode = #tpu.pipeline_mode<synchronous>, transform_indices = @transform_9, window_bounds = array<i64: 2, 1, 32>}, {pipeline_mode = #tpu.pipeline_mode<synchronous>, transform_indices = @transform_10, window_bounds = array<i64: 2, 32, 128>}, {pipeline_mode = #tpu.pipeline_mode<synchronous>, transform_indices = @transform_11, window_bounds = array<i64: 2, 1, 128>}, {pipeline_mode = #tpu.pipeline_mode<synchronous>, transform_indices = @transform_12, window_bounds = array<i64: 2, 128, 32>}, {pipeline_mode = #tpu.pipeline_mode<synchronous>, transform_indices = @transform_13, window_bounds = array<i64: 2, 1, 32>}, {pipeline_mode = #tpu.pipeline_mode<synchronous>, transform_indices = @transform_14, window_bounds = array<i64: 2, 32>}, {pipeline_mode = #tpu.pipeline_mode<synchronous>, transform_indices = @transform_15, window_bounds = array<i64: 32, 128>}, {transform_indices = @transform_16, window_bounds = array<i64: 1, 2, 128>}]} {
    %c0 = arith.constant 0 : index
    %c0_0 = arith.constant 0 : index
    %c0_1 = arith.constant 0 : index
    %0 = vector.load %arg1[%c0, %c0_0, %c0_1] : memref<1x2x1280xf32, #tpu.memory_space<vmem>>, vector<1x2x1280xf32>
    %1 = vector.shape_cast %0 : vector<1x2x1280xf32> to vector<2x1280xf32>
    %2 = arith.truncf %1 : vector<2x1280xf32> to vector<2x1280xbf16>
    %c0_2 = arith.constant 0 : index
    %c0_3 = arith.constant 0 : index
    %3 = vector.load %arg2[%c0_2, %c0_3] : memref<1280x128xbf16, #tpu.memory_space<vmem>>, vector<1280x128xbf16>
    %cst = arith.constant dense<0.000000e+00> : vector<2x128xf32>
    %4 = tpu.matmul %2, %3, %cst {dimension_numbers = #tpu.dot_dimension_numbers<[1], [0], [0], [1], [0, 0, 1, 1], [], []>} : vector<2x1280xbf16>, vector<1280x128xbf16>, vector<2x128xf32> -> vector<2x128xf32>
    %cst_4 = arith.constant 0.000000e+00 : f32
    %5 = vector.broadcast %cst_4 : f32 to vector<1x32xf32>
    %cst_5 = arith.constant 0.000000e+00 : f32
    %6 = vector.broadcast %cst_5 : f32 to vector<3x32xf32>
    %7 = vector.extract_strided_slice %4 {offsets = [0, 0], sizes = [1, 32], strides = [1, 1]} : vector<2x128xf32> to vector<1x32xf32>
    %8 = vector.extract_strided_slice %4 {offsets = [0, 32], sizes = [1, 32], strides = [1, 1]} : vector<2x128xf32> to vector<1x32xf32>
    %9 = vector.extract_strided_slice %4 {offsets = [0, 64], sizes = [1, 32], strides = [1, 1]} : vector<2x128xf32> to vector<1x32xf32>
    %10 = vector.extract_strided_slice %4 {offsets = [0, 96], sizes = [1, 32], strides = [1, 1]} : vector<2x128xf32> to vector<1x32xf32>
    %11 = vector.extract_strided_slice %4 {offsets = [1, 0], sizes = [1, 32], strides = [1, 1]} : vector<2x128xf32> to vector<1x32xf32>
    %12 = vector.extract_strided_slice %4 {offsets = [1, 32], sizes = [1, 32], strides = [1, 1]} : vector<2x128xf32> to vector<1x32xf32>
    %13 = vector.extract_strided_slice %4 {offsets = [1, 64], sizes = [1, 32], strides = [1, 1]} : vector<2x128xf32> to vector<1x32xf32>
    %14 = vector.extract_strided_slice %4 {offsets = [1, 96], sizes = [1, 32], strides = [1, 1]} : vector<2x128xf32> to vector<1x32xf32>
    %15 = tpu.concatenate %5, %7, %8, %9, %10, %6, %5, %11, %12, %13, %14, %6 in 0 : vector<1x32xf32>, vector<1x32xf32>, vector<1x32xf32>, vector<1x32xf32>, vector<1x32xf32>, vector<3x32xf32>, vector<1x32xf32>, vector<1x32xf32>, vector<1x32xf32>, vector<1x32xf32>, vector<1x32xf32>, vector<3x32xf32> -> vector<16x32xf32>
    %c0_6 = arith.constant 0 : index
    %c0_7 = arith.constant 0 : index
    %16 = vector.load %arg3[%c0_6, %c0_7] : memref<16x32xf32, #tpu.memory_space<vmem>>, vector<16x32xf32>
    %17 = arith.addf %15, %16 : vector<16x32xf32>
    %c0_8 = arith.constant 0 : index
    %c0_9 = arith.constant 0 : index
    %18 = vector.load %arg5[%c0_8, %c0_9] : memref<2x32xf32, #tpu.memory_space<vmem>>, vector<1x32xf32>
    %c1 = arith.constant 1 : index
    %c0_10 = arith.constant 0 : index
    %19 = vector.load %arg5[%c1, %c0_10] : memref<2x32xf32, #tpu.memory_space<vmem>>, vector<1x32xf32>
    %cst_11 = arith.constant dense<0.000000e+00> : vector<16xf32>
    %20 = vector.multi_reduction <add>, %17, %cst_11 [1] : vector<16x32xf32> to vector<16xf32>
    %21 = vector.shape_cast %20 : vector<16xf32> to vector<16x1xf32>
    %cst_12 = arith.constant 3.200000e+01 : f32
    %22 = vector.broadcast %cst_12 : f32 to vector<16x1xf32>
    %23 = arith.divf %21, %22 : vector<16x1xf32>
    %24 = vector.broadcast %23 : vector<16x1xf32> to vector<16x32xf32>
    %25 = arith.subf %17, %24 : vector<16x32xf32>
    %26 = arith.mulf %25, %25 : vector<16x32xf32>
    %cst_13 = arith.constant dense<0.000000e+00> : vector<16xf32>
    %27 = vector.multi_reduction <add>, %26, %cst_13 [1] : vector<16x32xf32> to vector<16xf32>
    %28 = vector.shape_cast %27 : vector<16xf32> to vector<16x1xf32>
    %cst_14 = arith.constant 3.200000e+01 : f32
    %29 = vector.broadcast %cst_14 : f32 to vector<16x1xf32>
    %30 = arith.divf %28, %29 : vector<16x1xf32>
    %31 = vector.broadcast %23 : vector<16x1xf32> to vector<16x32xf32>
    %32 = arith.subf %17, %31 : vector<16x32xf32>
    %cst_15 = arith.constant 9.99999974E-6 : f32
    %33 = vector.broadcast %cst_15 : f32 to vector<16x1xf32>
    %34 = arith.addf %30, %33 : vector<16x1xf32>
    %35 = math.rsqrt %34 : vector<16x1xf32>
    %36 = vector.broadcast %35 : vector<16x1xf32> to vector<16x32xf32>
    %37 = arith.mulf %32, %36 : vector<16x32xf32>
    %38 = vector.broadcast %18 : vector<1x32xf32> to vector<16x32xf32>
    %39 = arith.mulf %37, %38 : vector<16x32xf32>
    %40 = vector.broadcast %19 : vector<1x32xf32> to vector<16x32xf32>
    %41 = arith.addf %39, %40 : vector<16x32xf32>
    %c0_16 = arith.constant 0 : index
    %c0_17 = arith.constant 0 : index
    %42 = vector.load %arg4[%c0_16, %c0_17] : memref<16x16xf32, #tpu.memory_space<vmem>>, vector<16x16xf32>
    %c0_18 = arith.constant 0 : index
    %c0_19 = arith.constant 0 : index
    %c0_20 = arith.constant 0 : index
    %43 = vector.load %arg6[%c0_18, %c0_19, %c0_20] : memref<2x4x32xf32, #tpu.memory_space<vmem>>, vector<1x4x32xf32>
    %44 = vector.shape_cast %43 : vector<1x4x32xf32> to vector<4x32xf32>
    %45 = vector.extract_strided_slice %44 {offsets = [0, 0], sizes = [1, 32], strides = [1, 1]} : vector<4x32xf32> to vector<1x32xf32>
    %46 = vector.extract_strided_slice %44 {offsets = [1, 0], sizes = [1, 32], strides = [1, 1]} : vector<4x32xf32> to vector<1x32xf32>
    %cst_21 = arith.constant dense<0.000000e+00> : vector<16xf32>
    %47 = vector.multi_reduction <add>, %41, %cst_21 [1] : vector<16x32xf32> to vector<16xf32>
    %48 = vector.shape_cast %47 : vector<16xf32> to vector<16x1xf32>
    %cst_22 = arith.constant 3.200000e+01 : f32
    %49 = vector.broadcast %cst_22 : f32 to vector<16x1xf32>
    %50 = arith.divf %48, %49 : vector<16x1xf32>
    %51 = vector.broadcast %50 : vector<16x1xf32> to vector<16x32xf32>
    %52 = arith.subf %41, %51 : vector<16x32xf32>
    %53 = arith.mulf %52, %52 : vector<16x32xf32>
    %cst_23 = arith.constant dense<0.000000e+00> : vector<16xf32>
    %54 = vector.multi_reduction <add>, %53, %cst_23 [1] : vector<16x32xf32> to vector<16xf32>
    %55 = vector.shape_cast %54 : vector<16xf32> to vector<16x1xf32>
    %cst_24 = arith.constant 3.200000e+01 : f32
    %56 = vector.broadcast %cst_24 : f32 to vector<16x1xf32>
    %57 = arith.divf %55, %56 : vector<16x1xf32>
    %58 = vector.broadcast %50 : vector<16x1xf32> to vector<16x32xf32>
    %59 = arith.subf %41, %58 : vector<16x32xf32>
    %cst_25 = arith.constant 9.99999974E-6 : f32
    %60 = vector.broadcast %cst_25 : f32 to vector<16x1xf32>
    %61 = arith.addf %57, %60 : vector<16x1xf32>
    %62 = math.rsqrt %61 : vector<16x1xf32>
    %63 = vector.broadcast %62 : vector<16x1xf32> to vector<16x32xf32>
    %64 = arith.mulf %59, %63 : vector<16x32xf32>
    %65 = vector.broadcast %45 : vector<1x32xf32> to vector<16x32xf32>
    %66 = arith.mulf %64, %65 : vector<16x32xf32>
    %67 = vector.broadcast %46 : vector<1x32xf32> to vector<16x32xf32>
    %68 = arith.addf %66, %67 : vector<16x32xf32>
    %69 = arith.truncf %68 : vector<16x32xf32> to vector<16x32xbf16>
    %c0_26 = arith.constant 0 : index
    %c0_27 = arith.constant 0 : index
    %c0_28 = arith.constant 0 : index
    %70 = vector.load %arg7[%c0_26, %c0_27, %c0_28] : memref<2x32x96xbf16, #tpu.memory_space<vmem>>, vector<1x32x96xbf16>
    %71 = vector.shape_cast %70 : vector<1x32x96xbf16> to vector<32x96xbf16>
    %cst_29 = arith.constant dense<0.000000e+00> : vector<16x96xf32>
    %72 = tpu.matmul %69, %71, %cst_29 {dimension_numbers = #tpu.dot_dimension_numbers<[1], [0], [0], [1], [0, 0, 1, 1], [], []>} : vector<16x32xbf16>, vector<32x96xbf16>, vector<16x96xf32> -> vector<16x96xf32>
    %c0_30 = arith.constant 0 : index
    %c0_31 = arith.constant 0 : index
    %c0_32 = arith.constant 0 : index
    %73 = vector.load %arg8[%c0_30, %c0_31, %c0_32] : memref<2x1x96xf32, #tpu.memory_space<vmem>>, vector<1x1x96xf32>
    %74 = vector.shape_cast %73 : vector<1x1x96xf32> to vector<1x96xf32>
    %75 = vector.broadcast %74 : vector<1x96xf32> to vector<16x96xf32>
    %76 = arith.addf %72, %75 : vector<16x96xf32>
    %77 = vector.extract_strided_slice %76 {offsets = [0, 0], sizes = [16, 8], strides = [1, 1]} : vector<16x96xf32> to vector<16x8xf32>
    %cst_33 = arith.constant 0.353553385 : f32
    %78 = vector.broadcast %cst_33 : f32 to vector<16x8xf32>
    %79 = arith.mulf %77, %78 : vector<16x8xf32>
    %80 = vector.extract_strided_slice %76 {offsets = [0, 32], sizes = [16, 8], strides = [1, 1]} : vector<16x96xf32> to vector<16x8xf32>
    %81 = vector.extract_strided_slice %76 {offsets = [0, 64], sizes = [16, 8], strides = [1, 1]} : vector<16x96xf32> to vector<16x8xf32>
    %cst_34 = arith.constant dense<0.000000e+00> : vector<16x16xf32>
    %82 = tpu.matmul %79, %80, %cst_34 {dimension_numbers = #tpu.dot_dimension_numbers<[1], [1], [0], [0], [0, 0, 1, 0], [], []>} : vector<16x8xf32>, vector<16x8xf32>, vector<16x16xf32> -> vector<16x16xf32>
    %83 = arith.addf %82, %42 : vector<16x16xf32>
    %cst_35 = arith.constant dense<0xFF800000> : vector<16xf32>
    %84 = vector.multi_reduction <maximumf>, %83, %cst_35 [1] : vector<16x16xf32> to vector<16xf32>
    %85 = vector.shape_cast %84 : vector<16xf32> to vector<16x1xf32>
    %86 = vector.broadcast %85 : vector<16x1xf32> to vector<16x16xf32>
    %87 = arith.subf %83, %86 : vector<16x16xf32>
    %88 = math.exp %87 : vector<16x16xf32>
    %cst_36 = arith.constant dense<0.000000e+00> : vector<16xf32>
    %89 = vector.multi_reduction <add>, %88, %cst_36 [1] : vector<16x16xf32> to vector<16xf32>
    %90 = vector.shape_cast %89 : vector<16xf32> to vector<16x1xf32>
    %91 = vector.broadcast %90 : vector<16x1xf32> to vector<16x16xf32>
    %92 = arith.divf %88, %91 : vector<16x16xf32>
    %cst_37 = arith.constant dense<0.000000e+00> : vector<16x8xf32>
    %93 = tpu.matmul %92, %81, %cst_37 {dimension_numbers = #tpu.dot_dimension_numbers<[1], [0], [0], [1], [0, 0, 1, 1], [], []>} : vector<16x16xf32>, vector<16x8xf32>, vector<16x8xf32> -> vector<16x8xf32>
    %94 = vector.extract_strided_slice %76 {offsets = [0, 8], sizes = [16, 8], strides = [1, 1]} : vector<16x96xf32> to vector<16x8xf32>
    %cst_38 = arith.constant 0.353553385 : f32
    %95 = vector.broadcast %cst_38 : f32 to vector<16x8xf32>
    %96 = arith.mulf %94, %95 : vector<16x8xf32>
    %97 = vector.extract_strided_slice %76 {offsets = [0, 40], sizes = [16, 8], strides = [1, 1]} : vector<16x96xf32> to vector<16x8xf32>
    %98 = vector.extract_strided_slice %76 {offsets = [0, 72], sizes = [16, 8], strides = [1, 1]} : vector<16x96xf32> to vector<16x8xf32>
    %cst_39 = arith.constant dense<0.000000e+00> : vector<16x16xf32>
    %99 = tpu.matmul %96, %97, %cst_39 {dimension_numbers = #tpu.dot_dimension_numbers<[1], [1], [0], [0], [0, 0, 1, 0], [], []>} : vector<16x8xf32>, vector<16x8xf32>, vector<16x16xf32> -> vector<16x16xf32>
    %100 = arith.addf %99, %42 : vector<16x16xf32>
    %cst_40 = arith.constant dense<0xFF800000> : vector<16xf32>
    %101 = vector.multi_reduction <maximumf>, %100, %cst_40 [1] : vector<16x16xf32> to vector<16xf32>
    %102 = vector.shape_cast %101 : vector<16xf32> to vector<16x1xf32>
    %103 = vector.broadcast %102 : vector<16x1xf32> to vector<16x16xf32>
    %104 = arith.subf %100, %103 : vector<16x16xf32>
    %105 = math.exp %104 : vector<16x16xf32>
    %cst_41 = arith.constant dense<0.000000e+00> : vector<16xf32>
    %106 = vector.multi_reduction <add>, %105, %cst_41 [1] : vector<16x16xf32> to vector<16xf32>
    %107 = vector.shape_cast %106 : vector<16xf32> to vector<16x1xf32>
    %108 = vector.broadcast %107 : vector<16x1xf32> to vector<16x16xf32>
    %109 = arith.divf %105, %108 : vector<16x16xf32>
    %cst_42 = arith.constant dense<0.000000e+00> : vector<16x8xf32>
    %110 = tpu.matmul %109, %98, %cst_42 {dimension_numbers = #tpu.dot_dimension_numbers<[1], [0], [0], [1], [0, 0, 1, 1], [], []>} : vector<16x16xf32>, vector<16x8xf32>, vector<16x8xf32> -> vector<16x8xf32>
    %111 = vector.extract_strided_slice %76 {offsets = [0, 16], sizes = [16, 8], strides = [1, 1]} : vector<16x96xf32> to vector<16x8xf32>
    %cst_43 = arith.constant 0.353553385 : f32
    %112 = vector.broadcast %cst_43 : f32 to vector<16x8xf32>
    %113 = arith.mulf %111, %112 : vector<16x8xf32>
    %114 = vector.extract_strided_slice %76 {offsets = [0, 48], sizes = [16, 8], strides = [1, 1]} : vector<16x96xf32> to vector<16x8xf32>
    %115 = vector.extract_strided_slice %76 {offsets = [0, 80], sizes = [16, 8], strides = [1, 1]} : vector<16x96xf32> to vector<16x8xf32>
    %cst_44 = arith.constant dense<0.000000e+00> : vector<16x16xf32>
    %116 = tpu.matmul %113, %114, %cst_44 {dimension_numbers = #tpu.dot_dimension_numbers<[1], [1], [0], [0], [0, 0, 1, 0], [], []>} : vector<16x8xf32>, vector<16x8xf32>, vector<16x16xf32> -> vector<16x16xf32>
    %117 = arith.addf %116, %42 : vector<16x16xf32>
    %cst_45 = arith.constant dense<0xFF800000> : vector<16xf32>
    %118 = vector.multi_reduction <maximumf>, %117, %cst_45 [1] : vector<16x16xf32> to vector<16xf32>
    %119 = vector.shape_cast %118 : vector<16xf32> to vector<16x1xf32>
    %120 = vector.broadcast %119 : vector<16x1xf32> to vector<16x16xf32>
    %121 = arith.subf %117, %120 : vector<16x16xf32>
    %122 = math.exp %121 : vector<16x16xf32>
    %cst_46 = arith.constant dense<0.000000e+00> : vector<16xf32>
    %123 = vector.multi_reduction <add>, %122, %cst_46 [1] : vector<16x16xf32> to vector<16xf32>
    %124 = vector.shape_cast %123 : vector<16xf32> to vector<16x1xf32>
    %125 = vector.broadcast %124 : vector<16x1xf32> to vector<16x16xf32>
    %126 = arith.divf %122, %125 : vector<16x16xf32>
    %cst_47 = arith.constant dense<0.000000e+00> : vector<16x8xf32>
    %127 = tpu.matmul %126, %115, %cst_47 {dimension_numbers = #tpu.dot_dimension_numbers<[1], [0], [0], [1], [0, 0, 1, 1], [], []>} : vector<16x16xf32>, vector<16x8xf32>, vector<16x8xf32> -> vector<16x8xf32>
    %128 = vector.extract_strided_slice %76 {offsets = [0, 24], sizes = [16, 8], strides = [1, 1]} : vector<16x96xf32> to vector<16x8xf32>
    %cst_48 = arith.constant 0.353553385 : f32
    %129 = vector.broadcast %cst_48 : f32 to vector<16x8xf32>
    %130 = arith.mulf %128, %129 : vector<16x8xf32>
    %131 = vector.extract_strided_slice %76 {offsets = [0, 56], sizes = [16, 8], strides = [1, 1]} : vector<16x96xf32> to vector<16x8xf32>
    %132 = vector.extract_strided_slice %76 {offsets = [0, 88], sizes = [16, 8], strides = [1, 1]} : vector<16x96xf32> to vector<16x8xf32>
    %cst_49 = arith.constant dense<0.000000e+00> : vector<16x16xf32>
    %133 = tpu.matmul %130, %131, %cst_49 {dimension_numbers = #tpu.dot_dimension_numbers<[1], [1], [0], [0], [0, 0, 1, 0], [], []>} : vector<16x8xf32>, vector<16x8xf32>, vector<16x16xf32> -> vector<16x16xf32>
    %134 = arith.addf %133, %42 : vector<16x16xf32>
    %cst_50 = arith.constant dense<0xFF800000> : vector<16xf32>
    %135 = vector.multi_reduction <maximumf>, %134, %cst_50 [1] : vector<16x16xf32> to vector<16xf32>
    %136 = vector.shape_cast %135 : vector<16xf32> to vector<16x1xf32>
    %137 = vector.broadcast %136 : vector<16x1xf32> to vector<16x16xf32>
    %138 = arith.subf %134, %137 : vector<16x16xf32>
    %139 = math.exp %138 : vector<16x16xf32>
    %cst_51 = arith.constant dense<0.000000e+00> : vector<16xf32>
    %140 = vector.multi_reduction <add>, %139, %cst_51 [1] : vector<16x16xf32> to vector<16xf32>
    %141 = vector.shape_cast %140 : vector<16xf32> to vector<16x1xf32>
    %142 = vector.broadcast %141 : vector<16x1xf32> to vector<16x16xf32>
    %143 = arith.divf %139, %142 : vector<16x16xf32>
    %cst_52 = arith.constant dense<0.000000e+00> : vector<16x8xf32>
    %144 = tpu.matmul %143, %132, %cst_52 {dimension_numbers = #tpu.dot_dimension_numbers<[1], [0], [0], [1], [0, 0, 1, 1], [], []>} : vector<16x16xf32>, vector<16x8xf32>, vector<16x8xf32> -> vector<16x8xf32>
    %145 = tpu.concatenate %93, %110, %127, %144 in 1 : vector<16x8xf32>, vector<16x8xf32>, vector<16x8xf32>, vector<16x8xf32> -> vector<16x32xf32>
    %146 = arith.truncf %145 : vector<16x32xf32> to vector<16x32xbf16>
    %c0_53 = arith.constant 0 : index
    %c0_54 = arith.constant 0 : index
    %c0_55 = arith.constant 0 : index
    %147 = vector.load %arg9[%c0_53, %c0_54, %c0_55] : memref<2x32x32xbf16, #tpu.memory_space<vmem>>, vector<1x32x32xbf16>
    %148 = vector.shape_cast %147 : vector<1x32x32xbf16> to vector<32x32xbf16>
    %cst_56 = arith.constant dense<0.000000e+00> : vector<16x32xf32>
    %149 = tpu.matmul %146, %148, %cst_56 {dimension_numbers = #tpu.dot_dimension_numbers<[1], [0], [0], [1], [0, 0, 1, 1], [], []>} : vector<16x32xbf16>, vector<32x32xbf16>, vector<16x32xf32> -> vector<16x32xf32>
    %c0_57 = arith.constant 0 : index
    %c0_58 = arith.constant 0 : index
    %c0_59 = arith.constant 0 : index
    %150 = vector.load %arg10[%c0_57, %c0_58, %c0_59] : memref<2x1x32xf32, #tpu.memory_space<vmem>>, vector<1x1x32xf32>
    %151 = vector.shape_cast %150 : vector<1x1x32xf32> to vector<1x32xf32>
    %152 = vector.broadcast %151 : vector<1x32xf32> to vector<16x32xf32>
    %153 = arith.addf %149, %152 : vector<16x32xf32>
    %154 = arith.addf %41, %153 : vector<16x32xf32>
    %155 = vector.extract_strided_slice %44 {offsets = [2, 0], sizes = [1, 32], strides = [1, 1]} : vector<4x32xf32> to vector<1x32xf32>
    %156 = vector.extract_strided_slice %44 {offsets = [3, 0], sizes = [1, 32], strides = [1, 1]} : vector<4x32xf32> to vector<1x32xf32>
    %cst_60 = arith.constant dense<0.000000e+00> : vector<16xf32>
    %157 = vector.multi_reduction <add>, %154, %cst_60 [1] : vector<16x32xf32> to vector<16xf32>
    %158 = vector.shape_cast %157 : vector<16xf32> to vector<16x1xf32>
    %cst_61 = arith.constant 3.200000e+01 : f32
    %159 = vector.broadcast %cst_61 : f32 to vector<16x1xf32>
    %160 = arith.divf %158, %159 : vector<16x1xf32>
    %161 = vector.broadcast %160 : vector<16x1xf32> to vector<16x32xf32>
    %162 = arith.subf %154, %161 : vector<16x32xf32>
    %163 = arith.mulf %162, %162 : vector<16x32xf32>
    %cst_62 = arith.constant dense<0.000000e+00> : vector<16xf32>
    %164 = vector.multi_reduction <add>, %163, %cst_62 [1] : vector<16x32xf32> to vector<16xf32>
    %165 = vector.shape_cast %164 : vector<16xf32> to vector<16x1xf32>
    %cst_63 = arith.constant 3.200000e+01 : f32
    %166 = vector.broadcast %cst_63 : f32 to vector<16x1xf32>
    %167 = arith.divf %165, %166 : vector<16x1xf32>
    %168 = vector.broadcast %160 : vector<16x1xf32> to vector<16x32xf32>
    %169 = arith.subf %154, %168 : vector<16x32xf32>
    %cst_64 = arith.constant 9.99999974E-6 : f32
    %170 = vector.broadcast %cst_64 : f32 to vector<16x1xf32>
    %171 = arith.addf %167, %170 : vector<16x1xf32>
    %172 = math.rsqrt %171 : vector<16x1xf32>
    %173 = vector.broadcast %172 : vector<16x1xf32> to vector<16x32xf32>
    %174 = arith.mulf %169, %173 : vector<16x32xf32>
    %175 = vector.broadcast %155 : vector<1x32xf32> to vector<16x32xf32>
    %176 = arith.mulf %174, %175 : vector<16x32xf32>
    %177 = vector.broadcast %156 : vector<1x32xf32> to vector<16x32xf32>
    %178 = arith.addf %176, %177 : vector<16x32xf32>
    %179 = arith.truncf %178 : vector<16x32xf32> to vector<16x32xbf16>
    %c0_65 = arith.constant 0 : index
    %c0_66 = arith.constant 0 : index
    %c0_67 = arith.constant 0 : index
    %180 = vector.load %arg11[%c0_65, %c0_66, %c0_67] : memref<2x32x128xbf16, #tpu.memory_space<vmem>>, vector<1x32x128xbf16>
    %181 = vector.shape_cast %180 : vector<1x32x128xbf16> to vector<32x128xbf16>
    %cst_68 = arith.constant dense<0.000000e+00> : vector<16x128xf32>
    %182 = tpu.matmul %179, %181, %cst_68 {dimension_numbers = #tpu.dot_dimension_numbers<[1], [0], [0], [1], [0, 0, 1, 1], [], []>} : vector<16x32xbf16>, vector<32x128xbf16>, vector<16x128xf32> -> vector<16x128xf32>
    %c0_69 = arith.constant 0 : index
    %c0_70 = arith.constant 0 : index
    %c0_71 = arith.constant 0 : index
    %183 = vector.load %arg12[%c0_69, %c0_70, %c0_71] : memref<2x1x128xf32, #tpu.memory_space<vmem>>, vector<1x1x128xf32>
    %184 = vector.shape_cast %183 : vector<1x1x128xf32> to vector<1x128xf32>
    %185 = vector.broadcast %184 : vector<1x128xf32> to vector<16x128xf32>
    %186 = arith.addf %182, %185 : vector<16x128xf32>
    %cst_72 = arith.constant 1.702000e+00 : f32
    %187 = vector.broadcast %cst_72 : f32 to vector<16x128xf32>
    %188 = arith.mulf %187, %186 : vector<16x128xf32>
    %189 = arith.negf %188 : vector<16x128xf32>
    %190 = math.exp %189 : vector<16x128xf32>
    %cst_73 = arith.constant 1.000000e+00 : f32
    %191 = vector.broadcast %cst_73 : f32 to vector<16x128xf32>
    %192 = arith.addf %191, %190 : vector<16x128xf32>
    %193 = arith.divf %191, %192 : vector<16x128xf32>
    %194 = arith.mulf %186, %193 : vector<16x128xf32>
    %195 = arith.truncf %194 : vector<16x128xf32> to vector<16x128xbf16>
    %c0_74 = arith.constant 0 : index
    %c0_75 = arith.constant 0 : index
    %c0_76 = arith.constant 0 : index
    %196 = vector.load %arg13[%c0_74, %c0_75, %c0_76] : memref<2x128x32xbf16, #tpu.memory_space<vmem>>, vector<1x128x32xbf16>
    %197 = vector.shape_cast %196 : vector<1x128x32xbf16> to vector<128x32xbf16>
    %cst_77 = arith.constant dense<0.000000e+00> : vector<16x32xf32>
    %198 = tpu.matmul %195, %197, %cst_77 {dimension_numbers = #tpu.dot_dimension_numbers<[1], [0], [0], [1], [0, 0, 1, 1], [], []>} : vector<16x128xbf16>, vector<128x32xbf16>, vector<16x32xf32> -> vector<16x32xf32>
    %199 = arith.addf %154, %198 : vector<16x32xf32>
    %c0_78 = arith.constant 0 : index
    %c0_79 = arith.constant 0 : index
    %c0_80 = arith.constant 0 : index
    %200 = vector.load %arg14[%c0_78, %c0_79, %c0_80] : memref<2x1x32xf32, #tpu.memory_space<vmem>>, vector<1x1x32xf32>
    %201 = vector.shape_cast %200 : vector<1x1x32xf32> to vector<1x32xf32>
    %202 = vector.broadcast %201 : vector<1x32xf32> to vector<16x32xf32>
    %203 = arith.addf %199, %202 : vector<16x32xf32>
    %c1_81 = arith.constant 1 : index
    %c0_82 = arith.constant 0 : index
    %c0_83 = arith.constant 0 : index
    %204 = vector.load %arg6[%c1_81, %c0_82, %c0_83] : memref<2x4x32xf32, #tpu.memory_space<vmem>>, vector<1x4x32xf32>
    %205 = vector.shape_cast %204 : vector<1x4x32xf32> to vector<4x32xf32>
    %206 = vector.extract_strided_slice %205 {offsets = [0, 0], sizes = [1, 32], strides = [1, 1]} : vector<4x32xf32> to vector<1x32xf32>
    %207 = vector.extract_strided_slice %205 {offsets = [1, 0], sizes = [1, 32], strides = [1, 1]} : vector<4x32xf32> to vector<1x32xf32>
    %cst_84 = arith.constant dense<0.000000e+00> : vector<16xf32>
    %208 = vector.multi_reduction <add>, %203, %cst_84 [1] : vector<16x32xf32> to vector<16xf32>
    %209 = vector.shape_cast %208 : vector<16xf32> to vector<16x1xf32>
    %cst_85 = arith.constant 3.200000e+01 : f32
    %210 = vector.broadcast %cst_85 : f32 to vector<16x1xf32>
    %211 = arith.divf %209, %210 : vector<16x1xf32>
    %212 = vector.broadcast %211 : vector<16x1xf32> to vector<16x32xf32>
    %213 = arith.subf %203, %212 : vector<16x32xf32>
    %214 = arith.mulf %213, %213 : vector<16x32xf32>
    %cst_86 = arith.constant dense<0.000000e+00> : vector<16xf32>
    %215 = vector.multi_reduction <add>, %214, %cst_86 [1] : vector<16x32xf32> to vector<16xf32>
    %216 = vector.shape_cast %215 : vector<16xf32> to vector<16x1xf32>
    %cst_87 = arith.constant 3.200000e+01 : f32
    %217 = vector.broadcast %cst_87 : f32 to vector<16x1xf32>
    %218 = arith.divf %216, %217 : vector<16x1xf32>
    %219 = vector.broadcast %211 : vector<16x1xf32> to vector<16x32xf32>
    %220 = arith.subf %203, %219 : vector<16x32xf32>
    %cst_88 = arith.constant 9.99999974E-6 : f32
    %221 = vector.broadcast %cst_88 : f32 to vector<16x1xf32>
    %222 = arith.addf %218, %221 : vector<16x1xf32>
    %223 = math.rsqrt %222 : vector<16x1xf32>
    %224 = vector.broadcast %223 : vector<16x1xf32> to vector<16x32xf32>
    %225 = arith.mulf %220, %224 : vector<16x32xf32>
    %226 = vector.broadcast %206 : vector<1x32xf32> to vector<16x32xf32>
    %227 = arith.mulf %225, %226 : vector<16x32xf32>
    %228 = vector.broadcast %207 : vector<1x32xf32> to vector<16x32xf32>
    %229 = arith.addf %227, %228 : vector<16x32xf32>
    %230 = arith.truncf %229 : vector<16x32xf32> to vector<16x32xbf16>
    %c1_89 = arith.constant 1 : index
    %c0_90 = arith.constant 0 : index
    %c0_91 = arith.constant 0 : index
    %231 = vector.load %arg7[%c1_89, %c0_90, %c0_91] : memref<2x32x96xbf16, #tpu.memory_space<vmem>>, vector<1x32x96xbf16>
    %232 = vector.shape_cast %231 : vector<1x32x96xbf16> to vector<32x96xbf16>
    %cst_92 = arith.constant dense<0.000000e+00> : vector<16x96xf32>
    %233 = tpu.matmul %230, %232, %cst_92 {dimension_numbers = #tpu.dot_dimension_numbers<[1], [0], [0], [1], [0, 0, 1, 1], [], []>} : vector<16x32xbf16>, vector<32x96xbf16>, vector<16x96xf32> -> vector<16x96xf32>
    %c1_93 = arith.constant 1 : index
    %c0_94 = arith.constant 0 : index
    %c0_95 = arith.constant 0 : index
    %234 = vector.load %arg8[%c1_93, %c0_94, %c0_95] : memref<2x1x96xf32, #tpu.memory_space<vmem>>, vector<1x1x96xf32>
    %235 = vector.shape_cast %234 : vector<1x1x96xf32> to vector<1x96xf32>
    %236 = vector.broadcast %235 : vector<1x96xf32> to vector<16x96xf32>
    %237 = arith.addf %233, %236 : vector<16x96xf32>
    %238 = vector.extract_strided_slice %237 {offsets = [0, 0], sizes = [16, 8], strides = [1, 1]} : vector<16x96xf32> to vector<16x8xf32>
    %cst_96 = arith.constant 0.353553385 : f32
    %239 = vector.broadcast %cst_96 : f32 to vector<16x8xf32>
    %240 = arith.mulf %238, %239 : vector<16x8xf32>
    %241 = vector.extract_strided_slice %237 {offsets = [0, 32], sizes = [16, 8], strides = [1, 1]} : vector<16x96xf32> to vector<16x8xf32>
    %242 = vector.extract_strided_slice %237 {offsets = [0, 64], sizes = [16, 8], strides = [1, 1]} : vector<16x96xf32> to vector<16x8xf32>
    %cst_97 = arith.constant dense<0.000000e+00> : vector<16x16xf32>
    %243 = tpu.matmul %240, %241, %cst_97 {dimension_numbers = #tpu.dot_dimension_numbers<[1], [1], [0], [0], [0, 0, 1, 0], [], []>} : vector<16x8xf32>, vector<16x8xf32>, vector<16x16xf32> -> vector<16x16xf32>
    %244 = arith.addf %243, %42 : vector<16x16xf32>
    %cst_98 = arith.constant dense<0xFF800000> : vector<16xf32>
    %245 = vector.multi_reduction <maximumf>, %244, %cst_98 [1] : vector<16x16xf32> to vector<16xf32>
    %246 = vector.shape_cast %245 : vector<16xf32> to vector<16x1xf32>
    %247 = vector.broadcast %246 : vector<16x1xf32> to vector<16x16xf32>
    %248 = arith.subf %244, %247 : vector<16x16xf32>
    %249 = math.exp %248 : vector<16x16xf32>
    %cst_99 = arith.constant dense<0.000000e+00> : vector<16xf32>
    %250 = vector.multi_reduction <add>, %249, %cst_99 [1] : vector<16x16xf32> to vector<16xf32>
    %251 = vector.shape_cast %250 : vector<16xf32> to vector<16x1xf32>
    %252 = vector.broadcast %251 : vector<16x1xf32> to vector<16x16xf32>
    %253 = arith.divf %249, %252 : vector<16x16xf32>
    %cst_100 = arith.constant dense<0.000000e+00> : vector<16x8xf32>
    %254 = tpu.matmul %253, %242, %cst_100 {dimension_numbers = #tpu.dot_dimension_numbers<[1], [0], [0], [1], [0, 0, 1, 1], [], []>} : vector<16x16xf32>, vector<16x8xf32>, vector<16x8xf32> -> vector<16x8xf32>
    %255 = vector.extract_strided_slice %237 {offsets = [0, 8], sizes = [16, 8], strides = [1, 1]} : vector<16x96xf32> to vector<16x8xf32>
    %cst_101 = arith.constant 0.353553385 : f32
    %256 = vector.broadcast %cst_101 : f32 to vector<16x8xf32>
    %257 = arith.mulf %255, %256 : vector<16x8xf32>
    %258 = vector.extract_strided_slice %237 {offsets = [0, 40], sizes = [16, 8], strides = [1, 1]} : vector<16x96xf32> to vector<16x8xf32>
    %259 = vector.extract_strided_slice %237 {offsets = [0, 72], sizes = [16, 8], strides = [1, 1]} : vector<16x96xf32> to vector<16x8xf32>
    %cst_102 = arith.constant dense<0.000000e+00> : vector<16x16xf32>
    %260 = tpu.matmul %257, %258, %cst_102 {dimension_numbers = #tpu.dot_dimension_numbers<[1], [1], [0], [0], [0, 0, 1, 0], [], []>} : vector<16x8xf32>, vector<16x8xf32>, vector<16x16xf32> -> vector<16x16xf32>
    %261 = arith.addf %260, %42 : vector<16x16xf32>
    %cst_103 = arith.constant dense<0xFF800000> : vector<16xf32>
    %262 = vector.multi_reduction <maximumf>, %261, %cst_103 [1] : vector<16x16xf32> to vector<16xf32>
    %263 = vector.shape_cast %262 : vector<16xf32> to vector<16x1xf32>
    %264 = vector.broadcast %263 : vector<16x1xf32> to vector<16x16xf32>
    %265 = arith.subf %261, %264 : vector<16x16xf32>
    %266 = math.exp %265 : vector<16x16xf32>
    %cst_104 = arith.constant dense<0.000000e+00> : vector<16xf32>
    %267 = vector.multi_reduction <add>, %266, %cst_104 [1] : vector<16x16xf32> to vector<16xf32>
    %268 = vector.shape_cast %267 : vector<16xf32> to vector<16x1xf32>
    %269 = vector.broadcast %268 : vector<16x1xf32> to vector<16x16xf32>
    %270 = arith.divf %266, %269 : vector<16x16xf32>
    %cst_105 = arith.constant dense<0.000000e+00> : vector<16x8xf32>
    %271 = tpu.matmul %270, %259, %cst_105 {dimension_numbers = #tpu.dot_dimension_numbers<[1], [0], [0], [1], [0, 0, 1, 1], [], []>} : vector<16x16xf32>, vector<16x8xf32>, vector<16x8xf32> -> vector<16x8xf32>
    %272 = vector.extract_strided_slice %237 {offsets = [0, 16], sizes = [16, 8], strides = [1, 1]} : vector<16x96xf32> to vector<16x8xf32>
    %cst_106 = arith.constant 0.353553385 : f32
    %273 = vector.broadcast %cst_106 : f32 to vector<16x8xf32>
    %274 = arith.mulf %272, %273 : vector<16x8xf32>
    %275 = vector.extract_strided_slice %237 {offsets = [0, 48], sizes = [16, 8], strides = [1, 1]} : vector<16x96xf32> to vector<16x8xf32>
    %276 = vector.extract_strided_slice %237 {offsets = [0, 80], sizes = [16, 8], strides = [1, 1]} : vector<16x96xf32> to vector<16x8xf32>
    %cst_107 = arith.constant dense<0.000000e+00> : vector<16x16xf32>
    %277 = tpu.matmul %274, %275, %cst_107 {dimension_numbers = #tpu.dot_dimension_numbers<[1], [1], [0], [0], [0, 0, 1, 0], [], []>} : vector<16x8xf32>, vector<16x8xf32>, vector<16x16xf32> -> vector<16x16xf32>
    %278 = arith.addf %277, %42 : vector<16x16xf32>
    %cst_108 = arith.constant dense<0xFF800000> : vector<16xf32>
    %279 = vector.multi_reduction <maximumf>, %278, %cst_108 [1] : vector<16x16xf32> to vector<16xf32>
    %280 = vector.shape_cast %279 : vector<16xf32> to vector<16x1xf32>
    %281 = vector.broadcast %280 : vector<16x1xf32> to vector<16x16xf32>
    %282 = arith.subf %278, %281 : vector<16x16xf32>
    %283 = math.exp %282 : vector<16x16xf32>
    %cst_109 = arith.constant dense<0.000000e+00> : vector<16xf32>
    %284 = vector.multi_reduction <add>, %283, %cst_109 [1] : vector<16x16xf32> to vector<16xf32>
    %285 = vector.shape_cast %284 : vector<16xf32> to vector<16x1xf32>
    %286 = vector.broadcast %285 : vector<16x1xf32> to vector<16x16xf32>
    %287 = arith.divf %283, %286 : vector<16x16xf32>
    %cst_110 = arith.constant dense<0.000000e+00> : vector<16x8xf32>
    %288 = tpu.matmul %287, %276, %cst_110 {dimension_numbers = #tpu.dot_dimension_numbers<[1], [0], [0], [1], [0, 0, 1, 1], [], []>} : vector<16x16xf32>, vector<16x8xf32>, vector<16x8xf32> -> vector<16x8xf32>
    %289 = vector.extract_strided_slice %237 {offsets = [0, 24], sizes = [16, 8], strides = [1, 1]} : vector<16x96xf32> to vector<16x8xf32>
    %cst_111 = arith.constant 0.353553385 : f32
    %290 = vector.broadcast %cst_111 : f32 to vector<16x8xf32>
    %291 = arith.mulf %289, %290 : vector<16x8xf32>
    %292 = vector.extract_strided_slice %237 {offsets = [0, 56], sizes = [16, 8], strides = [1, 1]} : vector<16x96xf32> to vector<16x8xf32>
    %293 = vector.extract_strided_slice %237 {offsets = [0, 88], sizes = [16, 8], strides = [1, 1]} : vector<16x96xf32> to vector<16x8xf32>
    %cst_112 = arith.constant dense<0.000000e+00> : vector<16x16xf32>
    %294 = tpu.matmul %291, %292, %cst_112 {dimension_numbers = #tpu.dot_dimension_numbers<[1], [1], [0], [0], [0, 0, 1, 0], [], []>} : vector<16x8xf32>, vector<16x8xf32>, vector<16x16xf32> -> vector<16x16xf32>
    %295 = arith.addf %294, %42 : vector<16x16xf32>
    %cst_113 = arith.constant dense<0xFF800000> : vector<16xf32>
    %296 = vector.multi_reduction <maximumf>, %295, %cst_113 [1] : vector<16x16xf32> to vector<16xf32>
    %297 = vector.shape_cast %296 : vector<16xf32> to vector<16x1xf32>
    %298 = vector.broadcast %297 : vector<16x1xf32> to vector<16x16xf32>
    %299 = arith.subf %295, %298 : vector<16x16xf32>
    %300 = math.exp %299 : vector<16x16xf32>
    %cst_114 = arith.constant dense<0.000000e+00> : vector<16xf32>
    %301 = vector.multi_reduction <add>, %300, %cst_114 [1] : vector<16x16xf32> to vector<16xf32>
    %302 = vector.shape_cast %301 : vector<16xf32> to vector<16x1xf32>
    %303 = vector.broadcast %302 : vector<16x1xf32> to vector<16x16xf32>
    %304 = arith.divf %300, %303 : vector<16x16xf32>
    %cst_115 = arith.constant dense<0.000000e+00> : vector<16x8xf32>
    %305 = tpu.matmul %304, %293, %cst_115 {dimension_numbers = #tpu.dot_dimension_numbers<[1], [0], [0], [1], [0, 0, 1, 1], [], []>} : vector<16x16xf32>, vector<16x8xf32>, vector<16x8xf32> -> vector<16x8xf32>
    %306 = tpu.concatenate %254, %271, %288, %305 in 1 : vector<16x8xf32>, vector<16x8xf32>, vector<16x8xf32>, vector<16x8xf32> -> vector<16x32xf32>
    %307 = arith.truncf %306 : vector<16x32xf32> to vector<16x32xbf16>
    %c1_116 = arith.constant 1 : index
    %c0_117 = arith.constant 0 : index
    %c0_118 = arith.constant 0 : index
    %308 = vector.load %arg9[%c1_116, %c0_117, %c0_118] : memref<2x32x32xbf16, #tpu.memory_space<vmem>>, vector<1x32x32xbf16>
    %309 = vector.shape_cast %308 : vector<1x32x32xbf16> to vector<32x32xbf16>
    %cst_119 = arith.constant dense<0.000000e+00> : vector<16x32xf32>
    %310 = tpu.matmul %307, %309, %cst_119 {dimension_numbers = #tpu.dot_dimension_numbers<[1], [0], [0], [1], [0, 0, 1, 1], [], []>} : vector<16x32xbf16>, vector<32x32xbf16>, vector<16x32xf32> -> vector<16x32xf32>
    %c1_120 = arith.constant 1 : index
    %c0_121 = arith.constant 0 : index
    %c0_122 = arith.constant 0 : index
    %311 = vector.load %arg10[%c1_120, %c0_121, %c0_122] : memref<2x1x32xf32, #tpu.memory_space<vmem>>, vector<1x1x32xf32>
    %312 = vector.shape_cast %311 : vector<1x1x32xf32> to vector<1x32xf32>
    %313 = vector.broadcast %312 : vector<1x32xf32> to vector<16x32xf32>
    %314 = arith.addf %310, %313 : vector<16x32xf32>
    %315 = arith.addf %203, %314 : vector<16x32xf32>
    %316 = vector.extract_strided_slice %205 {offsets = [2, 0], sizes = [1, 32], strides = [1, 1]} : vector<4x32xf32> to vector<1x32xf32>
    %317 = vector.extract_strided_slice %205 {offsets = [3, 0], sizes = [1, 32], strides = [1, 1]} : vector<4x32xf32> to vector<1x32xf32>
    %cst_123 = arith.constant dense<0.000000e+00> : vector<16xf32>
    %318 = vector.multi_reduction <add>, %315, %cst_123 [1] : vector<16x32xf32> to vector<16xf32>
    %319 = vector.shape_cast %318 : vector<16xf32> to vector<16x1xf32>
    %cst_124 = arith.constant 3.200000e+01 : f32
    %320 = vector.broadcast %cst_124 : f32 to vector<16x1xf32>
    %321 = arith.divf %319, %320 : vector<16x1xf32>
    %322 = vector.broadcast %321 : vector<16x1xf32> to vector<16x32xf32>
    %323 = arith.subf %315, %322 : vector<16x32xf32>
    %324 = arith.mulf %323, %323 : vector<16x32xf32>
    %cst_125 = arith.constant dense<0.000000e+00> : vector<16xf32>
    %325 = vector.multi_reduction <add>, %324, %cst_125 [1] : vector<16x32xf32> to vector<16xf32>
    %326 = vector.shape_cast %325 : vector<16xf32> to vector<16x1xf32>
    %cst_126 = arith.constant 3.200000e+01 : f32
    %327 = vector.broadcast %cst_126 : f32 to vector<16x1xf32>
    %328 = arith.divf %326, %327 : vector<16x1xf32>
    %329 = vector.broadcast %321 : vector<16x1xf32> to vector<16x32xf32>
    %330 = arith.subf %315, %329 : vector<16x32xf32>
    %cst_127 = arith.constant 9.99999974E-6 : f32
    %331 = vector.broadcast %cst_127 : f32 to vector<16x1xf32>
    %332 = arith.addf %328, %331 : vector<16x1xf32>
    %333 = math.rsqrt %332 : vector<16x1xf32>
    %334 = vector.broadcast %333 : vector<16x1xf32> to vector<16x32xf32>
    %335 = arith.mulf %330, %334 : vector<16x32xf32>
    %336 = vector.broadcast %316 : vector<1x32xf32> to vector<16x32xf32>
    %337 = arith.mulf %335, %336 : vector<16x32xf32>
    %338 = vector.broadcast %317 : vector<1x32xf32> to vector<16x32xf32>
    %339 = arith.addf %337, %338 : vector<16x32xf32>
    %340 = arith.truncf %339 : vector<16x32xf32> to vector<16x32xbf16>
    %c1_128 = arith.constant 1 : index
    %c0_129 = arith.constant 0 : index
    %c0_130 = arith.constant 0 : index
    %341 = vector.load %arg11[%c1_128, %c0_129, %c0_130] : memref<2x32x128xbf16, #tpu.memory_space<vmem>>, vector<1x32x128xbf16>
    %342 = vector.shape_cast %341 : vector<1x32x128xbf16> to vector<32x128xbf16>
    %cst_131 = arith.constant dense<0.000000e+00> : vector<16x128xf32>
    %343 = tpu.matmul %340, %342, %cst_131 {dimension_numbers = #tpu.dot_dimension_numbers<[1], [0], [0], [1], [0, 0, 1, 1], [], []>} : vector<16x32xbf16>, vector<32x128xbf16>, vector<16x128xf32> -> vector<16x128xf32>
    %c1_132 = arith.constant 1 : index
    %c0_133 = arith.constant 0 : index
    %c0_134 = arith.constant 0 : index
    %344 = vector.load %arg12[%c1_132, %c0_133, %c0_134] : memref<2x1x128xf32, #tpu.memory_space<vmem>>, vector<1x1x128xf32>
    %345 = vector.shape_cast %344 : vector<1x1x128xf32> to vector<1x128xf32>
    %346 = vector.broadcast %345 : vector<1x128xf32> to vector<16x128xf32>
    %347 = arith.addf %343, %346 : vector<16x128xf32>
    %cst_135 = arith.constant 1.702000e+00 : f32
    %348 = vector.broadcast %cst_135 : f32 to vector<16x128xf32>
    %349 = arith.mulf %348, %347 : vector<16x128xf32>
    %350 = arith.negf %349 : vector<16x128xf32>
    %351 = math.exp %350 : vector<16x128xf32>
    %cst_136 = arith.constant 1.000000e+00 : f32
    %352 = vector.broadcast %cst_136 : f32 to vector<16x128xf32>
    %353 = arith.addf %352, %351 : vector<16x128xf32>
    %354 = arith.divf %352, %353 : vector<16x128xf32>
    %355 = arith.mulf %347, %354 : vector<16x128xf32>
    %356 = arith.truncf %355 : vector<16x128xf32> to vector<16x128xbf16>
    %c1_137 = arith.constant 1 : index
    %c0_138 = arith.constant 0 : index
    %c0_139 = arith.constant 0 : index
    %357 = vector.load %arg13[%c1_137, %c0_138, %c0_139] : memref<2x128x32xbf16, #tpu.memory_space<vmem>>, vector<1x128x32xbf16>
    %358 = vector.shape_cast %357 : vector<1x128x32xbf16> to vector<128x32xbf16>
    %cst_140 = arith.constant dense<0.000000e+00> : vector<16x32xf32>
    %359 = tpu.matmul %356, %358, %cst_140 {dimension_numbers = #tpu.dot_dimension_numbers<[1], [0], [0], [1], [0, 0, 1, 1], [], []>} : vector<16x128xbf16>, vector<128x32xbf16>, vector<16x32xf32> -> vector<16x32xf32>
    %360 = arith.addf %315, %359 : vector<16x32xf32>
    %c1_141 = arith.constant 1 : index
    %c0_142 = arith.constant 0 : index
    %c0_143 = arith.constant 0 : index
    %361 = vector.load %arg14[%c1_141, %c0_142, %c0_143] : memref<2x1x32xf32, #tpu.memory_space<vmem>>, vector<1x1x32xf32>
    %362 = vector.shape_cast %361 : vector<1x1x32xf32> to vector<1x32xf32>
    %363 = vector.broadcast %362 : vector<1x32xf32> to vector<16x32xf32>
    %364 = arith.addf %360, %363 : vector<16x32xf32>
    %365 = vector.extract_strided_slice %364 {offsets = [0, 0], sizes = [1, 32], strides = [1, 1]} : vector<16x32xf32> to vector<1x32xf32>
    %366 = vector.extract_strided_slice %364 {offsets = [8, 0], sizes = [1, 32], strides = [1, 1]} : vector<16x32xf32> to vector<1x32xf32>
    %367 = tpu.concatenate %365, %366 in 0 : vector<1x32xf32>, vector<1x32xf32> -> vector<2x32xf32>
    %c0_144 = arith.constant 0 : index
    %c0_145 = arith.constant 0 : index
    %368 = vector.load %arg15[%c0_144, %c0_145] : memref<2x32xf32, #tpu.memory_space<vmem>>, vector<1x32xf32>
    %c1_146 = arith.constant 1 : index
    %c0_147 = arith.constant 0 : index
    %369 = vector.load %arg15[%c1_146, %c0_147] : memref<2x32xf32, #tpu.memory_space<vmem>>, vector<1x32xf32>
    %cst_148 = arith.constant dense<0.000000e+00> : vector<2xf32>
    %370 = vector.multi_reduction <add>, %367, %cst_148 [1] : vector<2x32xf32> to vector<2xf32>
    %371 = vector.shape_cast %370 : vector<2xf32> to vector<2x1xf32>
    %cst_149 = arith.constant 3.200000e+01 : f32
    %372 = vector.broadcast %cst_149 : f32 to vector<2x1xf32>
    %373 = arith.divf %371, %372 : vector<2x1xf32>
    %374 = vector.broadcast %373 : vector<2x1xf32> to vector<2x32xf32>
    %375 = arith.subf %367, %374 : vector<2x32xf32>
    %376 = arith.mulf %375, %375 : vector<2x32xf32>
    %cst_150 = arith.constant dense<0.000000e+00> : vector<2xf32>
    %377 = vector.multi_reduction <add>, %376, %cst_150 [1] : vector<2x32xf32> to vector<2xf32>
    %378 = vector.shape_cast %377 : vector<2xf32> to vector<2x1xf32>
    %cst_151 = arith.constant 3.200000e+01 : f32
    %379 = vector.broadcast %cst_151 : f32 to vector<2x1xf32>
    %380 = arith.divf %378, %379 : vector<2x1xf32>
    %381 = vector.broadcast %373 : vector<2x1xf32> to vector<2x32xf32>
    %382 = arith.subf %367, %381 : vector<2x32xf32>
    %cst_152 = arith.constant 9.99999974E-6 : f32
    %383 = vector.broadcast %cst_152 : f32 to vector<2x1xf32>
    %384 = arith.addf %380, %383 : vector<2x1xf32>
    %385 = math.rsqrt %384 : vector<2x1xf32>
    %386 = vector.broadcast %385 : vector<2x1xf32> to vector<2x32xf32>
    %387 = arith.mulf %382, %386 : vector<2x32xf32>
    %388 = vector.broadcast %368 : vector<1x32xf32> to vector<2x32xf32>
    %389 = arith.mulf %387, %388 : vector<2x32xf32>
    %390 = vector.broadcast %369 : vector<1x32xf32> to vector<2x32xf32>
    %391 = arith.addf %389, %390 : vector<2x32xf32>
    %392 = arith.truncf %391 : vector<2x32xf32> to vector<2x32xbf16>
    %c0_153 = arith.constant 0 : index
    %c0_154 = arith.constant 0 : index
    %393 = vector.load %arg16[%c0_153, %c0_154] : memref<32x128xbf16, #tpu.memory_space<vmem>>, vector<32x128xbf16>
    %cst_155 = arith.constant dense<0.000000e+00> : vector<2x128xf32>
    %394 = tpu.matmul %392, %393, %cst_155 {dimension_numbers = #tpu.dot_dimension_numbers<[1], [0], [0], [1], [0, 0, 1, 1], [], []>} : vector<2x32xbf16>, vector<32x128xbf16>, vector<2x128xf32> -> vector<2x128xf32>
    %c0_156 = arith.constant 0 : index
    %c0_157 = arith.constant 0 : index
    %c0_158 = arith.constant 0 : index
    %395 = vector.load %arg17[%c0_156, %c0_157, %c0_158] : memref<1x2x128xf32, #tpu.memory_space<vmem>>, vector<1x2x128xf32>
    %396 = vector.shape_cast %395 : vector<1x2x128xf32> to vector<2x128xf32>
    %397 = vector.shape_cast %394 : vector<2x128xf32> to vector<1x2x128xf32>
    tpu.vector_store %arg17[%c0_156, %c0_157, %c0_158], %397 {strides = array<i32>} : memref<1x2x128xf32, #tpu.memory_space<vmem>>, vector<1x2x128xf32>,
    return
  }
  func.func @transform_0(%arg0: i32) -> (i32, i32, i32) {
    %c0_i32 = arith.constant 0 : i32
    %c0_i32_0 = arith.constant 0 : i32
    %c0_i32_1 = arith.constant 0 : i32
    return %arg0, %c0_i32, %c0_i32_0 : i32, i32, i32
  }
  func.func @transform_1(%arg0: i32) -> (i32, i32) {
    %c0_i32 = arith.constant 0 : i32
    %c0_i32_0 = arith.constant 0 : i32
    %c0_i32_1 = arith.constant 0 : i32
    return %c0_i32, %c0_i32_0 : i32, i32
  }
  func.func @transform_2(%arg0: i32) -> (i32, i32) {
    %c0_i32 = arith.constant 0 : i32
    %c0_i32_0 = arith.constant 0 : i32
    %c0_i32_1 = arith.constant 0 : i32
    return %c0_i32, %c0_i32_0 : i32, i32
  }
  func.func @transform_3(%arg0: i32) -> (i32, i32) {
    %c0_i32 = arith.constant 0 : i32
    %c0_i32_0 = arith.constant 0 : i32
    %c0_i32_1 = arith.constant 0 : i32
    return %c0_i32, %c0_i32_0 : i32, i32
  }
  func.func @transform_4(%arg0: i32) -> (i32, i32) {
    %c0_i32 = arith.constant 0 : i32
    %c0_i32_0 = arith.constant 0 : i32
    %c0_i32_1 = arith.constant 0 : i32
    return %c0_i32, %c0_i32_0 : i32, i32
  }
  func.func @transform_5(%arg0: i32) -> (i32, i32, i32) {
    %c0_i32 = arith.constant 0 : i32
    %c0_i32_0 = arith.constant 0 : i32
    %c0_i32_1 = arith.constant 0 : i32
    %c0_i32_2 = arith.constant 0 : i32
    return %c0_i32, %c0_i32_0, %c0_i32_1 : i32, i32, i32
  }
  func.func @transform_6(%arg0: i32) -> (i32, i32, i32) {
    %c0_i32 = arith.constant 0 : i32
    %c0_i32_0 = arith.constant 0 : i32
    %c0_i32_1 = arith.constant 0 : i32
    %c0_i32_2 = arith.constant 0 : i32
    return %c0_i32, %c0_i32_0, %c0_i32_1 : i32, i32, i32
  }
  func.func @transform_7(%arg0: i32) -> (i32, i32, i32) {
    %c0_i32 = arith.constant 0 : i32
    %c0_i32_0 = arith.constant 0 : i32
    %c0_i32_1 = arith.constant 0 : i32
    %c0_i32_2 = arith.constant 0 : i32
    return %c0_i32, %c0_i32_0, %c0_i32_1 : i32, i32, i32
  }
  func.func @transform_8(%arg0: i32) -> (i32, i32, i32) {
    %c0_i32 = arith.constant 0 : i32
    %c0_i32_0 = arith.constant 0 : i32
    %c0_i32_1 = arith.constant 0 : i32
    %c0_i32_2 = arith.constant 0 : i32
    return %c0_i32, %c0_i32_0, %c0_i32_1 : i32, i32, i32
  }
  func.func @transform_9(%arg0: i32) -> (i32, i32, i32) {
    %c0_i32 = arith.constant 0 : i32
    %c0_i32_0 = arith.constant 0 : i32
    %c0_i32_1 = arith.constant 0 : i32
    %c0_i32_2 = arith.constant 0 : i32
    return %c0_i32, %c0_i32_0, %c0_i32_1 : i32, i32, i32
  }
  func.func @transform_10(%arg0: i32) -> (i32, i32, i32) {
    %c0_i32 = arith.constant 0 : i32
    %c0_i32_0 = arith.constant 0 : i32
    %c0_i32_1 = arith.constant 0 : i32
    %c0_i32_2 = arith.constant 0 : i32
    return %c0_i32, %c0_i32_0, %c0_i32_1 : i32, i32, i32
  }
  func.func @transform_11(%arg0: i32) -> (i32, i32, i32) {
    %c0_i32 = arith.constant 0 : i32
    %c0_i32_0 = arith.constant 0 : i32
    %c0_i32_1 = arith.constant 0 : i32
    %c0_i32_2 = arith.constant 0 : i32
    return %c0_i32, %c0_i32_0, %c0_i32_1 : i32, i32, i32
  }
  func.func @transform_12(%arg0: i32) -> (i32, i32, i32) {
    %c0_i32 = arith.constant 0 : i32
    %c0_i32_0 = arith.constant 0 : i32
    %c0_i32_1 = arith.constant 0 : i32
    %c0_i32_2 = arith.constant 0 : i32
    return %c0_i32, %c0_i32_0, %c0_i32_1 : i32, i32, i32
  }
  func.func @transform_13(%arg0: i32) -> (i32, i32, i32) {
    %c0_i32 = arith.constant 0 : i32
    %c0_i32_0 = arith.constant 0 : i32
    %c0_i32_1 = arith.constant 0 : i32
    %c0_i32_2 = arith.constant 0 : i32
    return %c0_i32, %c0_i32_0, %c0_i32_1 : i32, i32, i32
  }
  func.func @transform_14(%arg0: i32) -> (i32, i32) {
    %c0_i32 = arith.constant 0 : i32
    %c0_i32_0 = arith.constant 0 : i32
    %c0_i32_1 = arith.constant 0 : i32
    return %c0_i32, %c0_i32_0 : i32, i32
  }
  func.func @transform_15(%arg0: i32) -> (i32, i32) {
    %c0_i32 = arith.constant 0 : i32
    %c0_i32_0 = arith.constant 0 : i32
    %c0_i32_1 = arith.constant 0 : i32
    return %c0_i32, %c0_i32_0 : i32, i32
  }
  func.func @transform_16(%arg0: i32) -> (i32, i32, i32) {
    %c0_i32 = arith.constant 0 : i32
    %c0_i32_0 = arith.constant 0 : i32
    %c0_i32_1 = arith.constant 0 : i32
    return %arg0, %c0_i32, %c0_i32_0 : i32, i32, i32
  }
}

</mosaic_0001>

<llo_original>
// kernel: clip_vision_forward.1
$region0: #{clip_vision_forward.1}
  #allocation0 [shape = 'u32[]', space=smem, size = 0x4, offset = 0x4, fixed_abs, tag = 'smem constant byte address 0x4 - core index']
  #allocation1 [shape = 'u32[144,128]{1,0:T(1,128)}', space=vmem, size = 0x12000, scoped, tag = 'internal scratch']
  %s0 = inlined_call_operand.vmem [shape: f32[2,2,1280], index: 0, kind: input, shape index: {}]
  %s1 = inlined_call_operand.vmem [shape: bf16[1280,128], index: 1, kind: input, shape index: {}]
  %s2 = inlined_call_operand.vmem [shape: f32[16,32], index: 2, kind: input, shape index: {}]
  %s3 = inlined_call_operand.vmem [shape: f32[16,16], index: 3, kind: input, shape index: {}]
  %s4 = inlined_call_operand.vmem [shape: f32[2,32], index: 4, kind: input, shape index: {}]
  %s5 = inlined_call_operand.vmem [shape: f32[2,4,32], index: 5, kind: input, shape index: {}]
  %s6 = inlined_call_operand.vmem [shape: bf16[2,32,96], index: 6, kind: input, shape index: {}]
  %s7 = inlined_call_operand.vmem [shape: f32[2,1,96], index: 7, kind: input, shape index: {}]
  %s8 = inlined_call_operand.vmem [shape: bf16[2,32,32], index: 8, kind: input, shape index: {}]
  %s9 = inlined_call_operand.vmem [shape: f32[2,1,32], index: 9, kind: input, shape index: {}]
  %s10 = inlined_call_operand.vmem [shape: bf16[2,32,128], index: 10, kind: input, shape index: {}]
  %s11 = inlined_call_operand.vmem [shape: f32[2,1,128], index: 11, kind: input, shape index: {}]
  %s12 = inlined_call_operand.vmem [shape: bf16[2,128,32], index: 12, kind: input, shape index: {}]
  %s13 = inlined_call_operand.vmem [shape: f32[2,1,32], index: 13, kind: input, shape index: {}]
  %s14 = inlined_call_operand.vmem [shape: f32[2,32], index: 14, kind: input, shape index: {}]
  %s15 = inlined_call_operand.vmem [shape: bf16[32,128], index: 15, kind: input, shape index: {}]
  %s16 = inlined_call_operand.hbm [shape: f32[2,2,128], index: 16, kind: output, shape index: {}]
  %s17 = sld [smem:[#allocation0]]
  $region97: #{clip_vision_forward.1} parent=0
    _
  %s19 = ssub.s32 1, %s17
  %s20 = scalar_select 0, %s19, %s17
  $region1: #{clip_vision_forward.1} parent=0
    #allocation2 [shape = 'u8[2048]{0}', space=vmem, size = 0x800, scoped, tag = 'output window, operand 0']
    #allocation3 [shape = 's32[2]{0}', space=sflag, size = 0x8, scoped, tag = 'scoped memory for clip_vision_forward.1']
    %21 = vsyncpa [#allocation3], 0
    %s22 = scalar_lea.sflag [#allocation3], 1
    %23 = vsyncpa %s22, 0
    loop: start=0, step=1, limit=4
    $region2: #{clip_vision_forward.1} parent=1 // loop_pre_header
      _
    $region3: #{clip_vision_forward.1} parent=1 // loop_header
      %s25 = sphi 0, %s29
      %p26 = scmp.ge.s32.totalorder %s25, 4
      %s35 = sphi 0, %s37
      %s38 = sphi 0, %s35
      %s39 = sphi 0, %s38
      %s55 = sphi 0, %s39
      %s59 = sphi 0, %s59
      %s61 = sphi 0, %s59
      %s62 = sphi 0, %s61
      %s76 = sphi 0, %s62
      %s80 = sphi 0, %s80
      %s82 = sphi 0, %s80
      %s83 = sphi 0, %s82
      %s97 = sphi 0, %s83
      %s101 = sphi 0, %s101
      %s103 = sphi 0, %s101
      %s104 = sphi 0, %s103
      %s118 = sphi 0, %s104
      %s122 = sphi 0, %s122
      %s124 = sphi 0, %s122
      %s125 = sphi 0, %s124
      %s139 = sphi 0, %s125
      %s143 = sphi 0, %s143
      %s145 = sphi 0, %s143
      %s146 = sphi 0, %s145
      %s160 = sphi 0, %s146
      %s164 = sphi 0, %s164
      %s166 = sphi 0, %s164
      %s167 = sphi 0, %s166
      %s181 = sphi 0, %s167
      %s185 = sphi 0, %s185
      %s187 = sphi 0, %s185
      %s188 = sphi 0, %s187
      %s202 = sphi 0, %s188
      %s206 = sphi 0, %s206
      %s208 = sphi 0, %s206
      %s209 = sphi 0, %s208
      %s223 = sphi 0, %s209
      %s227 = sphi 0, %s227
      %s229 = sphi 0, %s227
      %s230 = sphi 0, %s229
      %s244 = sphi 0, %s230
      %s248 = sphi 0, %s248
      %s250 = sphi 0, %s248
      %s251 = sphi 0, %s250
      %s265 = sphi 0, %s251
      %s269 = sphi 0, %s269
      %s271 = sphi 0, %s269
      %s272 = sphi 0, %s271
      %s286 = sphi 0, %s272
      %s290 = sphi 0, %s290
      %s292 = sphi 0, %s290
      %s293 = sphi 0, %s292
      %s307 = sphi 0, %s293
      %s311 = sphi 0, %s311
      %s313 = sphi 0, %s311
      %s314 = sphi 0, %s313
      %s328 = sphi 0, %s314
      %s332 = sphi 0, %s332
      %s334 = sphi 0, %s332
      %s335 = sphi 0, %s334
      %s349 = sphi 0, %s335
      %s353 = sphi 0, %s353
      %s355 = sphi 0, %s353
      %s356 = sphi 0, %s355
      %s370 = sphi 0, %s356
      %s376 = sphi 0, %s378
      %s379 = sphi 0, %s376
      %s380 = sphi 0, %s379
      %s396 = sphi 0, %s380
    $region4: #{clip_vision_forward.1} parent=1 // loop_header_branch
      %28 = sbr.rel (%p26) target = $region8
    $region5: #{clip_vision_forward.1} parent=1 // loop_body
      %s30 = ssub.s32 %s25, 1
      %s31 = ssub.s32 %s25, 2
      %s32 = sadd.s32 %s25, 1
      %s33 = ssub.s32 %s25, %s32
      %p34 = scmp.eq.s32.totalorder %s33, 0
      %s36 = sadd.s32 %s35, 1
      %s37 = scalar_select %p34, %s35, %s36
      %p40 = pneg %p34
      %p41 = scmp.eq.s32.totalorder %s25, 1
      %p42 = por %p40, %p41
      %p43 = scmp.ne.s32.totalorder %s35, %s38
      %p44 = scmp.eq.s32.totalorder %s25, 0
      %p45 = por %p43, %p44
      %p46 = scmp.ne.s32.totalorder %s35, %s38
      %p47 = scmp.eq.s32.totalorder %s30, 1
      %p48 = por %p46, %p47
      %p49 = scmp.ne.s32.totalorder %s38, %s39
      %p50 = scmp.eq.s32.totalorder %s30, 0
      %p51 = por %p49, %p50
      %p52 = scmp.ne.s32.totalorder %s38, %s39
      %p53 = scmp.eq.s32.totalorder %s31, 1
      %p54 = por %p52, %p53
      %p56 = scmp.ne.s32.totalorder %s39, %s55
      %p57 = scmp.eq.s32.totalorder %s31, 0
      %p58 = por %p56, %p57
      %s60 = sadd.s32 %s59, 1
      %p63 = scmp.eq.s32.totalorder %s25, 1
      %p64 = scmp.ne.s32.totalorder %s59, %s61
      %p65 = scmp.eq.s32.totalorder %s25, 0
      %p66 = por %p64, %p65
      %p67 = scmp.ne.s32.totalorder %s59, %s61
      %p68 = scmp.eq.s32.totalorder %s30, 1
      %p69 = por %p67, %p68
      %p70 = scmp.ne.s32.totalorder %s61, %s62
      %p71 = scmp.eq.s32.totalorder %s30, 0
      %p72 = por %p70, %p71
      %p73 = scmp.ne.s32.totalorder %s61, %s62
      %p74 = scmp.eq.s32.totalorder %s31, 1
      %p75 = por %p73, %p74
      %p77 = scmp.ne.s32.totalorder %s62, %s76
      %p78 = scmp.eq.s32.totalorder %s31, 0
      %p79 = por %p77, %p78
      %s81 = sadd.s32 %s80, 1
      %p84 = scmp.eq.s32.totalorder %s25, 1
      %p85 = scmp.ne.s32.totalorder %s80, %s82
      %p86 = scmp.eq.s32.totalorder %s25, 0
      %p87 = por %p85, %p86
      %p88 = scmp.ne.s32.totalorder %s80, %s82
      %p89 = scmp.eq.s32.totalorder %s30, 1
      %p90 = por %p88, %p89
      %p91 = scmp.ne.s32.totalorder %s82, %s83
      %p92 = scmp.eq.s32.totalorder %s30, 0
      %p93 = por %p91, %p92
      %p94 = scmp.ne.s32.totalorder %s82, %s83
      %p95 = scmp.eq.s32.totalorder %s31, 1
      %p96 = por %p94, %p95
      %p98 = scmp.ne.s32.totalorder %s83, %s97
      %p99 = scmp.eq.s32.totalorder %s31, 0
      %p100 = por %p98, %p99
      %s102 = sadd.s32 %s101, 1
      %p105 = scmp.eq.s32.totalorder %s25, 1
      %p106 = scmp.ne.s32.totalorder %s101, %s103
      %p107 = scmp.eq.s32.totalorder %s25, 0
      %p108 = por %p106, %p107
      %p109 = scmp.ne.s32.totalorder %s101, %s103
      %p110 = scmp.eq.s32.totalorder %s30, 1
      %p111 = por %p109, %p110
      %p112 = scmp.ne.s32.totalorder %s103, %s104
      %p113 = scmp.eq.s32.totalorder %s30, 0
      %p114 = por %p112, %p113
      %p115 = scmp.ne.s32.totalorder %s103, %s104
      %p116 = scmp.eq.s32.totalorder %s31, 1
      %p117 = por %p115, %p116
      %p119 = scmp.ne.s32.totalorder %s104, %s118
      %p120 = scmp.eq.s32.totalorder %s31, 0
      %p121 = por %p119, %p120
      %s123 = sadd.s32 %s122, 1
      %p126 = scmp.eq.s32.totalorder %s25, 1
      %p127 = scmp.ne.s32.totalorder %s122, %s124
      %p128 = scmp.eq.s32.totalorder %s25, 0
      %p129 = por %p127, %p128
      %p130 = scmp.ne.s32.totalorder %s122, %s124
      %p131 = scmp.eq.s32.totalorder %s30, 1
      %p132 = por %p130, %p131
      %p133 = scmp.ne.s32.totalorder %s124, %s125
      %p134 = scmp.eq.s32.totalorder %s30, 0
      %p135 = por %p133, %p134
      %p136 = scmp.ne.s32.totalorder %s124, %s125
      %p137 = scmp.eq.s32.totalorder %s31, 1
      %p138 = por %p136, %p137
      %p140 = scmp.ne.s32.totalorder %s125, %s139
      %p141 = scmp.eq.s32.totalorder %s31, 0
      %p142 = por %p140, %p141
      %s144 = sadd.s32 %s143, 1
      %p147 = scmp.eq.s32.totalorder %s25, 1
      %p148 = scmp.ne.s32.totalorder %s143, %s145
      %p149 = scmp.eq.s32.totalorder %s25, 0
      %p150 = por %p148, %p149
      %p151 = scmp.ne.s32.totalorder %s143, %s145
      %p152 = scmp.eq.s32.totalorder %s30, 1
      %p153 = por %p151, %p152
      %p154 = scmp.ne.s32.totalorder %s145, %s146
      %p155 = scmp.eq.s32.totalorder %s30, 0
      %p156 = por %p154, %p155
      %p157 = scmp.ne.s32.totalorder %s145, %s146
      %p158 = scmp.eq.s32.totalorder %s31, 1
      %p159 = por %p157, %p158
      %p161 = scmp.ne.s32.totalorder %s146, %s160
      %p162 = scmp.eq.s32.totalorder %s31, 0
      %p163 = por %p161, %p162
      %s165 = sadd.s32 %s164, 1
      %p168 = scmp.eq.s32.totalorder %s25, 1
      %p169 = scmp.ne.s32.totalorder %s164, %s166
      %p170 = scmp.eq.s32.totalorder %s25, 0
      %p171 = por %p169, %p170
      %p172 = scmp.ne.s32.totalorder %s164, %s166
      %p173 = scmp.eq.s32.totalorder %s30, 1
      %p174 = por %p172, %p173
      %p175 = scmp.ne.s32.totalorder %s166, %s167
      %p176 = scmp.eq.s32.totalorder %s30, 0
      %p177 = por %p175, %p176
      %p178 = scmp.ne.s32.totalorder %s166, %s167
      %p179 = scmp.eq.s32.totalorder %s31, 1
      %p180 = por %p178, %p179
      %p182 = scmp.ne.s32.totalorder %s167, %s181
      %p183 = scmp.eq.s32.totalorder %s31, 0
      %p184 = por %p182, %p183
      %s186 = sadd.s32 %s185, 1
      %p189 = scmp.eq.s32.totalorder %s25, 1
      %p190 = scmp.ne.s32.totalorder %s185, %s187
      %p191 = scmp.eq.s32.totalorder %s25, 0
      %p192 = por %p190, %p191
      %p193 = scmp.ne.s32.totalorder %s185, %s187
      %p194 = scmp.eq.s32.totalorder %s30, 1
      %p195 = por %p193, %p194
      %p196 = scmp.ne.s32.totalorder %s187, %s188
      %p197 = scmp.eq.s32.totalorder %s30, 0
      %p198 = por %p196, %p197
      %p199 = scmp.ne.s32.totalorder %s187, %s188
      %p200 = scmp.eq.s32.totalorder %s31, 1
      %p201 = por %p199, %p200
      %p203 = scmp.ne.s32.totalorder %s188, %s202
      %p204 = scmp.eq.s32.totalorder %s31, 0
      %p205 = por %p203, %p204
      %s207 = sadd.s32 %s206, 1
      %p210 = scmp.eq.s32.totalorder %s25, 1
      %p211 = scmp.ne.s32.totalorder %s206, %s208
      %p212 = scmp.eq.s32.totalorder %s25, 0
      %p213 = por %p211, %p212
      %p214 = scmp.ne.s32.totalorder %s206, %s208
      %p215 = scmp.eq.s32.totalorder %s30, 1
      %p216 = por %p214, %p215
      %p217 = scmp.ne.s32.totalorder %s208, %s209
      %p218 = scmp.eq.s32.totalorder %s30, 0
      %p219 = por %p217, %p218
      %p220 = scmp.ne.s32.totalorder %s208, %s209
      %p221 = scmp.eq.s32.totalorder %s31, 1
      %p222 = por %p220, %p221
      %p224 = scmp.ne.s32.totalorder %s209, %s223
      %p225 = scmp.eq.s32.totalorder %s31, 0
      %p226 = por %p224, %p225
      %s228 = sadd.s32 %s227, 1
      %p231 = scmp.eq.s32.totalorder %s25, 1
      %p232 = scmp.ne.s32.totalorder %s227, %s229
      %p233 = scmp.eq.s32.totalorder %s25, 0
      %p234 = por %p232, %p233
      %p235 = scmp.ne.s32.totalorder %s227, %s229
      %p236 = scmp.eq.s32.totalorder %s30, 1
      %p237 = por %p235, %p236
      %p238 = scmp.ne.s32.totalorder %s229, %s230
      %p239 = scmp.eq.s32.totalorder %s30, 0
      %p240 = por %p238, %p239
      %p241 = scmp.ne.s32.totalorder %s229, %s230
      %p242 = scmp.eq.s32.totalorder %s31, 1
      %p243 = por %p241, %p242
      %p245 = scmp.ne.s32.totalorder %s230, %s244
      %p246 = scmp.eq.s32.totalorder %s31, 0
      %p247 = por %p245, %p246
      %s249 = sadd.s32 %s248, 1
      %p252 = scmp.eq.s32.totalorder %s25, 1
      %p253 = scmp.ne.s32.totalorder %s248, %s250
      %p254 = scmp.eq.s32.totalorder %s25, 0
      %p255 = por %p253, %p254
      %p256 = scmp.ne.s32.totalorder %s248, %s250
      %p257 = scmp.eq.s32.totalorder %s30, 1
      %p258 = por %p256, %p257
      %p259 = scmp.ne.s32.totalorder %s250, %s251
      %p260 = scmp.eq.s32.totalorder %s30, 0
      %p261 = por %p259, %p260
      %p262 = scmp.ne.s32.totalorder %s250, %s251
      %p263 = scmp.eq.s32.totalorder %s31, 1
      %p264 = por %p262, %p263
      %p266 = scmp.ne.s32.totalorder %s251, %s265
      %p267 = scmp.eq.s32.totalorder %s31, 0
      %p268 = por %p266, %p267
      %s270 = sadd.s32 %s269, 1
      %p273 = scmp.eq.s32.totalorder %s25, 1
      %p274 = scmp.ne.s32.totalorder %s269, %s271
      %p275 = scmp.eq.s32.totalorder %s25, 0
      %p276 = por %p274, %p275
      %p277 = scmp.ne.s32.totalorder %s269, %s271
      %p278 = scmp.eq.s32.totalorder %s30, 1
      %p279 = por %p277, %p278
      %p280 = scmp.ne.s32.totalorder %s271, %s272
      %p281 = scmp.eq.s32.totalorder %s30, 0
      %p282 = por %p280, %p281
      %p283 = scmp.ne.s32.totalorder %s271, %s272
      %p284 = scmp.eq.s32.totalorder %s31, 1
      %p285 = por %p283, %p284
      %p287 = scmp.ne.s32.totalorder %s272, %s286
      %p288 = scmp.eq.s32.totalorder %s31, 0
      %p289 = por %p287, %p288
      %s291 = sadd.s32 %s290, 1
      %p294 = scmp.eq.s32.totalorder %s25, 1
      %p295 = scmp.ne.s32.totalorder %s290, %s292
      %p296 = scmp.eq.s32.totalorder %s25, 0
      %p297 = por %p295, %p296
      %p298 = scmp.ne.s32.totalorder %s290, %s292
      %p299 = scmp.eq.s32.totalorder %s30, 1
      %p300 = por %p298, %p299
      %p301 = scmp.ne.s32.totalorder %s292, %s293
      %p302 = scmp.eq.s32.totalorder %s30, 0
      %p303 = por %p301, %p302
      %p304 = scmp.ne.s32.totalorder %s292, %s293
      %p305 = scmp.eq.s32.totalorder %s31, 1
      %p306 = por %p304, %p305
      %p308 = scmp.ne.s32.totalorder %s293, %s307
      %p309 = scmp.eq.s32.totalorder %s31, 0
      %p310 = por %p308, %p309
      %s312 = sadd.s32 %s311, 1
      %p315 = scmp.eq.s32.totalorder %s25, 1
      %p316 = scmp.ne.s32.totalorder %s311, %s313
      %p317 = scmp.eq.s32.totalorder %s25, 0
      %p318 = por %p316, %p317
      %p319 = scmp.ne.s32.totalorder %s311, %s313
      %p320 = scmp.eq.s32.totalorder %s30, 1
      %p321 = por %p319, %p320
      %p322 = scmp.ne.s32.totalorder %s313, %s314
      %p323 = scmp.eq.s32.totalorder %s30, 0
      %p324 = por %p322, %p323
      %p325 = scmp.ne.s32.totalorder %s313, %s314
      %p326 = scmp.eq.s32.totalorder %s31, 1
      %p327 = por %p325, %p326
      %p329 = scmp.ne.s32.totalorder %s314, %s328
      %p330 = scmp.eq.s32.totalorder %s31, 0
      %p331 = por %p329, %p330
      %s333 = sadd.s32 %s332, 1
      %p336 = scmp.eq.s32.totalorder %s25, 1
      %p337 = scmp.ne.s32.totalorder %s332, %s334
      %p338 = scmp.eq.s32.totalorder %s25, 0
      %p339 = por %p337, %p338
      %p340 = scmp.ne.s32.totalorder %s332, %s334
      %p341 = scmp.eq.s32.totalorder %s30, 1
      %p342 = por %p340, %p341
      %p343 = scmp.ne.s32.totalorder %s334, %s335
      %p344 = scmp.eq.s32.totalorder %s30, 0
      %p345 = por %p343, %p344
      %p346 = scmp.ne.s32.totalorder %s334, %s335
      %p347 = scmp.eq.s32.totalorder %s31, 1
      %p348 = por %p346, %p347
      %p350 = scmp.ne.s32.totalorder %s335, %s349
      %p351 = scmp.eq.s32.totalorder %s31, 0
      %p352 = por %p350, %p351
      %s354 = sadd.s32 %s353, 1
      %p357 = scmp.eq.s32.totalorder %s25, 1
      %p358 = scmp.ne.s32.totalorder %s353, %s355
      %p359 = scmp.eq.s32.totalorder %s25, 0
      %p360 = por %p358, %p359
      %p361 = scmp.ne.s32.totalorder %s353, %s355
      %p362 = scmp.eq.s32.totalorder %s30, 1
      %p363 = por %p361, %p362
      %p364 = scmp.ne.s32.totalorder %s355, %s356
      %p365 = scmp.eq.s32.totalorder %s30, 0
      %p366 = por %p364, %p365
      %p367 = scmp.ne.s32.totalorder %s355, %s356
      %p368 = scmp.eq.s32.totalorder %s31, 1
      %p369 = por %p367, %p368
      %p371 = scmp.ne.s32.totalorder %s356, %s370
      %p372 = scmp.eq.s32.totalorder %s31, 0
      %p373 = por %p371, %p372
      %s374 = ssub.s32 %s25, %s32
      %p375 = scmp.eq.s32.totalorder %s374, 0
      %s377 = sadd.s32 %s376, 1
      %s378 = scalar_select %p375, %s376, %s377
      %p381 = pneg %p375
      %p382 = scmp.eq.s32.totalorder %s25, 1
      %p383 = por %p381, %p382
      %p384 = scmp.ne.s32.totalorder %s376, %s379
      %p385 = scmp.eq.s32.totalorder %s25, 0
      %p386 = por %p384, %p385
      %p387 = scmp.ne.s32.totalorder %s376, %s379
      %p388 = scmp.eq.s32.totalorder %s30, 1
      %p389 = por %p387, %p388
      %p390 = scmp.ne.s32.totalorder %s379, %s380
      %p391 = scmp.eq.s32.totalorder %s30, 0
      %p392 = por %p390, %p391
      %p393 = scmp.ne.s32.totalorder %s379, %s380
      %p394 = scmp.eq.s32.totalorder %s31, 1
      %p395 = por %p393, %p394
      %p397 = scmp.ne.s32.totalorder %s380, %s396
      %p398 = scmp.eq.s32.totalorder %s31, 0
      %p399 = por %p397, %p398
      %p400 = scmp.le.s32.totalorder 1, %s25
      %p401 = scmp.lt.s32.totalorder %s25, 3
      %p402 = pnand %p400, %p401
      %p403 = pneg %p402
      // Predicated region
      $region9: #{clip_vision_forward.1} parent=5 // pred_check
        _
      $region10: #{clip_vision_forward.1} parent=5 // pred_check_branch
        %405 = sbr.rel (%p402) target = $region12
      $region11: #{clip_vision_forward.1} parent=5 // pred_region
        %s406 = ssub.s32 %s25, 1
        // Predicated region
        $region13: #{clip_vision_forward.1} parent=11 // pred_check
          %p407 = pneg %p72
        $region14: #{clip_vision_forward.1} parent=11 // pred_check_branch
          %409 = sbr.rel (%p407) target = $region16
        $region15: #{clip_vision_forward.1} parent=11 // pred_region
          _
        $region16: #{clip_vision_forward.1} parent=11 // pred_fallthru
          _
        // Predicated region
        $region17: #{clip_vision_forward.1} parent=11 // pred_check
          %p410 = pneg %p93
        $region18: #{clip_vision_forward.1} parent=11 // pred_check_branch
          %412 = sbr.rel (%p410) target = $region20
        $region19: #{clip_vision_forward.1} parent=11 // pred_region
          _
        $region20: #{clip_vision_forward.1} parent=11 // pred_fallthru
          _
        // Predicated region
        $region21: #{clip_vision_forward.1} parent=11 // pred_check
          %p413 = pneg %p114
        $region22: #{clip_vision_forward.1} parent=11 // pred_check_branch
          %415 = sbr.rel (%p413) target = $region24
        $region23: #{clip_vision_forward.1} parent=11 // pred_region
          _
        $region24: #{clip_vision_forward.1} parent=11 // pred_fallthru
          _
        // Predicated region
        $region25: #{clip_vision_forward.1} parent=11 // pred_check
          %p416 = pneg %p135
        $region26: #{clip_vision_forward.1} parent=11 // pred_check_branch
          %418 = sbr.rel (%p416) target = $region28
        $region27: #{clip_vision_forward.1} parent=11 // pred_region
          _
        $region28: #{clip_vision_forward.1} parent=11 // pred_fallthru
          _
        // Predicated region
        $region29: #{clip_vision_forward.1} parent=11 // pred_check
          %p419 = pneg %p156
        $region30: #{clip_vision_forward.1} parent=11 // pred_check_branch
          %421 = sbr.rel (%p419) target = $region32
        $region31: #{clip_vision_forward.1} parent=11 // pred_region
          _
        $region32: #{clip_vision_forward.1} parent=11 // pred_fallthru
          _
        // Predicated region
        $region33: #{clip_vision_forward.1} parent=11 // pred_check
          %p422 = pneg %p177
        $region34: #{clip_vision_forward.1} parent=11 // pred_check_branch
          %424 = sbr.rel (%p422) target = $region36
        $region35: #{clip_vision_forward.1} parent=11 // pred_region
          _
        $region36: #{clip_vision_forward.1} parent=11 // pred_fallthru
          _
        // Predicated region
        $region37: #{clip_vision_forward.1} parent=11 // pred_check
          %p425 = pneg %p198
        $region38: #{clip_vision_forward.1} parent=11 // pred_check_branch
          %427 = sbr.rel (%p425) target = $region40
        $region39: #{clip_vision_forward.1} parent=11 // pred_region
          _
        $region40: #{clip_vision_forward.1} parent=11 // pred_fallthru
          _
        // Predicated region
        $region41: #{clip_vision_forward.1} parent=11 // pred_check
          %p428 = pneg %p219
        $region42: #{clip_vision_forward.1} parent=11 // pred_check_branch
          %430 = sbr.rel (%p428) target = $region44
        $region43: #{clip_vision_forward.1} parent=11 // pred_region
          _
        $region44: #{clip_vision_forward.1} parent=11 // pred_fallthru
          _
        // Predicated region
        $region45: #{clip_vision_forward.1} parent=11 // pred_check
          %p431 = pneg %p240
        $region46: #{clip_vision_forward.1} parent=11 // pred_check_branch
          %433 = sbr.rel (%p431) target = $region48
        $region47: #{clip_vision_forward.1} parent=11 // pred_region
          _
        $region48: #{clip_vision_forward.1} parent=11 // pred_fallthru
          _
        // Predicated region
        $region49: #{clip_vision_forward.1} parent=11 // pred_check
          %p434 = pneg %p261
        $region50: #{clip_vision_forward.1} parent=11 // pred_check_branch
          %436 = sbr.rel (%p434) target = $region52
        $region51: #{clip_vision_forward.1} parent=11 // pred_region
          _
        $region52: #{clip_vision_forward.1} parent=11 // pred_fallthru
          _
        // Predicated region
        $region53: #{clip_vision_forward.1} parent=11 // pred_check
          %p437 = pneg %p282
        $region54: #{clip_vision_forward.1} parent=11 // pred_check_branch
          %439 = sbr.rel (%p437) target = $region56
        $region55: #{clip_vision_forward.1} parent=11 // pred_region
          _
        $region56: #{clip_vision_forward.1} parent=11 // pred_fallthru
          _
        // Predicated region
        $region57: #{clip_vision_forward.1} parent=11 // pred_check
          %p440 = pneg %p303
        $region58: #{clip_vision_forward.1} parent=11 // pred_check_branch
          %442 = sbr.rel (%p440) target = $region60
        $region59: #{clip_vision_forward.1} parent=11 // pred_region
          _
        $region60: #{clip_vision_forward.1} parent=11 // pred_fallthru
          _
        // Predicated region
        $region61: #{clip_vision_forward.1} parent=11 // pred_check
          %p443 = pneg %p324
        $region62: #{clip_vision_forward.1} parent=11 // pred_check_branch
          %445 = sbr.rel (%p443) target = $region64
        $region63: #{clip_vision_forward.1} parent=11 // pred_region
          _
        $region64: #{clip_vision_forward.1} parent=11 // pred_fallthru
          _
        // Predicated region
        $region65: #{clip_vision_forward.1} parent=11 // pred_check
          %p446 = pneg %p345
        $region66: #{clip_vision_forward.1} parent=11 // pred_check_branch
          %448 = sbr.rel (%p446) target = $region68
        $region67: #{clip_vision_forward.1} parent=11 // pred_region
          _
        $region68: #{clip_vision_forward.1} parent=11 // pred_fallthru
          _
        // Predicated region
        $region69: #{clip_vision_forward.1} parent=11 // pred_check
          %p449 = pneg %p366
        $region70: #{clip_vision_forward.1} parent=11 // pred_check_branch
          %451 = sbr.rel (%p449) target = $region72
        $region71: #{clip_vision_forward.1} parent=11 // pred_region
          _
        $region72: #{clip_vision_forward.1} parent=11 // pred_fallthru
          _
      $region12: #{clip_vision_forward.1} parent=5 // pred_fallthru
        _
      %p452 = scmp.lt.s32.totalorder %s25, 2
      // Predicated region
      $region73: #{clip_vision_forward.1} parent=5 // pred_check
        %p453 = pneg %p452
      $region74: #{clip_vision_forward.1} parent=5 // pred_check_branch
        %455 = sbr.rel (%p453) target = $region76
      $region75: #{clip_vision_forward.1} parent=5 // pred_region
        // Predicated region
        $region77: #{clip_vision_forward.1} parent=75 // pred_check
          %p456 = pneg %p45
        $region78: #{clip_vision_forward.1} parent=75 // pred_check_branch
          %458 = sbr.rel (%p456) target = $region80
        $region79: #{clip_vision_forward.1} parent=75 // pred_region
          %p459 = scmp.lt.s32.totalorder %s25, 1
          %s460 = scalar_select %p459, %s25, 1
          %s461 = smul.addr %s460, 10
          %s462 = smul.addr %s461, 2
          %s463 = scalar_lea.vmem %s0, %s462
        $region80: #{clip_vision_forward.1} parent=75 // pred_fallthru
          _
      $region76: #{clip_vision_forward.1} parent=5 // pred_fallthru
        _
      %p464 = scmp.le.s32.totalorder 1, %s25
      %p465 = scmp.lt.s32.totalorder %s25, 3
      %p466 = pnand %p464, %p465
      %p467 = pneg %p466
      // Predicated region
      $region81: #{clip_vision_forward.1} parent=5 // pred_check
        _
      $region82: #{clip_vision_forward.1} parent=5 // pred_check_branch
        %469 = sbr.rel (%p466) target = $region84
      $region83: #{clip_vision_forward.1} parent=5 // pred_region
        %s470 = ssub.s32 %s25, 1
        %p471 = scmp.lt.s32.totalorder %s30, 1
        %s472 = scalar_select %p471, %s30, 1
        %s473 = smul.addr %s472, 10
        %s474 = smul.addr %s473, 2
        %s475 = scalar_lea.vmem %s0, %s474
        %p476 = pneg %p51
        %p477 = pneg %p48
        %p478 = pneg %p72
        %p479 = pneg %p69
        %p480 = pneg %p93
        %p481 = pneg %p90
        %p482 = pneg %p114
        %p483 = pneg %p111
        %p484 = pneg %p135
        %p485 = pneg %p132
        %p486 = pneg %p156
        %p487 = pneg %p153
        %p488 = pneg %p177
        %p489 = pneg %p174
        %p490 = pneg %p198
        %p491 = pneg %p195
        %p492 = pneg %p219
        %p493 = pneg %p216
        %p494 = pneg %p240
        %p495 = pneg %p237
        %p496 = pneg %p261
        %p497 = pneg %p258
        %p498 = pneg %p282
        %p499 = pneg %p279
        %p500 = pneg %p303
        %p501 = pneg %p300
        %p502 = pneg %p324
        %p503 = pneg %p321
        %p504 = pneg %p345
        %p505 = pneg %p342
        %p506 = pneg %p366
        %p507 = pneg %p363
        %p508 = pneg %p392
        %p509 = pneg %p389
        %s510 = sand.u32 %s379, 1
        %s511 = scalar_lea.sflag [#allocation3], %s510
        %s512 = sand.u32 %s379, 1
        %s513 = smul.addr %s512, 2
        %s514 = scalar_lea.vmem [#allocation2], %s513
        %p515 = scmp.lt.s32.totalorder %s30, 1
        %s516 = scalar_select %p515, %s30, 1
        %s517 = smul.addr %s516, 10
        %s518 = smul.addr %s517, 2
        %s519 = scalar_lea.vmem %s0, %s518
        %v521 = vld [vmem:[%s519] sm:$0xff]
        %v522 = vld [vmem:[%s519 + $0x8] sm:$0xff]
        %v523 = vld [vmem:[%s519 + $0x10] sm:$0xf]
        %v527 = vcombine.high %v521, %v521
        %v529 = vunpack.c.l.s4 1983009808
        %v530 = vunpack.c.0.s8 %v529
        %v531 = vlaneseq
        %v532 = vshrl.u32 %v531, 7
        %v533 = vsub.s32 %v530, %v532
        %v534 = vrot.slane %v521, %v533
        %v536 = vunpack.c.l.s4 1983009808
        %v537 = vunpack.c.0.s8 %v536
        %v538 = vlaneseq
        %v539 = vshrl.u32 %v538, 7
        %v540 = vsub.s32 %v537, %v539
        %v541 = vrot.slane %v527, %v540
        %v542 = vcombine.high %v534, %v534
        %v543 = vcombine.high %v541, %v541
        %v544 = vcombine.high %v522, %v522
        %v546 = vunpack.c.l.s4 1983009808
        %v547 = vunpack.c.0.s8 %v546
        %v548 = vlaneseq
        %v549 = vshrl.u32 %v548, 7
        %v550 = vsub.s32 %v547, %v549
        %v551 = vrot.slane %v522, %v550
        %v553 = vunpack.c.l.s4 1983009808
        %v554 = vunpack.c.0.s8 %v553
        %v555 = vlaneseq
        %v556 = vshrl.u32 %v555, 7
        %v557 = vsub.s32 %v554, %v556
        %v558 = vrot.slane %v544, %v557
        %v559 = vcombine.high %v551, %v551
        %v560 = vcombine.high %v558, %v558
        %v562 = vunpack.c.l.s4 1983009808
        %v563 = vunpack.c.0.s8 %v562
        %v564 = vlaneseq
        %v565 = vshrl.u32 %v564, 7
        %v566 = vsub.s32 %v563, %v565
        %v567 = vrot.slane %v523, %v566
        %v568 = vcombine.high %v567, %v567
        %v579 = vpack.c.bf16 %v534, %v534
        %v580 = vpack.c.bf16 %v542, %v542
        %v581 = vpack.c.bf16 %v541, %v541
        %v582 = vpack.c.bf16 %v543, %v543
        %v583 = vpack.c.bf16 %v551, %v551
        %v584 = vpack.c.bf16 %v559, %v559
        %v585 = vpack.c.bf16 %v558, %v558
        %v586 = vpack.c.bf16 %v560, %v560
        %v587 = vpack.c.bf16 %v567, %v567
        %v588 = vpack.c.bf16 %v568, %v568
        %v589 = vld [vmem:[%s1] sm:$0xf]
        %v590 = vld [vmem:[%s1 + $0x4] sm:$0xf]
        %v591 = vld [vmem:[%s1 + $0x8] sm:$0xf]
        %v592 = vld [vmem:[%s1 + $0xc] sm:$0xf]
        %v593 = vld [vmem:[%s1 + $0x10] sm:$0xf]
        %v594 = vld [vmem:[%s1 + $0x14] sm:$0xf]
        %v595 = vld [vmem:[%s1 + $0x18] sm:$0xf]
        %v596 = vld [vmem:[%s1 + $0x1c] sm:$0xf]
        %v597 = vld [vmem:[%s1 + $0x20] sm:$0xf]
        %v598 = vld [vmem:[%s1 + $0x24] sm:$0xf]
        %v599 = vld [vmem:[%s1 + $0x28] sm:$0xf]
        %v600 = vld [vmem:[%s1 + $0x2c] sm:$0xf]
        %v601 = vld [vmem:[%s1 + $0x30] sm:$0xf]
        %v602 = vld [vmem:[%s1 + $0x34] sm:$0xf]
        %v603 = vld [vmem:[%s1 + $0x38] sm:$0xf]
        %v604 = vld [vmem:[%s1 + $0x3c] sm:$0xf]
        %v605 = vld [vmem:[%s1 + $0x40] sm:$0xf]
        %v606 = vld [vmem:[%s1 + $0x44] sm:$0xf]
        %v607 = vld [vmem:[%s1 + $0x48] sm:$0xf]
        %v608 = vld [vmem:[%s1 + $0x4c] sm:$0xf]
        %v609 = vld [vmem:[%s1 + $0x50] sm:$0xf]
        %v610 = vld [vmem:[%s1 + $0x54] sm:$0xf]
        %v611 = vld [vmem:[%s1 + $0x58] sm:$0xf]
        %v612 = vld [vmem:[%s1 + $0x5c] sm:$0xf]
        %v613 = vld [vmem:[%s1 + $0x60] sm:$0xf]
        %v614 = vld [vmem:[%s1 + $0x64] sm:$0xf]
        %v615 = vld [vmem:[%s1 + $0x68] sm:$0xf]
        %v616 = vld [vmem:[%s1 + $0x6c] sm:$0xf]
        %v617 = vld [vmem:[%s1 + $0x70] sm:$0xf]
        %v618 = vld [vmem:[%s1 + $0x74] sm:$0xf]
        %v619 = vld [vmem:[%s1 + $0x78] sm:$0xf]
        %v620 = vld [vmem:[%s1 + $0x7c] sm:$0xf]
        %v621 = vld [vmem:[%s1 + $0x80] sm:$0xf]
        %v622 = vld [vmem:[%s1 + $0x84] sm:$0xf]
        %v623 = vld [vmem:[%s1 + $0x88] sm:$0xf]
        %v624 = vld [vmem:[%s1 + $0x8c] sm:$0xf]
        %v625 = vld [vmem:[%s1 + $0x90] sm:$0xf]
        %v626 = vld [vmem:[%s1 + $0x94] sm:$0xf]
        %v627 = vld [vmem:[%s1 + $0x98] sm:$0xf]
        %v628 = vld [vmem:[%s1 + $0x9c] sm:$0xf]
        %v629 = vld [vmem:[%s1 + $0xa0] sm:$0xf]
        %v630 = vld [vmem:[%s1 + $0xa4] sm:$0xf]
        %v631 = vld [vmem:[%s1 + $0xa8] sm:$0xf]
        %v632 = vld [vmem:[%s1 + $0xac] sm:$0xf]
        %v633 = vld [vmem:[%s1 + $0xb0] sm:$0xf]
        %v634 = vld [vmem:[%s1 + $0xb4] sm:$0xf]
        %v635 = vld [vmem:[%s1 + $0xb8] sm:$0xf]
        %v636 = vld [vmem:[%s1 + $0xbc] sm:$0xf]
        %v637 = vld [vmem:[%s1 + $0xc0] sm:$0xf]
        %v638 = vld [vmem:[%s1 + $0xc4] sm:$0xf]
        %v639 = vld [vmem:[%s1 + $0xc8] sm:$0xf]
        %v640 = vld [vmem:[%s1 + $0xcc] sm:$0xf]
        %v641 = vld [vmem:[%s1 + $0xd0] sm:$0xf]
        %v642 = vld [vmem:[%s1 + $0xd4] sm:$0xf]
        %v643 = vld [vmem:[%s1 + $0xd8] sm:$0xf]
        %v644 = vld [vmem:[%s1 + $0xdc] sm:$0xf]
        %v645 = vld [vmem:[%s1 + $0xe0] sm:$0xf]
        %v646 = vld [vmem:[%s1 + $0xe4] sm:$0xf]
        %v647 = vld [vmem:[%s1 + $0xe8] sm:$0xf]
        %v648 = vld [vmem:[%s1 + $0xec] sm:$0xf]
        %v649 = vld [vmem:[%s1 + $0xf0] sm:$0xf]
        %v650 = vld [vmem:[%s1 + $0xf4] sm:$0xf]
        %v651 = vld [vmem:[%s1 + $0xf8] sm:$0xf]
        %v652 = vld [vmem:[%s1 + $0xfc] sm:$0xf]
        %v653 = vld [vmem:[%s1 + $0x100] sm:$0xf]
        %v654 = vld [vmem:[%s1 + $0x104] sm:$0xf]
        %v655 = vld [vmem:[%s1 + $0x108] sm:$0xf]
        %v656 = vld [vmem:[%s1 + $0x10c] sm:$0xf]
        %v657 = vld [vmem:[%s1 + $0x110] sm:$0xf]
        %v658 = vld [vmem:[%s1 + $0x114] sm:$0xf]
        %v659 = vld [vmem:[%s1 + $0x118] sm:$0xf]
        %v660 = vld [vmem:[%s1 + $0x11c] sm:$0xf]
        %v661 = vld [vmem:[%s1 + $0x120] sm:$0xf]
        %v662 = vld [vmem:[%s1 + $0x124] sm:$0xf]
        %v663 = vld [vmem:[%s1 + $0x128] sm:$0xf]
        %v664 = vld [vmem:[%s1 + $0x12c] sm:$0xf]
        %v665 = vld [vmem:[%s1 + $0x130] sm:$0xf]
        %v666 = vld [vmem:[%s1 + $0x134] sm:$0xf]
        %v667 = vld [vmem:[%s1 + $0x138] sm:$0xf]
        %v668 = vld [vmem:[%s1 + $0x13c] sm:$0xf]
        %v669 = vld [vmem:[%s1 + $0x140] sm:$0xf]
        %v670 = vld [vmem:[%s1 + $0x144] sm:$0xf]
        %v671 = vld [vmem:[%s1 + $0x148] sm:$0xf]
        %v672 = vld [vmem:[%s1 + $0x14c] sm:$0xf]
        %v673 = vld [vmem:[%s1 + $0x150] sm:$0xf]
        %v674 = vld [vmem:[%s1 + $0x154] sm:$0xf]
        %v675 = vld [vmem:[%s1 + $0x158] sm:$0xf]
        %v676 = vld [vmem:[%s1 + $0x15c] sm:$0xf]
        %v677 = vld [vmem:[%s1 + $0x160] sm:$0xf]
        %v678 = vld [vmem:[%s1 + $0x164] sm:$0xf]
        %v679 = vld [vmem:[%s1 + $0x168] sm:$0xf]
        %v680 = vld [vmem:[%s1 + $0x16c] sm:$0xf]
        %v681 = vld [vmem:[%s1 + $0x170] sm:$0xf]
        %v682 = vld [vmem:[%s1 + $0x174] sm:$0xf]
        %v683 = vld [vmem:[%s1 + $0x178] sm:$0xf]
        %v684 = vld [vmem:[%s1 + $0x17c] sm:$0xf]
        %v685 = vld [vmem:[%s1 + $0x180] sm:$0xf]
        %v686 = vld [vmem:[%s1 + $0x184] sm:$0xf]
        %v687 = vld [vmem:[%s1 + $0x188] sm:$0xf]
        %v688 = vld [vmem:[%s1 + $0x18c] sm:$0xf]
        %v689 = vld [vmem:[%s1 + $0x190] sm:$0xf]
        %v690 = vld [vmem:[%s1 + $0x194] sm:$0xf]
        %v691 = vld [vmem:[%s1 + $0x198] sm:$0xf]
        %v692 = vld [vmem:[%s1 + $0x19c] sm:$0xf]
        %v693 = vld [vmem:[%s1 + $0x1a0] sm:$0xf]
        %v694 = vld [vmem:[%s1 + $0x1a4] sm:$0xf]
        %v695 = vld [vmem:[%s1 + $0x1a8] sm:$0xf]
        %v696 = vld [vmem:[%s1 + $0x1ac] sm:$0xf]
        %v697 = vld [vmem:[%s1 + $0x1b0] sm:$0xf]
        %v698 = vld [vmem:[%s1 + $0x1b4] sm:$0xf]
        %v699 = vld [vmem:[%s1 + $0x1b8] sm:$0xf]
        %v700 = vld [vmem:[%s1 + $0x1bc] sm:$0xf]
        %v701 = vld [vmem:[%s1 + $0x1c0] sm:$0xf]
        %v702 = vld [vmem:[%s1 + $0x1c4] sm:$0xf]
        %v703 = vld [vmem:[%s1 + $0x1c8] sm:$0xf]
        %v704 = vld [vmem:[%s1 + $0x1cc] sm:$0xf]
        %v705 = vld [vmem:[%s1 + $0x1d0] sm:$0xf]
        %v706 = vld [vmem:[%s1 + $0x1d4] sm:$0xf]
        %v707 = vld [vmem:[%s1 + $0x1d8] sm:$0xf]
        %v708 = vld [vmem:[%s1 + $0x1dc] sm:$0xf]
        %v709 = vld [vmem:[%s1 + $0x1e0] sm:$0xf]
        %v710 = vld [vmem:[%s1 + $0x1e4] sm:$0xf]
        %v711 = vld [vmem:[%s1 + $0x1e8] sm:$0xf]
        %v712 = vld [vmem:[%s1 + $0x1ec] sm:$0xf]
        %v713 = vld [vmem:[%s1 + $0x1f0] sm:$0xf]
        %v714 = vld [vmem:[%s1 + $0x1f4] sm:$0xf]
        %v715 = vld [vmem:[%s1 + $0x1f8] sm:$0xf]
        %v716 = vld [vmem:[%s1 + $0x1fc] sm:$0xf]
        %v717 = vld [vmem:[%s1 + $0x200] sm:$0xf]
        %v718 = vld [vmem:[%s1 + $0x204] sm:$0xf]
        %v719 = vld [vmem:[%s1 + $0x208] sm:$0xf]
        %v720 = vld [vmem:[%s1 + $0x20c] sm:$0xf]
        %v721 = vld [vmem:[%s1 + $0x210] sm:$0xf]
        %v722 = vld [vmem:[%s1 + $0x214] sm:$0xf]
        %v723 = vld [vmem:[%s1 + $0x218] sm:$0xf]
        %v724 = vld [vmem:[%s1 + $0x21c] sm:$0xf]
        %v725 = vld [vmem:[%s1 + $0x220] sm:$0xf]
        %v726 = vld [vmem:[%s1 + $0x224] sm:$0xf]
        %v727 = vld [vmem:[%s1 + $0x228] sm:$0xf]
        %v728 = vld [vmem:[%s1 + $0x22c] sm:$0xf]
        %v729 = vld [vmem:[%s1 + $0x230] sm:$0xf]
        %v730 = vld [vmem:[%s1 + $0x234] sm:$0xf]
        %v731 = vld [vmem:[%s1 + $0x238] sm:$0xf]
        %v732 = vld [vmem:[%s1 + $0x23c] sm:$0xf]
        %v733 = vld [vmem:[%s1 + $0x240] sm:$0xf]
        %v734 = vld [vmem:[%s1 + $0x244] sm:$0xf]
        %v735 = vld [vmem:[%s1 + $0x248] sm:$0xf]
        %v736 = vld [vmem:[%s1 + $0x24c] sm:$0xf]
        %v737 = vld [vmem:[%s1 + $0x250] sm:$0xf]
        %v738 = vld [vmem:[%s1 + $0x254] sm:$0xf]
        %v739 = vld [vmem:[%s1 + $0x258] sm:$0xf]
        %v740 = vld [vmem:[%s1 + $0x25c] sm:$0xf]
        %v741 = vld [vmem:[%s1 + $0x260] sm:$0xf]
        %v742 = vld [vmem:[%s1 + $0x264] sm:$0xf]
        %v743 = vld [vmem:[%s1 + $0x268] sm:$0xf]
        %v744 = vld [vmem:[%s1 + $0x26c] sm:$0xf]
        %v745 = vld [vmem:[%s1 + $0x270] sm:$0xf]
        %v746 = vld [vmem:[%s1 + $0x274] sm:$0xf]
        %v747 = vld [vmem:[%s1 + $0x278] sm:$0xf]
        %v748 = vld [vmem:[%s1 + $0x27c] sm:$0xf]
        %v909 = vunpack.c.l.b16 %v589
        %v910 = vunpack.c.l.b16 %v590
        %v911 = vunpack.c.l.b16 %v591
        %v912 = vunpack.c.l.b16 %v592
        %v913 = vunpack.c.l.b16 %v593
        %v914 = vunpack.c.l.b16 %v594
        %v915 = vunpack.c.l.b16 %v595
        %v916 = vunpack.c.l.b16 %v596
        %v917 = vunpack.c.l.b16 %v597
        %v918 = vunpack.c.l.b16 %v598
        %v919 = vunpack.c.l.b16 %v599
        %v920 = vunpack.c.l.b16 %v600
        %v921 = vunpack.c.l.b16 %v601
        %v922 = vunpack.c.l.b16 %v602
        %v923 = vunpack.c.l.b16 %v603
        %v924 = vunpack.c.l.b16 %v604
        %v925 = vunpack.c.l.b16 %v605
        %v926 = vunpack.c.l.b16 %v606
        %v927 = vunpack.c.l.b16 %v607
        %v928 = vunpack.c.l.b16 %v608
        %v929 = vunpack.c.l.b16 %v609
        %v930 = vunpack.c.l.b16 %v610
        %v931 = vunpack.c.l.b16 %v611
        %v932 = vunpack.c.l.b16 %v612
        %v933 = vunpack.c.l.b16 %v613
        %v934 = vunpack.c.l.b16 %v614
        %v935 = vunpack.c.l.b16 %v615
        %v936 = vunpack.c.l.b16 %v616
        %v937 = vunpack.c.l.b16 %v617
        %v938 = vunpack.c.l.b16 %v618
        %v939 = vunpack.c.l.b16 %v619
        %v940 = vunpack.c.l.b16 %v620
        %v941 = vunpack.c.l.b16 %v621
        %v942 = vunpack.c.l.b16 %v622
        %v943 = vunpack.c.l.b16 %v623
        %v944 = vunpack.c.l.b16 %v624
        %v945 = vunpack.c.l.b16 %v625
        %v946 = vunpack.c.l.b16 %v626
        %v947 = vunpack.c.l.b16 %v627
        %v948 = vunpack.c.l.b16 %v628
        %v949 = vunpack.c.l.b16 %v629
        %v950 = vunpack.c.l.b16 %v630
        %v951 = vunpack.c.l.b16 %v631
        %v952 = vunpack.c.l.b16 %v632
        %v953 = vunpack.c.l.b16 %v633
        %v954 = vunpack.c.l.b16 %v634
        %v955 = vunpack.c.l.b16 %v635
        %v956 = vunpack.c.l.b16 %v636
        %v957 = vunpack.c.l.b16 %v637
        %v958 = vunpack.c.l.b16 %v638
        %v959 = vunpack.c.l.b16 %v639
        %v960 = vunpack.c.l.b16 %v640
        %v961 = vunpack.c.l.b16 %v641
        %v962 = vunpack.c.l.b16 %v642
        %v963 = vunpack.c.l.b16 %v643
        %v964 = vunpack.c.l.b16 %v644
        %v965 = vunpack.c.l.b16 %v645
        %v966 = vunpack.c.l.b16 %v646
        %v967 = vunpack.c.l.b16 %v647
        %v968 = vunpack.c.l.b16 %v648
        %v969 = vunpack.c.l.b16 %v649
        %v970 = vunpack.c.l.b16 %v650
        %v971 = vunpack.c.l.b16 %v651
        %v972 = vunpack.c.l.b16 %v652
        %v973 = vunpack.c.l.b16 %v653
        %v974 = vunpack.c.l.b16 %v654
        %v975 = vunpack.c.l.b16 %v655
        %v976 = vunpack.c.l.b16 %v656
        %v977 = vunpack.c.l.b16 %v657
        %v978 = vunpack.c.l.b16 %v658
        %v979 = vunpack.c.l.b16 %v659
        %v980 = vunpack.c.l.b16 %v660
        %v981 = vunpack.c.l.b16 %v661
        %v982 = vunpack.c.l.b16 %v662
        %v983 = vunpack.c.l.b16 %v663
        %v984 = vunpack.c.l.b16 %v664
        %v985 = vunpack.c.l.b16 %v665
        %v986 = vunpack.c.l.b16 %v666
        %v987 = vunpack.c.l.b16 %v667
        %v988 = vunpack.c.l.b16 %v668
        %v989 = vunpack.c.l.b16 %v669
        %v990 = vunpack.c.l.b16 %v670
        %v991 = vunpack.c.l.b16 %v671
        %v992 = vunpack.c.l.b16 %v672
        %v993 = vunpack.c.l.b16 %v673
        %v994 = vunpack.c.l.b16 %v674
        %v995 = vunpack.c.l.b16 %v675
        %v996 = vunpack.c.l.b16 %v676
        %v997 = vunpack.c.l.b16 %v677
        %v998 = vunpack.c.l.b16 %v678
        %v999 = vunpack.c.l.b16 %v679
        %v1000 = vunpack.c.l.b16 %v680
        %v1001 = vunpack.c.l.b16 %v681
        %v1002 = vunpack.c.l.b16 %v682
        %v1003 = vunpack.c.l.b16 %v683
        %v1004 = vunpack.c.l.b16 %v684
        %v1005 = vunpack.c.l.b16 %v685
        %v1006 = vunpack.c.l.b16 %v686
        %v1007 = vunpack.c.l.b16 %v687
        %v1008 = vunpack.c.l.b16 %v688
        %v1009 = vunpack.c.l.b16 %v689
        %v1010 = vunpack.c.l.b16 %v690
        %v1011 = vunpack.c.l.b16 %v691
        %v1012 = vunpack.c.l.b16 %v692
        %v1013 = vunpack.c.l.b16 %v693
        %v1014 = vunpack.c.l.b16 %v694
        %v1015 = vunpack.c.l.b16 %v695
        %v1016 = vunpack.c.l.b16 %v696
        %v1017 = vunpack.c.l.b16 %v697
        %v1018 = vunpack.c.l.b16 %v698
        %v1019 = vunpack.c.l.b16 %v699
        %v1020 = vunpack.c.l.b16 %v700
        %v1021 = vunpack.c.l.b16 %v701
        %v1022 = vunpack.c.l.b16 %v702
        %v1023 = vunpack.c.l.b16 %v703
        %v1024 = vunpack.c.l.b16 %v704
        %v1025 = vunpack.c.l.b16 %v705
        %v1026 = vunpack.c.l.b16 %v706
        %v1027 = vunpack.c.l.b16 %v707
        %v1028 = vunpack.c.l.b16 %v708
        %v1029 = vunpack.c.l.b16 %v709
        %v1030 = vunpack.c.l.b16 %v710
        %v1031 = vunpack.c.l.b16 %v711
        %v1032 = vunpack.c.l.b16 %v712
        %v1033 = vunpack.c.l.b16 %v713
        %v1034 = vunpack.c.l.b16 %v714
        %v1035 = vunpack.c.l.b16 %v715
        %v1036 = vunpack.c.l.b16 %v716
        %v1037 = vunpack.c.l.b16 %v717
        %v1038 = vunpack.c.l.b16 %v718
        %v1039 = vunpack.c.l.b16 %v719
        %v1040 = vunpack.c.l.b16 %v720
        %v1041 = vunpack.c.l.b16 %v721
        %v1042 = vunpack.c.l.b16 %v722
        %v1043 = vunpack.c.l.b16 %v723
        %v1044 = vunpack.c.l.b16 %v724
        %v1045 = vunpack.c.l.b16 %v725
        %v1046 = vunpack.c.l.b16 %v726
        %v1047 = vunpack.c.l.b16 %v727
        %v1048 = vunpack.c.l.b16 %v728
        %v1049 = vunpack.c.l.b16 %v729
        %v1050 = vunpack.c.l.b16 %v730
        %v1051 = vunpack.c.l.b16 %v731
        %v1052 = vunpack.c.l.b16 %v732
        %v1053 = vunpack.c.l.b16 %v733
        %v1054 = vunpack.c.l.b16 %v734
        %v1055 = vunpack.c.l.b16 %v735
        %v1056 = vunpack.c.l.b16 %v736
        %v1057 = vunpack.c.l.b16 %v737
        %v1058 = vunpack.c.l.b16 %v738
        %v1059 = vunpack.c.l.b16 %v739
        %v1060 = vunpack.c.l.b16 %v740
        %v1061 = vunpack.c.l.b16 %v741
        %v1062 = vunpack.c.l.b16 %v742
        %v1063 = vunpack.c.l.b16 %v743
        %v1064 = vunpack.c.l.b16 %v744
        %v1065 = vunpack.c.l.b16 %v745
        %v1066 = vunpack.c.l.b16 %v746
        %v1067 = vunpack.c.l.b16 %v747
        %v1068 = vunpack.c.l.b16 %v748
        %v1069 = vpack.c.b16 %v910, %v909
        %v1070 = vpack.c.b16 %v912, %v911
        %v1071 = vpack.c.b16 %v914, %v913
        %v1072 = vpack.c.b16 %v916, %v915
        %v1073 = vpack.c.b16 %v918, %v917
        %v1074 = vpack.c.b16 %v920, %v919
        %v1075 = vpack.c.b16 %v922, %v921
        %v1076 = vpack.c.b16 %v924, %v923
        %v1077 = vpack.c.b16 %v926, %v925
        %v1078 = vpack.c.b16 %v928, %v927
        %v1079 = vpack.c.b16 %v930, %v929
        %v1080 = vpack.c.b16 %v932, %v931
        %v1081 = vpack.c.b16 %v934, %v933
        %v1082 = vpack.c.b16 %v936, %v935
        %v1083 = vpack.c.b16 %v938, %v937
        %v1084 = vpack.c.b16 %v940, %v939
        %v1085 = vpack.c.b16 %v942, %v941
        %v1086 = vpack.c.b16 %v944, %v943
        %v1087 = vpack.c.b16 %v946, %v945
        %v1088 = vpack.c.b16 %v948, %v947
        %v1089 = vpack.c.b16 %v950, %v949
        %v1090 = vpack.c.b16 %v952, %v951
        %v1091 = vpack.c.b16 %v954, %v953
        %v1092 = vpack.c.b16 %v956, %v955
        %v1093 = vpack.c.b16 %v958, %v957
        %v1094 = vpack.c.b16 %v960, %v959
        %v1095 = vpack.c.b16 %v962, %v961
        %v1096 = vpack.c.b16 %v964, %v963
        %v1097 = vpack.c.b16 %v966, %v965
        %v1098 = vpack.c.b16 %v968, %v967
        %v1099 = vpack.c.b16 %v970, %v969
        %v1100 = vpack.c.b16 %v972, %v971
        %v1101 = vpack.c.b16 %v974, %v973
        %v1102 = vpack.c.b16 %v976, %v975
        %v1103 = vpack.c.b16 %v978, %v977
        %v1104 = vpack.c.b16 %v980, %v979
        %v1105 = vpack.c.b16 %v982, %v981
        %v1106 = vpack.c.b16 %v984, %v983
        %v1107 = vpack.c.b16 %v986, %v985
        %v1108 = vpack.c.b16 %v988, %v987
        %v1109 = vpack.c.b16 %v990, %v989
        %v1110 = vpack.c.b16 %v992, %v991
        %v1111 = vpack.c.b16 %v994, %v993
        %v1112 = vpack.c.b16 %v996, %v995
        %v1113 = vpack.c.b16 %v998, %v997
        %v1114 = vpack.c.b16 %v1000, %v999
        %v1115 = vpack.c.b16 %v1002, %v1001
        %v1116 = vpack.c.b16 %v1004, %v1003
        %v1117 = vpack.c.b16 %v1006, %v1005
        %v1118 = vpack.c.b16 %v1008, %v1007
        %v1119 = vpack.c.b16 %v1010, %v1009
        %v1120 = vpack.c.b16 %v1012, %v1011
        %v1121 = vpack.c.b16 %v1014, %v1013
        %v1122 = vpack.c.b16 %v1016, %v1015
        %v1123 = vpack.c.b16 %v1018, %v1017
        %v1124 = vpack.c.b16 %v1020, %v1019
        %v1125 = vpack.c.b16 %v1022, %v1021
        %v1126 = vpack.c.b16 %v1024, %v1023
        %v1127 = vpack.c.b16 %v1026, %v1025
        %v1128 = vpack.c.b16 %v1028, %v1027
        %v1129 = vpack.c.b16 %v1030, %v1029
        %v1130 = vpack.c.b16 %v1032, %v1031
        %v1131 = vpack.c.b16 %v1034, %v1033
        %v1132 = vpack.c.b16 %v1036, %v1035
        %v1133 = vpack.c.b16 %v1038, %v1037
        %v1134 = vpack.c.b16 %v1040, %v1039
        %v1135 = vpack.c.b16 %v1042, %v1041
        %v1136 = vpack.c.b16 %v1044, %v1043
        %v1137 = vpack.c.b16 %v1046, %v1045
        %v1138 = vpack.c.b16 %v1048, %v1047
        %v1139 = vpack.c.b16 %v1050, %v1049
        %v1140 = vpack.c.b16 %v1052, %v1051
        %v1141 = vpack.c.b16 %v1054, %v1053
        %v1142 = vpack.c.b16 %v1056, %v1055
        %v1143 = vpack.c.b16 %v1058, %v1057
        %v1144 = vpack.c.b16 %v1060, %v1059
        %v1145 = vpack.c.b16 %v1062, %v1061
        %v1146 = vpack.c.b16 %v1064, %v1063
        %v1147 = vpack.c.b16 %v1066, %v1065
        %v1148 = vpack.c.b16 %v1068, %v1067
        %1229 = vmatprep.subr.bf16.mxu0 0
        %1230 = vmatpush1.bf16.msra.mxu0 %v1069
        %1231 = vmatprep.subr.bf16.mxu0 0
        %1232 = vmatpush1.bf16.msra.mxu0 %v1070
        %1233 = vmatprep.subr.bf16.mxu0 0
        %1234 = vmatpush1.bf16.msra.mxu0 %v1071
        %1235 = vmatprep.subr.bf16.mxu0 0
        %1236 = vmatpush1.bf16.msra.mxu0 %v1072
        %1237 = vmatprep.subr.bf16.mxu0 0
        %1238 = vmatpush1.bf16.msra.mxu0 %v1073
        %1239 = vmatprep.subr.bf16.mxu0 0
        %1240 = vmatpush1.bf16.msra.mxu0 %v1074
        %1241 = vmatprep.subr.bf16.mxu0 0
        %1242 = vmatpush1.bf16.msra.mxu0 %v1075
        %1243 = vmatprep.subr.bf16.mxu0 0
        %1244 = vmatpush1.bf16.msra.mxu0 %v1076
        %1245 = vmatprep.subr.bf16.mxu0 0
        %1246 = vmatpush1.bf16.msra.mxu0 %v1077
        %1247 = vmatprep.subr.bf16.mxu0 0
        %1248 = vmatpush1.bf16.msra.mxu0 %v1078
        %1249 = vmatprep.subr.bf16.mxu0 0
        %1250 = vmatpush1.bf16.msra.mxu0 %v1079
        %1251 = vmatprep.subr.bf16.mxu0 0
        %1252 = vmatpush1.bf16.msra.mxu0 %v1080
        %1253 = vmatprep.subr.bf16.mxu0 0
        %1254 = vmatpush1.bf16.msra.mxu0 %v1081
        %1255 = vmatprep.subr.bf16.mxu0 0
        %1256 = vmatpush1.bf16.msra.mxu0 %v1082
        %1257 = vmatprep.subr.bf16.mxu0 0
        %1258 = vmatpush1.bf16.msra.mxu0 %v1083
        %1259 = vmatprep.subr.bf16.mxu0 0
        %1260 = vmatpush1.bf16.msra.mxu0 %v1084
        %1261 = vmatprep.mubr.bf16.mxu0 %v580
        %1262 = vmatmul.mubr.bf16.gmra.mrb[0].mxu0 %v579
        %v1263 = vpop.f32.mrb[0].mxu0
        %v1264 = vadd.f32 0.0, %v1263
        %v1265 = vpop.f32.mrb[0].mxu0
        %v1266 = vpop.f32.mrb[0].mxu0
        %v1267 = vpop.f32.mrb[0].mxu0
        %1268 = vdwg.mxu0
        %1269 = vmatprep.subr.bf16.mxu0 0
        %1270 = vmatpush1.bf16.msra.mxu0 %v1085
        %1271 = vmatprep.subr.bf16.mxu0 0
        %1272 = vmatpush1.bf16.msra.mxu0 %v1086
        %1273 = vmatprep.subr.bf16.mxu0 0
        %1274 = vmatpush1.bf16.msra.mxu0 %v1087
        %1275 = vmatprep.subr.bf16.mxu0 0
        %1276 = vmatpush1.bf16.msra.mxu0 %v1088
        %1277 = vmatprep.subr.bf16.mxu0 0
        %1278 = vmatpush1.bf16.msra.mxu0 %v1089
        %1279 = vmatprep.subr.bf16.mxu0 0
        %1280 = vmatpush1.bf16.msra.mxu0 %v1090
        %1281 = vmatprep.subr.bf16.mxu0 0
        %1282 = vmatpush1.bf16.msra.mxu0 %v1091
        %1283 = vmatprep.subr.bf16.mxu0 0
        %1284 = vmatpush1.bf16.msra.mxu0 %v1092
        %1285 = vmatprep.subr.bf16.mxu0 0
        %1286 = vmatpush1.bf16.msra.mxu0 %v1093
        %1287 = vmatprep.subr.bf16.mxu0 0
        %1288 = vmatpush1.bf16.msra.mxu0 %v1094
        %1289 = vmatprep.subr.bf16.mxu0 0
        %1290 = vmatpush1.bf16.msra.mxu0 %v1095
        %1291 = vmatprep.subr.bf16.mxu0 0
        %1292 = vmatpush1.bf16.msra.mxu0 %v1096
        %1293 = vmatprep.subr.bf16.mxu0 0
        %1294 = vmatpush1.bf16.msra.mxu0 %v1097
        %1295 = vmatprep.subr.bf16.mxu0 0
        %1296 = vmatpush1.bf16.msra.mxu0 %v1098
        %1297 = vmatprep.subr.bf16.mxu0 0
        %1298 = vmatpush1.bf16.msra.mxu0 %v1099
        %1299 = vmatprep.subr.bf16.mxu0 0
        %1300 = vmatpush1.bf16.msra.mxu0 %v1100
        %1301 = vmatprep.mubr.bf16.mxu0 %v582
        %1302 = vmatmul.mubr.bf16.gmra.mrb[0].mxu0 %v581
        %v1303 = vpop.f32.mrb[0].mxu0
        %v1304 = vadd.f32 %v1264, %v1303
        %v1305 = vpop.f32.mrb[0].mxu0
        %v1306 = vpop.f32.mrb[0].mxu0
        %v1307 = vpop.f32.mrb[0].mxu0
        %1308 = vdwg.mxu0
        %1309 = vmatprep.subr.bf16.mxu0 0
        %1310 = vmatpush1.bf16.msra.mxu0 %v1101
        %1311 = vmatprep.subr.bf16.mxu0 0
        %1312 = vmatpush1.bf16.msra.mxu0 %v1102
        %1313 = vmatprep.subr.bf16.mxu0 0
        %1314 = vmatpush1.bf16.msra.mxu0 %v1103
        %1315 = vmatprep.subr.bf16.mxu0 0
        %1316 = vmatpush1.bf16.msra.mxu0 %v1104
        %1317 = vmatprep.subr.bf16.mxu0 0
        %1318 = vmatpush1.bf16.msra.mxu0 %v1105
        %1319 = vmatprep.subr.bf16.mxu0 0
        %1320 = vmatpush1.bf16.msra.mxu0 %v1106
        %1321 = vmatprep.subr.bf16.mxu0 0
        %1322 = vmatpush1.bf16.msra.mxu0 %v1107
        %1323 = vmatprep.subr.bf16.mxu0 0
        %1324 = vmatpush1.bf16.msra.mxu0 %v1108
        %1325 = vmatprep.subr.bf16.mxu0 0
        %1326 = vmatpush1.bf16.msra.mxu0 %v1109
        %1327 = vmatprep.subr.bf16.mxu0 0
        %1328 = vmatpush1.bf16.msra.mxu0 %v1110
        %1329 = vmatprep.subr.bf16.mxu0 0
        %1330 = vmatpush1.bf16.msra.mxu0 %v1111
        %1331 = vmatprep.subr.bf16.mxu0 0
        %1332 = vmatpush1.bf16.msra.mxu0 %v1112
        %1333 = vmatprep.subr.bf16.mxu0 0
        %1334 = vmatpush1.bf16.msra.mxu0 %v1113
        %1335 = vmatprep.subr.bf16.mxu0 0
        %1336 = vmatpush1.bf16.msra.mxu0 %v1114
        %1337 = vmatprep.subr.bf16.mxu0 0
        %1338 = vmatpush1.bf16.msra.mxu0 %v1115
        %1339 = vmatprep.subr.bf16.mxu0 0
        %1340 = vmatpush1.bf16.msra.mxu0 %v1116
        %1341 = vmatprep.mubr.bf16.mxu0 %v584
        %1342 = vmatmul.mubr.bf16.gmra.mrb[0].mxu0 %v583
        %v1343 = vpop.f32.mrb[0].mxu0
        %v1344 = vadd.f32 %v1304, %v1343
        %v1345 = vpop.f32.mrb[0].mxu0
        %v1346 = vpop.f32.mrb[0].mxu0
        %v1347 = vpop.f32.mrb[0].mxu0
        %1348 = vdwg.mxu0
        %1349 = vmatprep.subr.bf16.mxu0 0
        %1350 = vmatpush1.bf16.msra.mxu0 %v1117
        %1351 = vmatprep.subr.bf16.mxu0 0
        %1352 = vmatpush1.bf16.msra.mxu0 %v1118
        %1353 = vmatprep.subr.bf16.mxu0 0
        %1354 = vmatpush1.bf16.msra.mxu0 %v1119
        %1355 = vmatprep.subr.bf16.mxu0 0
        %1356 = vmatpush1.bf16.msra.mxu0 %v1120
        %1357 = vmatprep.subr.bf16.mxu0 0
        %1358 = vmatpush1.bf16.msra.mxu0 %v1121
        %1359 = vmatprep.subr.bf16.mxu0 0
        %1360 = vmatpush1.bf16.msra.mxu0 %v1122
        %1361 = vmatprep.subr.bf16.mxu0 0
        %1362 = vmatpush1.bf16.msra.mxu0 %v1123
        %1363 = vmatprep.subr.bf16.mxu0 0
        %1364 = vmatpush1.bf16.msra.mxu0 %v1124
        %1365 = vmatprep.subr.bf16.mxu0 0
        %1366 = vmatpush1.bf16.msra.mxu0 %v1125
        %1367 = vmatprep.subr.bf16.mxu0 0
        %1368 = vmatpush1.bf16.msra.mxu0 %v1126
        %1369 = vmatprep.subr.bf16.mxu0 0
        %1370 = vmatpush1.bf16.msra.mxu0 %v1127
        %1371 = vmatprep.subr.bf16.mxu0 0
        %1372 = vmatpush1.bf16.msra.mxu0 %v1128
        %1373 = vmatprep.subr.bf16.mxu0 0
        %1374 = vmatpush1.bf16.msra.mxu0 %v1129
        %1375 = vmatprep.subr.bf16.mxu0 0
        %1376 = vmatpush1.bf16.msra.mxu0 %v1130
        %1377 = vmatprep.subr.bf16.mxu0 0
        %1378 = vmatpush1.bf16.msra.mxu0 %v1131
        %1379 = vmatprep.subr.bf16.mxu0 0
        %1380 = vmatpush1.bf16.msra.mxu0 %v1132
        %1381 = vmatprep.mubr.bf16.mxu0 %v586
        %1382 = vmatmul.mubr.bf16.gmra.mrb[0].mxu0 %v585
        %v1383 = vpop.f32.mrb[0].mxu0
        %v1384 = vadd.f32 %v1344, %v1383
        %v1385 = vpop.f32.mrb[0].mxu0
        %v1386 = vpop.f32.mrb[0].mxu0
        %v1387 = vpop.f32.mrb[0].mxu0
        %1388 = vdwg.mxu0
        %1389 = vmatprep.subr.bf16.mxu0 0
        %1390 = vmatpush1.bf16.msra.mxu0 %v1133
        %1391 = vmatprep.subr.bf16.mxu0 0
        %1392 = vmatpush1.bf16.msra.mxu0 %v1134
        %1393 = vmatprep.subr.bf16.mxu0 0
        %1394 = vmatpush1.bf16.msra.mxu0 %v1135
        %1395 = vmatprep.subr.bf16.mxu0 0
        %1396 = vmatpush1.bf16.msra.mxu0 %v1136
        %1397 = vmatprep.subr.bf16.mxu0 0
        %1398 = vmatpush1.bf16.msra.mxu0 %v1137
        %1399 = vmatprep.subr.bf16.mxu0 0
        %1400 = vmatpush1.bf16.msra.mxu0 %v1138
        %1401 = vmatprep.subr.bf16.mxu0 0
        %1402 = vmatpush1.bf16.msra.mxu0 %v1139
        %1403 = vmatprep.subr.bf16.mxu0 0
        %1404 = vmatpush1.bf16.msra.mxu0 %v1140
        %1405 = vmatprep.subr.bf16.mxu0 0
        %1406 = vmatpush1.bf16.msra.mxu0 %v1141
        %1407 = vmatprep.subr.bf16.mxu0 0
        %1408 = vmatpush1.bf16.msra.mxu0 %v1142
        %1409 = vmatprep.subr.bf16.mxu0 0
        %1410 = vmatpush1.bf16.msra.mxu0 %v1143
        %1411 = vmatprep.subr.bf16.mxu0 0
        %1412 = vmatpush1.bf16.msra.mxu0 %v1144
        %1413 = vmatprep.subr.bf16.mxu0 0
        %1414 = vmatpush1.bf16.msra.mxu0 %v1145
        %1415 = vmatprep.subr.bf16.mxu0 0
        %1416 = vmatpush1.bf16.msra.mxu0 %v1146
        %1417 = vmatprep.subr.bf16.mxu0 0
        %1418 = vmatpush1.bf16.msra.mxu0 %v1147
        %1419 = vmatprep.subr.bf16.mxu0 0
        %1420 = vmatpush1.bf16.msra.mxu0 %v1148
        %1421 = vmatprep.mubr.bf16.mxu0 %v588
        %1422 = vmatmul.mubr.bf16.gmra.mrb[0].mxu0 %v587
        %v1423 = vpop.f32.mrb[0].mxu0
        %v1424 = vadd.f32 %v1384, %v1423
        %v1425 = vpop.f32.mrb[0].mxu0
        %v1426 = vpop.f32.mrb[0].mxu0
        %v1427 = vpop.f32.mrb[0].mxu0
        %1428 = vdwg.mxu0
        %v1430 = vrot.slane %v1424, 7
        %v1432 = vrot.slane %v1424, 6
        %1433 = vrot.lane.b32.xlu0 %v1432, 96
        %v1434 = vpop.permute.xlu0 %1433
        %v1436 = vrot.slane %v1424, 5
        %1437 = vrot.lane.b32.xlu0 %v1436, 64
        %v1438 = vpop.permute.xlu0 %1437
        %v1440 = vrot.slane %v1424, 4
        %1441 = vrot.lane.b32.xlu0 %v1440, 32
        %v1442 = vpop.permute.xlu0 %1441
        %1444 = vrot.lane.b32.xlu0 %v1430, 96
        %v1445 = vpop.permute.xlu0 %1444
        %1447 = vrot.lane.b32.xlu0 %v1432, 64
        %v1448 = vpop.permute.xlu0 %1447
        %1450 = vrot.lane.b32.xlu0 %v1436, 32
        %v1451 = vpop.permute.xlu0 %1450
        %vm1453 = vcmask 1040384
        %v1454 = vsel %vm1453, 0.0, %v1430
        %vm1455 = vcmask 1041408
        %v1456 = vsel %vm1455, %v1454, %v1434
        %vm1457 = vcmask 1042432
        %v1458 = vsel %vm1457, %v1456, %v1438
        %vm1459 = vcmask 1043456
        %v1460 = vsel %vm1459, %v1458, %v1442
        %vm1461 = vcmask 1044480
        %v1462 = vsel %vm1461, %v1460, 0.0
        %v1463 = vsel %vm1453, 0.0, %v1424
        %v1464 = vsel %vm1455, %v1463, %v1445
        %v1465 = vsel %vm1457, %v1464, %v1448
        %v1466 = vsel %vm1459, %v1465, %v1451
        %v1467 = vsel %vm1461, %v1466, 0.0
        %v1468 = vld [vmem:[%s2] sm:$0xff]
        %v1469 = vld [vmem:[%s2 + $0x8] sm:$0xff]
        %v1470 = vadd.f32 %v1462, %v1468
        %v1471 = vadd.f32 %v1467, %v1469
        %v1472 = vld [vmem:[%s4] sm:$0x1]
        %v1473 = vld [vmem:[%s4 + $0x1] sm:$0x1]
        %vm1474 = vcmask 261120
        %v1475 = vsel %vm1474, %v1470, 0.0
        %1476 = vadd.xlane.f32.xlu0 %v1475
        %v1477 = vpop.xlane.xlu0 %1476
        %v1478 = vsel %vm1474, %v1471, 0.0
        %1479 = vadd.xlane.f32.xlu0 %v1478
        %v1480 = vpop.xlane.xlu0 %1479
        %v1481 = vrcp.pop 32.0
        %v1482 = vmul.f32 %v1477, %v1481
        %v1483 = vmul.f32 %v1480, %v1481
        %v1484 = vsub.f32 %v1470, %v1482
        %v1485 = vsub.f32 %v1471, %v1483
        %v1486 = vmul.f32 %v1484, %v1484
        %v1487 = vmul.f32 %v1485, %v1485
        %v1488 = vsel %vm1474, %v1486, 0.0
        %1489 = vadd.xlane.f32.xlu0 %v1488
        %v1490 = vpop.xlane.xlu0 %1489
        %v1491 = vsel %vm1474, %v1487, 0.0
        %1492 = vadd.xlane.f32.xlu0 %v1491
        %v1493 = vpop.xlane.xlu0 %1492
        %v1494 = vmul.f32 %v1490, %v1481
        %v1495 = vmul.f32 %v1493, %v1481
        %v1496 = vadd.f32 %v1494, 1e-05
        %v1497 = vadd.f32 %v1495, 1e-05
        %v1498 = vrsqrt.pop %v1496
        %v1499 = vrsqrt.pop %v1497
        %v1500 = vmul.f32 %v1484, %v1498
        %v1501 = vmul.f32 %v1485, %v1499
        %v1502 = vlaneseq
        %v1503 = vshrl.u32 %v1502, 7
        %v1504 = vsub.s32 0, %v1503
        %v1505 = vrot.slane %v1472, %v1504
        %v1506 = vmul.f32 %v1500, %v1505
        %v1507 = vmul.f32 %v1501, %v1505
        %v1508 = vlaneseq
        %v1509 = vshrl.u32 %v1508, 7
        %v1510 = vsub.s32 0, %v1509
        %v1511 = vrot.slane %v1473, %v1510
        %v1512 = vadd.f32 %v1506, %v1511
        %v1513 = vadd.f32 %v1507, %v1511
        %v1514 = vld [vmem:[%s3] sm:$0xff]
        %v1515 = vld [vmem:[%s3 + $0x8] sm:$0xff]
        %v1516 = vld [vmem:[%s5] sm:$0xf]
        %v1517 = vsel %vm1474, %v1512, 0.0
        %1518 = vadd.xlane.f32.xlu0 %v1517
        %v1519 = vpop.xlane.xlu0 %1518
        %v1520 = vsel %vm1474, %v1513, 0.0
        %1521 = vadd.xlane.f32.xlu0 %v1520
        %v1522 = vpop.xlane.xlu0 %1521
        %v1523 = vmul.f32 %v1519, %v1481
        %v1524 = vmul.f32 %v1522, %v1481
        %v1525 = vsub.f32 %v1512, %v1523
        %v1526 = vsub.f32 %v1513, %v1524
        %v1527 = vmul.f32 %v1525, %v1525
        %v1528 = vmul.f32 %v1526, %v1526
        %v1529 = vsel %vm1474, %v1527, 0.0
        %1530 = vadd.xlane.f32.xlu0 %v1529
        %v1531 = vpop.xlane.xlu0 %1530
        %v1532 = vsel %vm1474, %v1528, 0.0
        %1533 = vadd.xlane.f32.xlu0 %v1532
        %v1534 = vpop.xlane.xlu0 %1533
        %v1535 = vmul.f32 %v1531, %v1481
        %v1536 = vmul.f32 %v1534, %v1481
        %v1537 = vadd.f32 %v1535, 1e-05
        %v1538 = vadd.f32 %v1536, 1e-05
        %v1539 = vrsqrt.pop %v1537
        %v1540 = vrsqrt.pop %v1538
        %v1541 = vmul.f32 %v1525, %v1539
        %v1542 = vmul.f32 %v1526, %v1540
        %v1543 = vlaneseq
        %v1544 = vshrl.u32 %v1543, 7
        %v1545 = vsub.s32 0, %v1544
        %v1546 = vrot.slane %v1516, %v1545
        %v1547 = vmul.f32 %v1541, %v1546
        %v1548 = vmul.f32 %v1542, %v1546
        %v1549 = vlaneseq
        %v1550 = vshrl.u32 %v1549, 7
        %v1551 = vsub.s32 1, %v1550
        %v1552 = vrot.slane %v1516, %v1551
        %v1553 = vadd.f32 %v1547, %v1552
        %v1554 = vadd.f32 %v1548, %v1552
        %v1555 = vpack.c.bf16 %v1554, %v1553
        %v1556 = vld [vmem:[%s6] sm:$0xf]
        %v1557 = vld [vmem:[%s6 + $0x4] sm:$0xf]
        %v1558 = vld [vmem:[%s6 + $0x8] sm:$0xf]
        %v1559 = vld [vmem:[%s6 + $0xc] sm:$0xf]
        %v1560 = vld [vmem:[%s7] sm:$0x1]
        %v1562 = vlaneseq
        %v1563 = vshrl.u32 %v1562, 7
        %v1564 = vsub.s32 0, %v1563
        %v1565 = vrot.slane %v1560, %v1564
        %v1571 = vunpack.c.l.b16 %v1556
        %v1572 = vunpack.c.l.b16 %v1557
        %v1573 = vunpack.c.l.b16 %v1558
        %v1574 = vunpack.c.l.b16 %v1559
        %v1575 = vpack.c.b16 %v1572, %v1571
        %v1576 = vpack.c.b16 %v1574, %v1573
        %v1580 = vsel %vm1474, %v1555, 0
        %1582 = vmatprep.subr.bf16.mxu0 0
        %1583 = vmatpush1.bf16.msra.mxu0 %v1575
        %1584 = vmatprep.subr.bf16.mxu0 0
        %1585 = vmatpush1.bf16.msra.mxu0 %v1576
        %1586 = vmatprep.subr.bf16.mxu0 0
        %1587 = vmatpush1.bf16.msra.mxu0 0
        %1588 = vmatprep.subr.bf16.mxu0 0
        %1589 = vmatpush1.bf16.msra.mxu0 0
        %1590 = vmatprep.subr.bf16.mxu0 0
        %1591 = vmatpush1.bf16.msra.mxu0 0
        %1592 = vmatprep.subr.bf16.mxu0 0
        %1593 = vmatpush1.bf16.msra.mxu0 0
        %1594 = vmatprep.subr.bf16.mxu0 0
        %1595 = vmatpush1.bf16.msra.mxu0 0
        %1596 = vmatprep.subr.bf16.mxu0 0
        %1597 = vmatpush1.bf16.msra.mxu0 0
        %1598 = vmatprep.subr.bf16.mxu0 0
        %1599 = vmatpush1.bf16.msra.mxu0 0
        %1600 = vmatprep.subr.bf16.mxu0 0
        %1601 = vmatpush1.bf16.msra.mxu0 0
        %1602 = vmatprep.subr.bf16.mxu0 0
        %1603 = vmatpush1.bf16.msra.mxu0 0
        %1604 = vmatprep.subr.bf16.mxu0 0
        %1605 = vmatpush1.bf16.msra.mxu0 0
        %1606 = vmatprep.subr.bf16.mxu0 0
        %1607 = vmatpush1.bf16.msra.mxu0 0
        %1608 = vmatprep.subr.bf16.mxu0 0
        %1609 = vmatpush1.bf16.msra.mxu0 0
        %1610 = vmatprep.subr.bf16.mxu0 0
        %1611 = vmatpush1.bf16.msra.mxu0 0
        %1612 = vmatprep.subr.bf16.mxu0 0
        %1613 = vmatpush1.bf16.msra.mxu0 0
        %1614 = vmatprep.mubr.bf16.mxu0 0
        %1615 = vmatmul.mubr.bf16.gmra.mrb[0].mxu0 %v1580
        %v1616 = vpop.f32.mrb[0].mxu0
        %v1617 = vadd.f32 %v1565, %v1616
        %v1618 = vpop.f32.mrb[0].mxu0
        %v1619 = vpop.f32.mrb[0].mxu0
        %v1620 = vadd.f32 %v1565, %v1619
        %v1621 = vpop.f32.mrb[0].mxu0
        %1622 = vdwg.mxu0
        %v1623 = vmul.f32 %v1617, 0.35355338
        %v1624 = vmul.f32 %v1620, 0.35355338
        %1627 = vrot.lane.b32.xlu0 %v1617, 96
        %v1628 = vpop.permute.xlu0 %1627
        %1629 = vrot.lane.b32.xlu0 %v1620, 96
        %v1630 = vpop.permute.xlu0 %1629
        %vm1631 = vcmask 64512
        %v1633 = vsel %vm1631, %v1623, 0
        %v1636 = vsel %vm1631, %v1624, 0
        %v1638 = vsel %vm1631, %v1628, 0
        %v1640 = vsel %vm1631, %v1630, 0
        %1642 = vmatprep.subr.mxu0 0.0
        %1643 = vmatpush1.xpose.msra.mxu0 %v1638
        %1644 = vmatprep.subr.mxu0 0.0
        %1645 = vmatpush1.xpose.msra.mxu0 %v1640
        %1646 = vmatprep.subr.mxu0 0.0
        %1647 = vmatpush1.xpose.msra.mxu0 0.0
        %1648 = vmatprep.subr.mxu0 0.0
        %1649 = vmatpush1.xpose.msra.mxu0 0.0
        %1650 = vmatprep.subr.mxu0 0.0
        %1651 = vmatpush1.xpose.msra.mxu0 0.0
        %1652 = vmatprep.subr.mxu0 0.0
        %1653 = vmatpush1.xpose.msra.mxu0 0.0
        %1654 = vmatprep.subr.mxu0 0.0
        %1655 = vmatpush1.xpose.msra.mxu0 0.0
        %1656 = vmatprep.subr.mxu0 0.0
        %1657 = vmatpush1.xpose.msra.mxu0 0.0
        %1658 = vmatprep.subr.mxu0 0.0
        %1659 = vmatpush1.xpose.msra.mxu0 0.0
        %1660 = vmatprep.subr.mxu0 0.0
        %1661 = vmatpush1.xpose.msra.mxu0 0.0
        %1662 = vmatprep.subr.mxu0 0.0
        %1663 = vmatpush1.xpose.msra.mxu0 0.0
        %1664 = vmatprep.subr.mxu0 0.0
        %1665 = vmatpush1.xpose.msra.mxu0 0.0
        %1666 = vmatprep.subr.mxu0 0.0
        %1667 = vmatpush1.xpose.msra.mxu0 0.0
        %1668 = vmatprep.subr.mxu0 0.0
        %1669 = vmatpush1.xpose.msra.mxu0 0.0
        %1670 = vmatprep.subr.mxu0 0.0
        %1671 = vmatpush1.xpose.msra.mxu0 0.0
        %1672 = vmatprep.subr.mxu0 0.0
        %1673 = vmatpush1.xpose.msra.mxu0 0.0
        %1674 = vmatprep.subr.mxu0 0.0
        %1675 = vmatpush1.xpose.msra.mxu0 0.0
        %1676 = vmatprep.subr.mxu0 0.0
        %1677 = vmatpush1.xpose.msra.mxu0 0.0
        %1678 = vmatprep.subr.mxu0 0.0
        %1679 = vmatpush1.xpose.msra.mxu0 0.0
        %1680 = vmatprep.subr.mxu0 0.0
        %1681 = vmatpush1.xpose.msra.mxu0 0.0
        %1682 = vmatprep.subr.mxu0 0.0
        %1683 = vmatpush1.xpose.msra.mxu0 0.0
        %1684 = vmatprep.subr.mxu0 0.0
        %1685 = vmatpush1.xpose.msra.mxu0 0.0
        %1686 = vmatprep.subr.mxu0 0.0
        %1687 = vmatpush1.xpose.msra.mxu0 0.0
        %1688 = vmatprep.subr.mxu0 0.0
        %1689 = vmatpush1.xpose.msra.mxu0 0.0
        %1690 = vmatprep.subr.mxu0 0.0
        %1691 = vmatpush1.xpose.msra.mxu0 0.0
        %1692 = vmatprep.subr.mxu0 0.0
        %1693 = vmatpush1.xpose.msra.mxu0 0.0
        %1694 = vmatprep.subr.mxu0 0.0
        %1695 = vmatpush1.xpose.msra.mxu0 0.0
        %1696 = vmatprep.subr.mxu0 0.0
        %1697 = vmatpush1.xpose.msra.mxu0 0.0
        %1698 = vmatprep.subr.mxu0 0.0
        %1699 = vmatpush1.xpose.msra.mxu0 0.0
        %1700 = vmatprep.subr.mxu0 0.0
        %1701 = vmatpush1.xpose.msra.mxu0 0.0
        %1702 = vmatprep.subr.mxu0 0.0
        %1703 = vmatpush1.xpose.msra.mxu0 0.0
        %1704 = vmatprep.subr.mxu0 0.0
        %1705 = vmatpush1.xpose.msra.mxu0 0.0
        %1706 = vmatprep.mubr.f32.mxu0 0.0
        %1707 = vmatmul.mubr.f32.gmra.mrb[0].mxu0 %v1633
        %v1708 = vpop.f32.mrb[0].mxu0
        %v1709 = vadd.f32 %v1514, %v1708
        %v1710 = vpop.f32.mrb[0].mxu0
        %1711 = vmatprep.mubr.f32.mxu0 0.0
        %1712 = vmatmul.mubr.f32.gmra.mrb[0].mxu0 %v1636
        %v1713 = vpop.f32.mrb[0].mxu0
        %v1714 = vadd.f32 %v1515, %v1713
        %v1715 = vpop.f32.mrb[0].mxu0
        %1716 = vdwg.mxu0
        %vm1717 = vcmask 130048
        %v1718 = vsel %vm1717, %v1709, -inf
        %1719 = vmax.xlane.f32.xlu0 %v1718
        %v1720 = vpop.xlane.xlu0 %1719
        %v1721 = vsel %vm1717, %v1714, -inf
        %1722 = vmax.xlane.f32.xlu0 %v1721
        %v1723 = vpop.xlane.xlu0 %1722
        %v1724 = vsub.f32 %v1709, %v1720
        %v1725 = vsub.f32 %v1714, %v1723
        %v1726 = vmul.f32 %v1724, 1.442695
        %v1727 = vpow.pop %v1726
        %v1728 = vmul.f32 %v1725, 1.442695
        %v1729 = vpow.pop %v1728
        %v1730 = vsel %vm1717, %v1727, 0.0
        %1731 = vadd.xlane.f32.xlu0 %v1730
        %v1732 = vpop.xlane.xlu0 %1731
        %v1733 = vsel %vm1717, %v1729, 0.0
        %1734 = vadd.xlane.f32.xlu0 %v1733
        %v1735 = vpop.xlane.xlu0 %1734
        %v1736 = vrcp.pop %v1732
        %v1737 = vmul.f32 %v1727, %v1736
        %v1738 = vrcp.pop %v1735
        %v1739 = vmul.f32 %v1729, %v1738
        %1740 = vrot.lane.b32.xlu0 %v1617, 64
        %v1741 = vpop.permute.xlu0 %1740
        %1742 = vrot.lane.b32.xlu0 %v1620, 64
        %v1743 = vpop.permute.xlu0 %1742
        %v1747 = vsel %vm1717, %v1737, 0
        %v1750 = vsel %vm1717, %v1739, 0
        %1752 = vmatprep.subr.mxu0 0.0
        %1753 = vmatpush1.msra.mxu0 %v1741
        %1754 = vmatprep.subr.mxu0 0.0
        %1755 = vmatpush1.msra.mxu0 %v1743
        %1756 = vmatprep.subr.mxu0 0.0
        %1757 = vmatpush1.msra.mxu0 0.0
        %1758 = vmatprep.subr.mxu0 0.0
        %1759 = vmatpush1.msra.mxu0 0.0
        %1760 = vmatprep.subr.mxu0 0.0
        %1761 = vmatpush1.msra.mxu0 0.0
        %1762 = vmatprep.subr.mxu0 0.0
        %1763 = vmatpush1.msra.mxu0 0.0
        %1764 = vmatprep.subr.mxu0 0.0
        %1765 = vmatpush1.msra.mxu0 0.0
        %1766 = vmatprep.subr.mxu0 0.0
        %1767 = vmatpush1.msra.mxu0 0.0
        %1768 = vmatprep.subr.mxu0 0.0
        %1769 = vmatpush1.msra.mxu0 0.0
        %1770 = vmatprep.subr.mxu0 0.0
        %1771 = vmatpush1.msra.mxu0 0.0
        %1772 = vmatprep.subr.mxu0 0.0
        %1773 = vmatpush1.msra.mxu0 0.0
        %1774 = vmatprep.subr.mxu0 0.0
        %1775 = vmatpush1.msra.mxu0 0.0
        %1776 = vmatprep.subr.mxu0 0.0
        %1777 = vmatpush1.msra.mxu0 0.0
        %1778 = vmatprep.subr.mxu0 0.0
        %1779 = vmatpush1.msra.mxu0 0.0
        %1780 = vmatprep.subr.mxu0 0.0
        %1781 = vmatpush1.msra.mxu0 0.0
        %1782 = vmatprep.subr.mxu0 0.0
        %1783 = vmatpush1.msra.mxu0 0.0
        %1784 = vmatprep.subr.mxu0 0.0
        %1785 = vmatpush1.msra.mxu0 0.0
        %1786 = vmatprep.subr.mxu0 0.0
        %1787 = vmatpush1.msra.mxu0 0.0
        %1788 = vmatprep.subr.mxu0 0.0
        %1789 = vmatpush1.msra.mxu0 0.0
        %1790 = vmatprep.subr.mxu0 0.0
        %1791 = vmatpush1.msra.mxu0 0.0
        %1792 = vmatprep.subr.mxu0 0.0
        %1793 = vmatpush1.msra.mxu0 0.0
        %1794 = vmatprep.subr.mxu0 0.0
        %1795 = vmatpush1.msra.mxu0 0.0
        %1796 = vmatprep.subr.mxu0 0.0
        %1797 = vmatpush1.msra.mxu0 0.0
        %1798 = vmatprep.subr.mxu0 0.0
        %1799 = vmatpush1.msra.mxu0 0.0
        %1800 = vmatprep.subr.mxu0 0.0
        %1801 = vmatpush1.msra.mxu0 0.0
        %1802 = vmatprep.subr.mxu0 0.0
        %1803 = vmatpush1.msra.mxu0 0.0
        %1804 = vmatprep.subr.mxu0 0.0
        %1805 = vmatpush1.msra.mxu0 0.0
        %1806 = vmatprep.subr.mxu0 0.0
        %1807 = vmatpush1.msra.mxu0 0.0
        %1808 = vmatprep.subr.mxu0 0.0
        %1809 = vmatpush1.msra.mxu0 0.0
        %1810 = vmatprep.subr.mxu0 0.0
        %1811 = vmatpush1.msra.mxu0 0.0
        %1812 = vmatprep.subr.mxu0 0.0
        %1813 = vmatpush1.msra.mxu0 0.0
        %1814 = vmatprep.subr.mxu0 0.0
        %1815 = vmatpush1.msra.mxu0 0.0
        %1816 = vmatprep.mubr.f32.mxu0 0.0
        %1817 = vmatmul.mubr.f32.gmra.mrb[0].mxu0 %v1747
        %v1818 = vpop.f32.mrb[0].mxu0
        %v1819 = vadd.f32 0.0, %v1818
        %v1820 = vpop.f32.mrb[0].mxu0
        %1821 = vmatprep.mubr.f32.mxu0 0.0
        %1822 = vmatmul.mubr.f32.gmra.mrb[0].mxu0 %v1750
        %v1823 = vpop.f32.mrb[0].mxu0
        %v1824 = vadd.f32 0.0, %v1823
        %v1825 = vpop.f32.mrb[0].mxu0
        %1826 = vdwg.mxu0
        %1827 = vrot.lane.b32.xlu0 %v1623, 120
        %v1828 = vpop.permute.xlu0 %1827
        %1829 = vrot.lane.b32.xlu0 %v1624, 120
        %v1830 = vpop.permute.xlu0 %1829
        %1831 = vrot.lane.b32.xlu0 %v1617, 88
        %v1832 = vpop.permute.xlu0 %1831
        %1833 = vrot.lane.b32.xlu0 %v1620, 88
        %v1834 = vpop.permute.xlu0 %1833
        %v1835 = vsel %vm1631, %v1828, 0
        %v1837 = vsel %vm1631, %v1830, 0
        %v1839 = vsel %vm1631, %v1832, 0
        %v1841 = vsel %vm1631, %v1834, 0
        %1843 = vmatprep.subr.mxu0 0.0
        %1844 = vmatpush1.xpose.msra.mxu0 %v1839
        %1845 = vmatprep.subr.mxu0 0.0
        %1846 = vmatpush1.xpose.msra.mxu0 %v1841
        %1847 = vmatprep.subr.mxu0 0.0
        %1848 = vmatpush1.xpose.msra.mxu0 0.0
        %1849 = vmatprep.subr.mxu0 0.0
        %1850 = vmatpush1.xpose.msra.mxu0 0.0
        %1851 = vmatprep.subr.mxu0 0.0
        %1852 = vmatpush1.xpose.msra.mxu0 0.0
        %1853 = vmatprep.subr.mxu0 0.0
        %1854 = vmatpush1.xpose.msra.mxu0 0.0
        %1855 = vmatprep.subr.mxu0 0.0
        %1856 = vmatpush1.xpose.msra.mxu0 0.0
        %1857 = vmatprep.subr.mxu0 0.0
        %1858 = vmatpush1.xpose.msra.mxu0 0.0
        %1859 = vmatprep.subr.mxu0 0.0
        %1860 = vmatpush1.xpose.msra.mxu0 0.0
        %1861 = vmatprep.subr.mxu0 0.0
        %1862 = vmatpush1.xpose.msra.mxu0 0.0
        %1863 = vmatprep.subr.mxu0 0.0
        %1864 = vmatpush1.xpose.msra.mxu0 0.0
        %1865 = vmatprep.subr.mxu0 0.0
        %1866 = vmatpush1.xpose.msra.mxu0 0.0
        %1867 = vmatprep.subr.mxu0 0.0
        %1868 = vmatpush1.xpose.msra.mxu0 0.0
        %1869 = vmatprep.subr.mxu0 0.0
        %1870 = vmatpush1.xpose.msra.mxu0 0.0
        %1871 = vmatprep.subr.mxu0 0.0
        %1872 = vmatpush1.xpose.msra.mxu0 0.0
        %1873 = vmatprep.subr.mxu0 0.0
        %1874 = vmatpush1.xpose.msra.mxu0 0.0
        %1875 = vmatprep.subr.mxu0 0.0
        %1876 = vmatpush1.xpose.msra.mxu0 0.0
        %1877 = vmatprep.subr.mxu0 0.0
        %1878 = vmatpush1.xpose.msra.mxu0 0.0
        %1879 = vmatprep.subr.mxu0 0.0
        %1880 = vmatpush1.xpose.msra.mxu0 0.0
        %1881 = vmatprep.subr.mxu0 0.0
        %1882 = vmatpush1.xpose.msra.mxu0 0.0
        %1883 = vmatprep.subr.mxu0 0.0
        %1884 = vmatpush1.xpose.msra.mxu0 0.0
        %1885 = vmatprep.subr.mxu0 0.0
        %1886 = vmatpush1.xpose.msra.mxu0 0.0
        %1887 = vmatprep.subr.mxu0 0.0
        %1888 = vmatpush1.xpose.msra.mxu0 0.0
        %1889 = vmatprep.subr.mxu0 0.0
        %1890 = vmatpush1.xpose.msra.mxu0 0.0
        %1891 = vmatprep.subr.mxu0 0.0
        %1892 = vmatpush1.xpose.msra.mxu0 0.0
        %1893 = vmatprep.subr.mxu0 0.0
        %1894 = vmatpush1.xpose.msra.mxu0 0.0
        %1895 = vmatprep.subr.mxu0 0.0
        %1896 = vmatpush1.xpose.msra.mxu0 0.0
        %1897 = vmatprep.subr.mxu0 0.0
        %1898 = vmatpush1.xpose.msra.mxu0 0.0
        %1899 = vmatprep.subr.mxu0 0.0
        %1900 = vmatpush1.xpose.msra.mxu0 0.0
        %1901 = vmatprep.subr.mxu0 0.0
        %1902 = vmatpush1.xpose.msra.mxu0 0.0
        %1903 = vmatprep.subr.mxu0 0.0
        %1904 = vmatpush1.xpose.msra.mxu0 0.0
        %1905 = vmatprep.subr.mxu0 0.0
        %1906 = vmatpush1.xpose.msra.mxu0 0.0
        %1907 = vmatprep.mubr.f32.mxu0 0.0
        %1908 = vmatmul.mubr.f32.gmra.mrb[0].mxu0 %v1835
        %v1909 = vpop.f32.mrb[0].mxu0
        %v1910 = vadd.f32 %v1514, %v1909
        %v1911 = vpop.f32.mrb[0].mxu0
        %1912 = vmatprep.mubr.f32.mxu0 0.0
        %1913 = vmatmul.mubr.f32.gmra.mrb[0].mxu0 %v1837
        %v1914 = vpop.f32.mrb[0].mxu0
        %v1915 = vadd.f32 %v1515, %v1914
        %v1916 = vpop.f32.mrb[0].mxu0
        %1917 = vdwg.mxu0
        %v1918 = vsel %vm1717, %v1910, -inf
        %1919 = vmax.xlane.f32.xlu0 %v1918
        %v1920 = vpop.xlane.xlu0 %1919
        %v1921 = vsel %vm1717, %v1915, -inf
        %1922 = vmax.xlane.f32.xlu0 %v1921
        %v1923 = vpop.xlane.xlu0 %1922
        %v1924 = vsub.f32 %v1910, %v1920
        %v1925 = vsub.f32 %v1915, %v1923
        %v1926 = vmul.f32 %v1924, 1.442695
        %v1927 = vpow.pop %v1926
        %v1928 = vmul.f32 %v1925, 1.442695
        %v1929 = vpow.pop %v1928
        %v1930 = vsel %vm1717, %v1927, 0.0
        %1931 = vadd.xlane.f32.xlu0 %v1930
        %v1932 = vpop.xlane.xlu0 %1931
        %v1933 = vsel %vm1717, %v1929, 0.0
        %1934 = vadd.xlane.f32.xlu0 %v1933
        %v1935 = vpop.xlane.xlu0 %1934
        %v1936 = vrcp.pop %v1932
        %v1937 = vmul.f32 %v1927, %v1936
        %v1938 = vrcp.pop %v1935
        %v1939 = vmul.f32 %v1929, %v1938
        %1940 = vrot.lane.b32.xlu0 %v1617, 56
        %v1941 = vpop.permute.xlu0 %1940
        %1942 = vrot.lane.b32.xlu0 %v1620, 56
        %v1943 = vpop.permute.xlu0 %1942
        %v1947 = vsel %vm1717, %v1937, 0
        %v1950 = vsel %vm1717, %v1939, 0
        %1952 = vmatprep.subr.mxu0 0.0
        %1953 = vmatpush1.msra.mxu0 %v1941
        %1954 = vmatprep.subr.mxu0 0.0
        %1955 = vmatpush1.msra.mxu0 %v1943
        %1956 = vmatprep.subr.mxu0 0.0
        %1957 = vmatpush1.msra.mxu0 0.0
        %1958 = vmatprep.subr.mxu0 0.0
        %1959 = vmatpush1.msra.mxu0 0.0
        %1960 = vmatprep.subr.mxu0 0.0
        %1961 = vmatpush1.msra.mxu0 0.0
        %1962 = vmatprep.subr.mxu0 0.0
        %1963 = vmatpush1.msra.mxu0 0.0
        %1964 = vmatprep.subr.mxu0 0.0
        %1965 = vmatpush1.msra.mxu0 0.0
        %1966 = vmatprep.subr.mxu0 0.0
        %1967 = vmatpush1.msra.mxu0 0.0
        %1968 = vmatprep.subr.mxu0 0.0
        %1969 = vmatpush1.msra.mxu0 0.0
        %1970 = vmatprep.subr.mxu0 0.0
        %1971 = vmatpush1.msra.mxu0 0.0
        %1972 = vmatprep.subr.mxu0 0.0
        %1973 = vmatpush1.msra.mxu0 0.0
        %1974 = vmatprep.subr.mxu0 0.0
        %1975 = vmatpush1.msra.mxu0 0.0
        %1976 = vmatprep.subr.mxu0 0.0
        %1977 = vmatpush1.msra.mxu0 0.0
        %1978 = vmatprep.subr.mxu0 0.0
        %1979 = vmatpush1.msra.mxu0 0.0
        %1980 = vmatprep.subr.mxu0 0.0
        %1981 = vmatpush1.msra.mxu0 0.0
        %1982 = vmatprep.subr.mxu0 0.0
        %1983 = vmatpush1.msra.mxu0 0.0
        %1984 = vmatprep.subr.mxu0 0.0
        %1985 = vmatpush1.msra.mxu0 0.0
        %1986 = vmatprep.subr.mxu0 0.0
        %1987 = vmatpush1.msra.mxu0 0.0
        %1988 = vmatprep.subr.mxu0 0.0
        %1989 = vmatpush1.msra.mxu0 0.0
        %1990 = vmatprep.subr.mxu0 0.0
        %1991 = vmatpush1.msra.mxu0 0.0
        %1992 = vmatprep.subr.mxu0 0.0
        %1993 = vmatpush1.msra.mxu0 0.0
        %1994 = vmatprep.subr.mxu0 0.0
        %1995 = vmatpush1.msra.mxu0 0.0
        %1996 = vmatprep.subr.mxu0 0.0
        %1997 = vmatpush1.msra.mxu0 0.0
        %1998 = vmatprep.subr.mxu0 0.0
        %1999 = vmatpush1.msra.mxu0 0.0
        %2000 = vmatprep.subr.mxu0 0.0
        %2001 = vmatpush1.msra.mxu0 0.0
        %2002 = vmatprep.subr.mxu0 0.0
        %2003 = vmatpush1.msra.mxu0 0.0
        %2004 = vmatprep.subr.mxu0 0.0
        %2005 = vmatpush1.msra.mxu0 0.0
        %2006 = vmatprep.subr.mxu0 0.0
        %2007 = vmatpush1.msra.mxu0 0.0
        %2008 = vmatprep.subr.mxu0 0.0
        %2009 = vmatpush1.msra.mxu0 0.0
        %2010 = vmatprep.subr.mxu0 0.0
        %2011 = vmatpush1.msra.mxu0 0.0
        %2012 = vmatprep.subr.mxu0 0.0
        %2013 = vmatpush1.msra.mxu0 0.0
        %2014 = vmatprep.subr.mxu0 0.0
        %2015 = vmatpush1.msra.mxu0 0.0
        %2016 = vmatprep.mubr.f32.mxu0 0.0
        %2017 = vmatmul.mubr.f32.gmra.mrb[0].mxu0 %v1947
        %v2018 = vpop.f32.mrb[0].mxu0
        %v2019 = vadd.f32 0.0, %v2018
        %v2020 = vpop.f32.mrb[0].mxu0
        %2021 = vmatprep.mubr.f32.mxu0 0.0
        %2022 = vmatmul.mubr.f32.gmra.mrb[0].mxu0 %v1950
        %v2023 = vpop.f32.mrb[0].mxu0
        %v2024 = vadd.f32 0.0, %v2023
        %v2025 = vpop.f32.mrb[0].mxu0
        %2026 = vdwg.mxu0
        %2027 = vrot.lane.b32.xlu0 %v1623, 112
        %v2028 = vpop.permute.xlu0 %2027
        %2029 = vrot.lane.b32.xlu0 %v1624, 112
        %v2030 = vpop.permute.xlu0 %2029
        %2031 = vrot.lane.b32.xlu0 %v1617, 80
        %v2032 = vpop.permute.xlu0 %2031
        %2033 = vrot.lane.b32.xlu0 %v1620, 80
        %v2034 = vpop.permute.xlu0 %2033
        %v2035 = vsel %vm1631, %v2028, 0
        %v2037 = vsel %vm1631, %v2030, 0
        %v2039 = vsel %vm1631, %v2032, 0
        %v2041 = vsel %vm1631, %v2034, 0
        %2043 = vmatprep.subr.mxu0 0.0
        %2044 = vmatpush1.xpose.msra.mxu0 %v2039
        %2045 = vmatprep.subr.mxu0 0.0
        %2046 = vmatpush1.xpose.msra.mxu0 %v2041
        %2047 = vmatprep.subr.mxu0 0.0
        %2048 = vmatpush1.xpose.msra.mxu0 0.0
        %2049 = vmatprep.subr.mxu0 0.0
        %2050 = vmatpush1.xpose.msra.mxu0 0.0
        %2051 = vmatprep.subr.mxu0 0.0
        %2052 = vmatpush1.xpose.msra.mxu0 0.0
        %2053 = vmatprep.subr.mxu0 0.0
        %2054 = vmatpush1.xpose.msra.mxu0 0.0
        %2055 = vmatprep.subr.mxu0 0.0
        %2056 = vmatpush1.xpose.msra.mxu0 0.0
        %2057 = vmatprep.subr.mxu0 0.0
        %2058 = vmatpush1.xpose.msra.mxu0 0.0
        %2059 = vmatprep.subr.mxu0 0.0
        %2060 = vmatpush1.xpose.msra.mxu0 0.0
        %2061 = vmatprep.subr.mxu0 0.0
        %2062 = vmatpush1.xpose.msra.mxu0 0.0
        %2063 = vmatprep.subr.mxu0 0.0
        %2064 = vmatpush1.xpose.msra.mxu0 0.0
        %2065 = vmatprep.subr.mxu0 0.0
        %2066 = vmatpush1.xpose.msra.mxu0 0.0
        %2067 = vmatprep.subr.mxu0 0.0
        %2068 = vmatpush1.xpose.msra.mxu0 0.0
        %2069 = vmatprep.subr.mxu0 0.0
        %2070 = vmatpush1.xpose.msra.mxu0 0.0
        %2071 = vmatprep.subr.mxu0 0.0
        %2072 = vmatpush1.xpose.msra.mxu0 0.0
        %2073 = vmatprep.subr.mxu0 0.0
        %2074 = vmatpush1.xpose.msra.mxu0 0.0
        %2075 = vmatprep.subr.mxu0 0.0
        %2076 = vmatpush1.xpose.msra.mxu0 0.0
        %2077 = vmatprep.subr.mxu0 0.0
        %2078 = vmatpush1.xpose.msra.mxu0 0.0
        %2079 = vmatprep.subr.mxu0 0.0
        %2080 = vmatpush1.xpose.msra.mxu0 0.0
        %2081 = vmatprep.subr.mxu0 0.0
        %2082 = vmatpush1.xpose.msra.mxu0 0.0
        %2083 = vmatprep.subr.mxu0 0.0
        %2084 = vmatpush1.xpose.msra.mxu0 0.0
        %2085 = vmatprep.subr.mxu0 0.0
        %2086 = vmatpush1.xpose.msra.mxu0 0.0
        %2087 = vmatprep.subr.mxu0 0.0
        %2088 = vmatpush1.xpose.msra.mxu0 0.0
        %2089 = vmatprep.subr.mxu0 0.0
        %2090 = vmatpush1.xpose.msra.mxu0 0.0
        %2091 = vmatprep.subr.mxu0 0.0
        %2092 = vmatpush1.xpose.msra.mxu0 0.0
        %2093 = vmatprep.subr.mxu0 0.0
        %2094 = vmatpush1.xpose.msra.mxu0 0.0
        %2095 = vmatprep.subr.mxu0 0.0
        %2096 = vmatpush1.xpose.msra.mxu0 0.0
        %2097 = vmatprep.subr.mxu0 0.0
        %2098 = vmatpush1.xpose.msra.mxu0 0.0
        %2099 = vmatprep.subr.mxu0 0.0
        %2100 = vmatpush1.xpose.msra.mxu0 0.0
        %2101 = vmatprep.subr.mxu0 0.0
        %2102 = vmatpush1.xpose.msra.mxu0 0.0
        %2103 = vmatprep.subr.mxu0 0.0
        %2104 = vmatpush1.xpose.msra.mxu0 0.0
        %2105 = vmatprep.subr.mxu0 0.0
        %2106 = vmatpush1.xpose.msra.mxu0 0.0
        %2107 = vmatprep.mubr.f32.mxu0 0.0
        %2108 = vmatmul.mubr.f32.gmra.mrb[0].mxu0 %v2035
        %v2109 = vpop.f32.mrb[0].mxu0
        %v2110 = vadd.f32 %v1514, %v2109
        %v2111 = vpop.f32.mrb[0].mxu0
        %2112 = vmatprep.mubr.f32.mxu0 0.0
        %2113 = vmatmul.mubr.f32.gmra.mrb[0].mxu0 %v2037
        %v2114 = vpop.f32.mrb[0].mxu0
        %v2115 = vadd.f32 %v1515, %v2114
        %v2116 = vpop.f32.mrb[0].mxu0
        %2117 = vdwg.mxu0
        %v2118 = vsel %vm1717, %v2110, -inf
        %2119 = vmax.xlane.f32.xlu0 %v2118
        %v2120 = vpop.xlane.xlu0 %2119
        %v2121 = vsel %vm1717, %v2115, -inf
        %2122 = vmax.xlane.f32.xlu0 %v2121
        %v2123 = vpop.xlane.xlu0 %2122
        %v2124 = vsub.f32 %v2110, %v2120
        %v2125 = vsub.f32 %v2115, %v2123
        %v2126 = vmul.f32 %v2124, 1.442695
        %v2127 = vpow.pop %v2126
        %v2128 = vmul.f32 %v2125, 1.442695
        %v2129 = vpow.pop %v2128
        %v2130 = vsel %vm1717, %v2127, 0.0
        %2131 = vadd.xlane.f32.xlu0 %v2130
        %v2132 = vpop.xlane.xlu0 %2131
        %v2133 = vsel %vm1717, %v2129, 0.0
        %2134 = vadd.xlane.f32.xlu0 %v2133
        %v2135 = vpop.xlane.xlu0 %2134
        %v2136 = vrcp.pop %v2132
        %v2137 = vmul.f32 %v2127, %v2136
        %v2138 = vrcp.pop %v2135
        %v2139 = vmul.f32 %v2129, %v2138
        %2140 = vrot.lane.b32.xlu0 %v1617, 48
        %v2141 = vpop.permute.xlu0 %2140
        %2142 = vrot.lane.b32.xlu0 %v1620, 48
        %v2143 = vpop.permute.xlu0 %2142
        %v2147 = vsel %vm1717, %v2137, 0
        %v2150 = vsel %vm1717, %v2139, 0
        %2152 = vmatprep.subr.mxu0 0.0
        %2153 = vmatpush1.msra.mxu0 %v2141
        %2154 = vmatprep.subr.mxu0 0.0
        %2155 = vmatpush1.msra.mxu0 %v2143
        %2156 = vmatprep.subr.mxu0 0.0
        %2157 = vmatpush1.msra.mxu0 0.0
        %2158 = vmatprep.subr.mxu0 0.0
        %2159 = vmatpush1.msra.mxu0 0.0
        %2160 = vmatprep.subr.mxu0 0.0
        %2161 = vmatpush1.msra.mxu0 0.0
        %2162 = vmatprep.subr.mxu0 0.0
        %2163 = vmatpush1.msra.mxu0 0.0
        %2164 = vmatprep.subr.mxu0 0.0
        %2165 = vmatpush1.msra.mxu0 0.0
        %2166 = vmatprep.subr.mxu0 0.0
        %2167 = vmatpush1.msra.mxu0 0.0
        %2168 = vmatprep.subr.mxu0 0.0
        %2169 = vmatpush1.msra.mxu0 0.0
        %2170 = vmatprep.subr.mxu0 0.0
        %2171 = vmatpush1.msra.mxu0 0.0
        %2172 = vmatprep.subr.mxu0 0.0
        %2173 = vmatpush1.msra.mxu0 0.0
        %2174 = vmatprep.subr.mxu0 0.0
        %2175 = vmatpush1.msra.mxu0 0.0
        %2176 = vmatprep.subr.mxu0 0.0
        %2177 = vmatpush1.msra.mxu0 0.0
        %2178 = vmatprep.subr.mxu0 0.0
        %2179 = vmatpush1.msra.mxu0 0.0
        %2180 = vmatprep.subr.mxu0 0.0
        %2181 = vmatpush1.msra.mxu0 0.0
        %2182 = vmatprep.subr.mxu0 0.0
        %2183 = vmatpush1.msra.mxu0 0.0
        %2184 = vmatprep.subr.mxu0 0.0
        %2185 = vmatpush1.msra.mxu0 0.0
        %2186 = vmatprep.subr.mxu0 0.0
        %2187 = vmatpush1.msra.mxu0 0.0
        %2188 = vmatprep.subr.mxu0 0.0
        %2189 = vmatpush1.msra.mxu0 0.0
        %2190 = vmatprep.subr.mxu0 0.0
        %2191 = vmatpush1.msra.mxu0 0.0
        %2192 = vmatprep.subr.mxu0 0.0
        %2193 = vmatpush1.msra.mxu0 0.0
        %2194 = vmatprep.subr.mxu0 0.0
        %2195 = vmatpush1.msra.mxu0 0.0
        %2196 = vmatprep.subr.mxu0 0.0
        %2197 = vmatpush1.msra.mxu0 0.0
        %2198 = vmatprep.subr.mxu0 0.0
        %2199 = vmatpush1.msra.mxu0 0.0
        %2200 = vmatprep.subr.mxu0 0.0
        %2201 = vmatpush1.msra.mxu0 0.0
        %2202 = vmatprep.subr.mxu0 0.0
        %2203 = vmatpush1.msra.mxu0 0.0
        %2204 = vmatprep.subr.mxu0 0.0
        %2205 = vmatpush1.msra.mxu0 0.0
        %2206 = vmatprep.subr.mxu0 0.0
        %2207 = vmatpush1.msra.mxu0 0.0
        %2208 = vmatprep.subr.mxu0 0.0
        %2209 = vmatpush1.msra.mxu0 0.0
        %2210 = vmatprep.subr.mxu0 0.0
        %2211 = vmatpush1.msra.mxu0 0.0
        %2212 = vmatprep.subr.mxu0 0.0
        %2213 = vmatpush1.msra.mxu0 0.0
        %2214 = vmatprep.subr.mxu0 0.0
        %2215 = vmatpush1.msra.mxu0 0.0
        %2216 = vmatprep.mubr.f32.mxu0 0.0
        %2217 = vmatmul.mubr.f32.gmra.mrb[0].mxu0 %v2147
        %v2218 = vpop.f32.mrb[0].mxu0
        %v2219 = vadd.f32 0.0, %v2218
        %v2220 = vpop.f32.mrb[0].mxu0
        %2221 = vmatprep.mubr.f32.mxu0 0.0
        %2222 = vmatmul.mubr.f32.gmra.mrb[0].mxu0 %v2150
        %v2223 = vpop.f32.mrb[0].mxu0
        %v2224 = vadd.f32 0.0, %v2223
        %v2225 = vpop.f32.mrb[0].mxu0
        %2226 = vdwg.mxu0
        %2227 = vrot.lane.b32.xlu0 %v1623, 104
        %v2228 = vpop.permute.xlu0 %2227
        %2229 = vrot.lane.b32.xlu0 %v1624, 104
        %v2230 = vpop.permute.xlu0 %2229
        %2231 = vrot.lane.b32.xlu0 %v1617, 72
        %v2232 = vpop.permute.xlu0 %2231
        %2233 = vrot.lane.b32.xlu0 %v1620, 72
        %v2234 = vpop.permute.xlu0 %2233
        %v2235 = vsel %vm1631, %v2228, 0
        %v2237 = vsel %vm1631, %v2230, 0
        %v2239 = vsel %vm1631, %v2232, 0
        %v2241 = vsel %vm1631, %v2234, 0
        %2243 = vmatprep.subr.mxu0 0.0
        %2244 = vmatpush1.xpose.msra.mxu0 %v2239
        %2245 = vmatprep.subr.mxu0 0.0
        %2246 = vmatpush1.xpose.msra.mxu0 %v2241
        %2247 = vmatprep.subr.mxu0 0.0
        %2248 = vmatpush1.xpose.msra.mxu0 0.0
        %2249 = vmatprep.subr.mxu0 0.0
        %2250 = vmatpush1.xpose.msra.mxu0 0.0
        %2251 = vmatprep.subr.mxu0 0.0
        %2252 = vmatpush1.xpose.msra.mxu0 0.0
        %2253 = vmatprep.subr.mxu0 0.0
        %2254 = vmatpush1.xpose.msra.mxu0 0.0
        %2255 = vmatprep.subr.mxu0 0.0
        %2256 = vmatpush1.xpose.msra.mxu0 0.0
        %2257 = vmatprep.subr.mxu0 0.0
        %2258 = vmatpush1.xpose.msra.mxu0 0.0
        %2259 = vmatprep.subr.mxu0 0.0
        %2260 = vmatpush1.xpose.msra.mxu0 0.0
        %2261 = vmatprep.subr.mxu0 0.0
        %2262 = vmatpush1.xpose.msra.mxu0 0.0
        %2263 = vmatprep.subr.mxu0 0.0
        %2264 = vmatpush1.xpose.msra.mxu0 0.0
        %2265 = vmatprep.subr.mxu0 0.0
        %2266 = vmatpush1.xpose.msra.mxu0 0.0
        %2267 = vmatprep.subr.mxu0 0.0
        %2268 = vmatpush1.xpose.msra.mxu0 0.0
        %2269 = vmatprep.subr.mxu0 0.0
        %2270 = vmatpush1.xpose.msra.mxu0 0.0
        %2271 = vmatprep.subr.mxu0 0.0
        %2272 = vmatpush1.xpose.msra.mxu0 0.0
        %2273 = vmatprep.subr.mxu0 0.0
        %2274 = vmatpush1.xpose.msra.mxu0 0.0
        %2275 = vmatprep.subr.mxu0 0.0
        %2276 = vmatpush1.xpose.msra.mxu0 0.0
        %2277 = vmatprep.subr.mxu0 0.0
        %2278 = vmatpush1.xpose.msra.mxu0 0.0
        %2279 = vmatprep.subr.mxu0 0.0
        %2280 = vmatpush1.xpose.msra.mxu0 0.0
        %2281 = vmatprep.subr.mxu0 0.0
        %2282 = vmatpush1.xpose.msra.mxu0 0.0
        %2283 = vmatprep.subr.mxu0 0.0
        %2284 = vmatpush1.xpose.msra.mxu0 0.0
        %2285 = vmatprep.subr.mxu0 0.0
        %2286 = vmatpush1.xpose.msra.mxu0 0.0
        %2287 = vmatprep.subr.mxu0 0.0
        %2288 = vmatpush1.xpose.msra.mxu0 0.0
        %2289 = vmatprep.subr.mxu0 0.0
        %2290 = vmatpush1.xpose.msra.mxu0 0.0
        %2291 = vmatprep.subr.mxu0 0.0
        %2292 = vmatpush1.xpose.msra.mxu0 0.0
        %2293 = vmatprep.subr.mxu0 0.0
        %2294 = vmatpush1.xpose.msra.mxu0 0.0
        %2295 = vmatprep.subr.mxu0 0.0
        %2296 = vmatpush1.xpose.msra.mxu0 0.0
        %2297 = vmatprep.subr.mxu0 0.0
        %2298 = vmatpush1.xpose.msra.mxu0 0.0
        %2299 = vmatprep.subr.mxu0 0.0
        %2300 = vmatpush1.xpose.msra.mxu0 0.0
        %2301 = vmatprep.subr.mxu0 0.0
        %2302 = vmatpush1.xpose.msra.mxu0 0.0
        %2303 = vmatprep.subr.mxu0 0.0
        %2304 = vmatpush1.xpose.msra.mxu0 0.0
        %2305 = vmatprep.subr.mxu0 0.0
        %2306 = vmatpush1.xpose.msra.mxu0 0.0
        %2307 = vmatprep.mubr.f32.mxu0 0.0
        %2308 = vmatmul.mubr.f32.gmra.mrb[0].mxu0 %v2235
        %v2309 = vpop.f32.mrb[0].mxu0
        %v2310 = vadd.f32 %v1514, %v2309
        %v2311 = vpop.f32.mrb[0].mxu0
        %2312 = vmatprep.mubr.f32.mxu0 0.0
        %2313 = vmatmul.mubr.f32.gmra.mrb[0].mxu0 %v2237
        %v2314 = vpop.f32.mrb[0].mxu0
        %v2315 = vadd.f32 %v1515, %v2314
        %v2316 = vpop.f32.mrb[0].mxu0
        %2317 = vdwg.mxu0
        %v2318 = vsel %vm1717, %v2310, -inf
        %2319 = vmax.xlane.f32.xlu0 %v2318
        %v2320 = vpop.xlane.xlu0 %2319
        %v2321 = vsel %vm1717, %v2315, -inf
        %2322 = vmax.xlane.f32.xlu0 %v2321
        %v2323 = vpop.xlane.xlu0 %2322
        %v2324 = vsub.f32 %v2310, %v2320
        %v2325 = vsub.f32 %v2315, %v2323
        %v2326 = vmul.f32 %v2324, 1.442695
        %v2327 = vpow.pop %v2326
        %v2328 = vmul.f32 %v2325, 1.442695
        %v2329 = vpow.pop %v2328
        %v2330 = vsel %vm1717, %v2327, 0.0
        %2331 = vadd.xlane.f32.xlu0 %v2330
        %v2332 = vpop.xlane.xlu0 %2331
        %v2333 = vsel %vm1717, %v2329, 0.0
        %2334 = vadd.xlane.f32.xlu0 %v2333
        %v2335 = vpop.xlane.xlu0 %2334
        %v2336 = vrcp.pop %v2332
        %v2337 = vmul.f32 %v2327, %v2336
        %v2338 = vrcp.pop %v2335
        %v2339 = vmul.f32 %v2329, %v2338
        %2340 = vrot.lane.b32.xlu0 %v1617, 40
        %v2341 = vpop.permute.xlu0 %2340
        %2342 = vrot.lane.b32.xlu0 %v1620, 40
        %v2343 = vpop.permute.xlu0 %2342
        %v2347 = vsel %vm1717, %v2337, 0
        %v2350 = vsel %vm1717, %v2339, 0
        %2352 = vmatprep.subr.mxu0 0.0
        %2353 = vmatpush1.msra.mxu0 %v2341
        %2354 = vmatprep.subr.mxu0 0.0
        %2355 = vmatpush1.msra.mxu0 %v2343
        %2356 = vmatprep.subr.mxu0 0.0
        %2357 = vmatpush1.msra.mxu0 0.0
        %2358 = vmatprep.subr.mxu0 0.0
        %2359 = vmatpush1.msra.mxu0 0.0
        %2360 = vmatprep.subr.mxu0 0.0
        %2361 = vmatpush1.msra.mxu0 0.0
        %2362 = vmatprep.subr.mxu0 0.0
        %2363 = vmatpush1.msra.mxu0 0.0
        %2364 = vmatprep.subr.mxu0 0.0
        %2365 = vmatpush1.msra.mxu0 0.0
        %2366 = vmatprep.subr.mxu0 0.0
        %2367 = vmatpush1.msra.mxu0 0.0
        %2368 = vmatprep.subr.mxu0 0.0
        %2369 = vmatpush1.msra.mxu0 0.0
        %2370 = vmatprep.subr.mxu0 0.0
        %2371 = vmatpush1.msra.mxu0 0.0
        %2372 = vmatprep.subr.mxu0 0.0
        %2373 = vmatpush1.msra.mxu0 0.0
        %2374 = vmatprep.subr.mxu0 0.0
        %2375 = vmatpush1.msra.mxu0 0.0
        %2376 = vmatprep.subr.mxu0 0.0
        %2377 = vmatpush1.msra.mxu0 0.0
        %2378 = vmatprep.subr.mxu0 0.0
        %2379 = vmatpush1.msra.mxu0 0.0
        %2380 = vmatprep.subr.mxu0 0.0
        %2381 = vmatpush1.msra.mxu0 0.0
        %2382 = vmatprep.subr.mxu0 0.0
        %2383 = vmatpush1.msra.mxu0 0.0
        %2384 = vmatprep.subr.mxu0 0.0
        %2385 = vmatpush1.msra.mxu0 0.0
        %2386 = vmatprep.subr.mxu0 0.0
        %2387 = vmatpush1.msra.mxu0 0.0
        %2388 = vmatprep.subr.mxu0 0.0
        %2389 = vmatpush1.msra.mxu0 0.0
        %2390 = vmatprep.subr.mxu0 0.0
        %2391 = vmatpush1.msra.mxu0 0.0
        %2392 = vmatprep.subr.mxu0 0.0
        %2393 = vmatpush1.msra.mxu0 0.0
        %2394 = vmatprep.subr.mxu0 0.0
        %2395 = vmatpush1.msra.mxu0 0.0
        %2396 = vmatprep.subr.mxu0 0.0
        %2397 = vmatpush1.msra.mxu0 0.0
        %2398 = vmatprep.subr.mxu0 0.0
        %2399 = vmatpush1.msra.mxu0 0.0
        %2400 = vmatprep.subr.mxu0 0.0
        %2401 = vmatpush1.msra.mxu0 0.0
        %2402 = vmatprep.subr.mxu0 0.0
        %2403 = vmatpush1.msra.mxu0 0.0
        %2404 = vmatprep.subr.mxu0 0.0
        %2405 = vmatpush1.msra.mxu0 0.0
        %2406 = vmatprep.subr.mxu0 0.0
        %2407 = vmatpush1.msra.mxu0 0.0
        %2408 = vmatprep.subr.mxu0 0.0
        %2409 = vmatpush1.msra.mxu0 0.0
        %2410 = vmatprep.subr.mxu0 0.0
        %2411 = vmatpush1.msra.mxu0 0.0
        %2412 = vmatprep.subr.mxu0 0.0
        %2413 = vmatpush1.msra.mxu0 0.0
        %2414 = vmatprep.subr.mxu0 0.0
        %2415 = vmatpush1.msra.mxu0 0.0
        %2416 = vmatprep.mubr.f32.mxu0 0.0
        %2417 = vmatmul.mubr.f32.gmra.mrb[0].mxu0 %v2347
        %v2418 = vpop.f32.mrb[0].mxu0
        %v2419 = vadd.f32 0.0, %v2418
        %v2420 = vpop.f32.mrb[0].mxu0
        %2421 = vmatprep.mubr.f32.mxu0 0.0
        %2422 = vmatmul.mubr.f32.gmra.mrb[0].mxu0 %v2350
        %v2423 = vpop.f32.mrb[0].mxu0
        %v2424 = vadd.f32 0.0, %v2423
        %v2425 = vpop.f32.mrb[0].mxu0
        %2426 = vdwg.mxu0
        %2429 = vrot.lane.b32.xlu0 %v2019, 8
        %v2430 = vpop.permute.xlu0 %2429
        %2431 = vrot.lane.b32.xlu0 %v2024, 8
        %v2432 = vpop.permute.xlu0 %2431
        %2437 = vrot.lane.b32.xlu0 %v2219, 16
        %v2438 = vpop.permute.xlu0 %2437
        %2439 = vrot.lane.b32.xlu0 %v2224, 16
        %v2440 = vpop.permute.xlu0 %2439
        %2445 = vrot.lane.b32.xlu0 %v2419, 24
        %v2446 = vpop.permute.xlu0 %2445
        %2447 = vrot.lane.b32.xlu0 %v2424, 24
        %v2448 = vpop.permute.xlu0 %2447
        %v2451 = vsel %vm1631, %v1819, %v2430
        %v2452 = vsel %vm1631, %v1824, %v2432
        %v2453 = vsel %vm1717, %v2451, %v2438
        %v2454 = vsel %vm1717, %v2452, %v2440
        %vm2455 = vcmask 195584
        %v2456 = vsel %vm2455, %v2453, %v2446
        %v2457 = vsel %vm2455, %v2454, %v2448
        %v2458 = vpack.c.bf16 %v2457, %v2456
        %v2459 = vld [vmem:[%s8] sm:$0xf]
        %v2460 = vld [vmem:[%s8 + $0x4] sm:$0xf]
        %v2461 = vld [vmem:[%s8 + $0x8] sm:$0xf]
        %v2462 = vld [vmem:[%s8 + $0xc] sm:$0xf]
        %v2463 = vld [vmem:[%s9] sm:$0x1]
        %v2465 = vlaneseq
        %v2466 = vshrl.u32 %v2465, 7
        %v2467 = vsub.s32 0, %v2466
        %v2468 = vrot.slane %v2463, %v2467
        %v2474 = vunpack.c.l.b16 %v2459
        %v2475 = vunpack.c.l.b16 %v2460
        %v2476 = vunpack.c.l.b16 %v2461
        %v2477 = vunpack.c.l.b16 %v2462
        %v2478 = vpack.c.b16 %v2475, %v2474
        %v2479 = vpack.c.b16 %v2477, %v2476
        %v2483 = vsel %vm1474, %v2458, 0
        %2485 = vmatprep.subr.bf16.mxu0 0
        %2486 = vmatpush1.bf16.msra.mxu0 %v2478
        %2487 = vmatprep.subr.bf16.mxu0 0
        %2488 = vmatpush1.bf16.msra.mxu0 %v2479
        %2489 = vmatprep.subr.bf16.mxu0 0
        %2490 = vmatpush1.bf16.msra.mxu0 0
        %2491 = vmatprep.subr.bf16.mxu0 0
        %2492 = vmatpush1.bf16.msra.mxu0 0
        %2493 = vmatprep.subr.bf16.mxu0 0
        %2494 = vmatpush1.bf16.msra.mxu0 0
        %2495 = vmatprep.subr.bf16.mxu0 0
        %2496 = vmatpush1.bf16.msra.mxu0 0
        %2497 = vmatprep.subr.bf16.mxu0 0
        %2498 = vmatpush1.bf16.msra.mxu0 0
        %2499 = vmatprep.subr.bf16.mxu0 0
        %2500 = vmatpush1.bf16.msra.mxu0 0
        %2501 = vmatprep.subr.bf16.mxu0 0
        %2502 = vmatpush1.bf16.msra.mxu0 0
        %2503 = vmatprep.subr.bf16.mxu0 0
        %2504 = vmatpush1.bf16.msra.mxu0 0
        %2505 = vmatprep.subr.bf16.mxu0 0
        %2506 = vmatpush1.bf16.msra.mxu0 0
        %2507 = vmatprep.subr.bf16.mxu0 0
        %2508 = vmatpush1.bf16.msra.mxu0 0
        %2509 = vmatprep.subr.bf16.mxu0 0
        %2510 = vmatpush1.bf16.msra.mxu0 0
        %2511 = vmatprep.subr.bf16.mxu0 0
        %2512 = vmatpush1.bf16.msra.mxu0 0
        %2513 = vmatprep.subr.bf16.mxu0 0
        %2514 = vmatpush1.bf16.msra.mxu0 0
        %2515 = vmatprep.subr.bf16.mxu0 0
        %2516 = vmatpush1.bf16.msra.mxu0 0
        %2517 = vmatprep.mubr.bf16.mxu0 0
        %2518 = vmatmul.mubr.bf16.gmra.mrb[0].mxu0 %v2483
        %v2519 = vpop.f32.mrb[0].mxu0
        %v2520 = vadd.f32 %v2468, %v2519
        %v2521 = vpop.f32.mrb[0].mxu0
        %v2522 = vpop.f32.mrb[0].mxu0
        %v2523 = vadd.f32 %v2468, %v2522
        %v2524 = vpop.f32.mrb[0].mxu0
        %2525 = vdwg.mxu0
        %v2526 = vadd.f32 %v1512, %v2520
        %v2527 = vadd.f32 %v1513, %v2523
        %v2528 = vsel %vm1474, %v2526, 0.0
        %2529 = vadd.xlane.f32.xlu0 %v2528
        %v2530 = vpop.xlane.xlu0 %2529
        %v2531 = vsel %vm1474, %v2527, 0.0
        %2532 = vadd.xlane.f32.xlu0 %v2531
        %v2533 = vpop.xlane.xlu0 %2532
        %v2534 = vmul.f32 %v2530, %v1481
        %v2535 = vmul.f32 %v2533, %v1481
        %v2536 = vsub.f32 %v2526, %v2534
        %v2537 = vsub.f32 %v2527, %v2535
        %v2538 = vmul.f32 %v2536, %v2536
        %v2539 = vmul.f32 %v2537, %v2537
        %v2540 = vsel %vm1474, %v2538, 0.0
        %2541 = vadd.xlane.f32.xlu0 %v2540
        %v2542 = vpop.xlane.xlu0 %2541
        %v2543 = vsel %vm1474, %v2539, 0.0
        %2544 = vadd.xlane.f32.xlu0 %v2543
        %v2545 = vpop.xlane.xlu0 %2544
        %v2546 = vmul.f32 %v2542, %v1481
        %v2547 = vmul.f32 %v2545, %v1481
        %v2548 = vadd.f32 %v2546, 1e-05
        %v2549 = vadd.f32 %v2547, 1e-05
        %v2550 = vrsqrt.pop %v2548
        %v2551 = vrsqrt.pop %v2549
        %v2552 = vmul.f32 %v2536, %v2550
        %v2553 = vmul.f32 %v2537, %v2551
        %v2554 = vlaneseq
        %v2555 = vshrl.u32 %v2554, 7
        %v2556 = vsub.s32 2, %v2555
        %v2557 = vrot.slane %v1516, %v2556
        %v2558 = vmul.f32 %v2552, %v2557
        %v2559 = vmul.f32 %v2553, %v2557
        %v2560 = vlaneseq
        %v2561 = vshrl.u32 %v2560, 7
        %v2562 = vsub.s32 3, %v2561
        %v2563 = vrot.slane %v1516, %v2562
        %v2564 = vadd.f32 %v2558, %v2563
        %v2565 = vadd.f32 %v2559, %v2563
        %v2566 = vpack.c.bf16 %v2565, %v2564
        %v2567 = vld [vmem:[%s10] sm:$0xf]
        %v2568 = vld [vmem:[%s10 + $0x4] sm:$0xf]
        %v2569 = vld [vmem:[%s10 + $0x8] sm:$0xf]
        %v2570 = vld [vmem:[%s10 + $0xc] sm:$0xf]
        %v2571 = vld [vmem:[%s11] sm:$0x1]
        %v2573 = vlaneseq
        %v2574 = vshrl.u32 %v2573, 7
        %v2575 = vsub.s32 0, %v2574
        %v2576 = vrot.slane %v2571, %v2575
        %v2582 = vunpack.c.l.b16 %v2567
        %v2583 = vunpack.c.l.b16 %v2568
        %v2584 = vunpack.c.l.b16 %v2569
        %v2585 = vunpack.c.l.b16 %v2570
        %v2586 = vpack.c.b16 %v2583, %v2582
        %v2587 = vpack.c.b16 %v2585, %v2584
        %v2591 = vsel %vm1474, %v2566, 0
        %2593 = vmatprep.subr.bf16.mxu0 0
        %2594 = vmatpush1.bf16.msra.mxu0 %v2586
        %2595 = vmatprep.subr.bf16.mxu0 0
        %2596 = vmatpush1.bf16.msra.mxu0 %v2587
        %2597 = vmatprep.subr.bf16.mxu0 0
        %2598 = vmatpush1.bf16.msra.mxu0 0
        %2599 = vmatprep.subr.bf16.mxu0 0
        %2600 = vmatpush1.bf16.msra.mxu0 0
        %2601 = vmatprep.subr.bf16.mxu0 0
        %2602 = vmatpush1.bf16.msra.mxu0 0
        %2603 = vmatprep.subr.bf16.mxu0 0
        %2604 = vmatpush1.bf16.msra.mxu0 0
        %2605 = vmatprep.subr.bf16.mxu0 0
        %2606 = vmatpush1.bf16.msra.mxu0 0
        %2607 = vmatprep.subr.bf16.mxu0 0
        %2608 = vmatpush1.bf16.msra.mxu0 0
        %2609 = vmatprep.subr.bf16.mxu0 0
        %2610 = vmatpush1.bf16.msra.mxu0 0
        %2611 = vmatprep.subr.bf16.mxu0 0
        %2612 = vmatpush1.bf16.msra.mxu0 0
        %2613 = vmatprep.subr.bf16.mxu0 0
        %2614 = vmatpush1.bf16.msra.mxu0 0
        %2615 = vmatprep.subr.bf16.mxu0 0
        %2616 = vmatpush1.bf16.msra.mxu0 0
        %2617 = vmatprep.subr.bf16.mxu0 0
        %2618 = vmatpush1.bf16.msra.mxu0 0
        %2619 = vmatprep.subr.bf16.mxu0 0
        %2620 = vmatpush1.bf16.msra.mxu0 0
        %2621 = vmatprep.subr.bf16.mxu0 0
        %2622 = vmatpush1.bf16.msra.mxu0 0
        %2623 = vmatprep.subr.bf16.mxu0 0
        %2624 = vmatpush1.bf16.msra.mxu0 0
        %2625 = vmatprep.mubr.bf16.mxu0 0
        %2626 = vmatmul.mubr.bf16.gmra.mrb[0].mxu0 %v2591
        %v2627 = vpop.f32.mrb[0].mxu0
        %v2628 = vadd.f32 %v2576, %v2627
        %v2629 = vpop.f32.mrb[0].mxu0
        %v2630 = vpop.f32.mrb[0].mxu0
        %v2631 = vadd.f32 %v2576, %v2630
        %v2632 = vpop.f32.mrb[0].mxu0
        %2633 = vdwg.mxu0
        %v2634 = vmul.f32 %v2628, 1.702
        %v2635 = vmul.f32 %v2631, 1.702
        %v2636 = vxor.u32 %v2634, 2147483648
        %v2637 = vxor.u32 %v2635, 2147483648
        %v2638 = vmul.f32 %v2636, 1.442695
        %v2639 = vpow.pop %v2638
        %v2640 = vmul.f32 %v2637, 1.442695
        %v2641 = vpow.pop %v2640
        %v2642 = vadd.f32 %v2639, 1.0
        %v2643 = vadd.f32 %v2641, 1.0
        %v2644 = vrcp.pop %v2642
        %v2645 = vmul.f32 1.0, %v2644
        %v2646 = vrcp.pop %v2643
        %v2647 = vmul.f32 1.0, %v2646
        %v2648 = vmul.f32 %v2628, %v2645
        %v2649 = vmul.f32 %v2631, %v2647
        %v2650 = vpack.c.bf16 %v2649, %v2648
        %v2651 = vld [vmem:[%s12] sm:$0xf]
        %v2652 = vld [vmem:[%s12 + $0x4] sm:$0xf]
        %v2653 = vld [vmem:[%s12 + $0x8] sm:$0xf]
        %v2654 = vld [vmem:[%s12 + $0xc] sm:$0xf]
        %v2655 = vld [vmem:[%s12 + $0x10] sm:$0xf]
        %v2656 = vld [vmem:[%s12 + $0x14] sm:$0xf]
        %v2657 = vld [vmem:[%s12 + $0x18] sm:$0xf]
        %v2658 = vld [vmem:[%s12 + $0x1c] sm:$0xf]
        %v2659 = vld [vmem:[%s12 + $0x20] sm:$0xf]
        %v2660 = vld [vmem:[%s12 + $0x24] sm:$0xf]
        %v2661 = vld [vmem:[%s12 + $0x28] sm:$0xf]
        %v2662 = vld [vmem:[%s12 + $0x2c] sm:$0xf]
        %v2663 = vld [vmem:[%s12 + $0x30] sm:$0xf]
        %v2664 = vld [vmem:[%s12 + $0x34] sm:$0xf]
        %v2665 = vld [vmem:[%s12 + $0x38] sm:$0xf]
        %v2666 = vld [vmem:[%s12 + $0x3c] sm:$0xf]
        %v2683 = vunpack.c.l.b16 %v2651
        %v2684 = vunpack.c.l.b16 %v2652
        %v2685 = vunpack.c.l.b16 %v2653
        %v2686 = vunpack.c.l.b16 %v2654
        %v2687 = vunpack.c.l.b16 %v2655
        %v2688 = vunpack.c.l.b16 %v2656
        %v2689 = vunpack.c.l.b16 %v2657
        %v2690 = vunpack.c.l.b16 %v2658
        %v2691 = vunpack.c.l.b16 %v2659
        %v2692 = vunpack.c.l.b16 %v2660
        %v2693 = vunpack.c.l.b16 %v2661
        %v2694 = vunpack.c.l.b16 %v2662
        %v2695 = vunpack.c.l.b16 %v2663
        %v2696 = vunpack.c.l.b16 %v2664
        %v2697 = vunpack.c.l.b16 %v2665
        %v2698 = vunpack.c.l.b16 %v2666
        %v2699 = vpack.c.b16 %v2684, %v2683
        %v2700 = vpack.c.b16 %v2686, %v2685
        %v2701 = vpack.c.b16 %v2688, %v2687
        %v2702 = vpack.c.b16 %v2690, %v2689
        %v2703 = vpack.c.b16 %v2692, %v2691
        %v2704 = vpack.c.b16 %v2694, %v2693
        %v2705 = vpack.c.b16 %v2696, %v2695
        %v2706 = vpack.c.b16 %v2698, %v2697
        %2715 = vmatprep.subr.bf16.mxu0 0
        %2716 = vmatpush1.bf16.msra.mxu0 %v2699
        %2717 = vmatprep.subr.bf16.mxu0 0
        %2718 = vmatpush1.bf16.msra.mxu0 %v2700
        %2719 = vmatprep.subr.bf16.mxu0 0
        %2720 = vmatpush1.bf16.msra.mxu0 %v2701
        %2721 = vmatprep.subr.bf16.mxu0 0
        %2722 = vmatpush1.bf16.msra.mxu0 %v2702
        %2723 = vmatprep.subr.bf16.mxu0 0
        %2724 = vmatpush1.bf16.msra.mxu0 %v2703
        %2725 = vmatprep.subr.bf16.mxu0 0
        %2726 = vmatpush1.bf16.msra.mxu0 %v2704
        %2727 = vmatprep.subr.bf16.mxu0 0
        %2728 = vmatpush1.bf16.msra.mxu0 %v2705
        %2729 = vmatprep.subr.bf16.mxu0 0
        %2730 = vmatpush1.bf16.msra.mxu0 %v2706
        %2731 = vmatprep.subr.bf16.mxu0 0
        %2732 = vmatpush1.bf16.msra.mxu0 0
        %2733 = vmatprep.subr.bf16.mxu0 0
        %2734 = vmatpush1.bf16.msra.mxu0 0
        %2735 = vmatprep.subr.bf16.mxu0 0
        %2736 = vmatpush1.bf16.msra.mxu0 0
        %2737 = vmatprep.subr.bf16.mxu0 0
        %2738 = vmatpush1.bf16.msra.mxu0 0
        %2739 = vmatprep.subr.bf16.mxu0 0
        %2740 = vmatpush1.bf16.msra.mxu0 0
        %2741 = vmatprep.subr.bf16.mxu0 0
        %2742 = vmatpush1.bf16.msra.mxu0 0
        %2743 = vmatprep.subr.bf16.mxu0 0
        %2744 = vmatpush1.bf16.msra.mxu0 0
        %2745 = vmatprep.subr.bf16.mxu0 0
        %2746 = vmatpush1.bf16.msra.mxu0 0
        %2747 = vmatprep.mubr.bf16.mxu0 0
        %2748 = vmatmul.mubr.bf16.gmra.mrb[0].mxu0 %v2650
        %v2749 = vpop.f32.mrb[0].mxu0
        %v2750 = vadd.f32 0.0, %v2749
        %v2751 = vpop.f32.mrb[0].mxu0
        %v2752 = vpop.f32.mrb[0].mxu0
        %v2753 = vadd.f32 0.0, %v2752
        %v2754 = vpop.f32.mrb[0].mxu0
        %2755 = vdwg.mxu0
        %v2756 = vadd.f32 %v2526, %v2750
        %v2757 = vadd.f32 %v2527, %v2753
        %v2758 = vld [vmem:[%s13] sm:$0x1]
        %v2760 = vlaneseq
        %v2761 = vshrl.u32 %v2760, 7
        %v2762 = vsub.s32 0, %v2761
        %v2763 = vrot.slane %v2758, %v2762
        %v2765 = vadd.f32 %v2756, %v2763
        %v2766 = vadd.f32 %v2757, %v2763
        %s2767 = scalar_lea.vmem %s5, 4
        %v2768 = vld [vmem:[%s2767] sm:$0xf]
        %v2769 = vsel %vm1474, %v2765, 0.0
        %2770 = vadd.xlane.f32.xlu0 %v2769
        %v2771 = vpop.xlane.xlu0 %2770
        %v2772 = vsel %vm1474, %v2766, 0.0
        %2773 = vadd.xlane.f32.xlu0 %v2772
        %v2774 = vpop.xlane.xlu0 %2773
        %v2775 = vmul.f32 %v2771, %v1481
        %v2776 = vmul.f32 %v2774, %v1481
        %v2777 = vsub.f32 %v2765, %v2775
        %v2778 = vsub.f32 %v2766, %v2776
        %v2779 = vmul.f32 %v2777, %v2777
        %v2780 = vmul.f32 %v2778, %v2778
        %v2781 = vsel %vm1474, %v2779, 0.0
        %2782 = vadd.xlane.f32.xlu0 %v2781
        %v2783 = vpop.xlane.xlu0 %2782
        %v2784 = vsel %vm1474, %v2780, 0.0
        %2785 = vadd.xlane.f32.xlu0 %v2784
        %v2786 = vpop.xlane.xlu0 %2785
        %v2787 = vmul.f32 %v2783, %v1481
        %v2788 = vmul.f32 %v2786, %v1481
        %v2789 = vadd.f32 %v2787, 1e-05
        %v2790 = vadd.f32 %v2788, 1e-05
        %v2791 = vrsqrt.pop %v2789
        %v2792 = vrsqrt.pop %v2790
        %v2793 = vmul.f32 %v2777, %v2791
        %v2794 = vmul.f32 %v2778, %v2792
        %v2795 = vlaneseq
        %v2796 = vshrl.u32 %v2795, 7
        %v2797 = vsub.s32 0, %v2796
        %v2798 = vrot.slane %v2768, %v2797
        %v2799 = vmul.f32 %v2793, %v2798
        %v2800 = vmul.f32 %v2794, %v2798
        %v2801 = vlaneseq
        %v2802 = vshrl.u32 %v2801, 7
        %v2803 = vsub.s32 1, %v2802
        %v2804 = vrot.slane %v2768, %v2803
        %v2805 = vadd.f32 %v2799, %v2804
        %v2806 = vadd.f32 %v2800, %v2804
        %v2807 = vpack.c.bf16 %v2806, %v2805
        %s2808 = scalar_lea.vmem %s6, 16
        %v2809 = vld [vmem:[%s2808] sm:$0xf]
        %v2810 = vld [vmem:[%s2808 + $0x4] sm:$0xf]
        %v2811 = vld [vmem:[%s2808 + $0x8] sm:$0xf]
        %v2812 = vld [vmem:[%s2808 + $0xc] sm:$0xf]
        %s2813 = scalar_lea.vmem %s7, 1
        %v2814 = vld [vmem:[%s2813] sm:$0x1]
        %v2816 = vlaneseq
        %v2817 = vshrl.u32 %v2816, 7
        %v2818 = vsub.s32 0, %v2817
        %v2819 = vrot.slane %v2814, %v2818
        %v2825 = vunpack.c.l.b16 %v2809
        %v2826 = vunpack.c.l.b16 %v2810
        %v2827 = vunpack.c.l.b16 %v2811
        %v2828 = vunpack.c.l.b16 %v2812
        %v2829 = vpack.c.b16 %v2826, %v2825
        %v2830 = vpack.c.b16 %v2828, %v2827
        %v2834 = vsel %vm1474, %v2807, 0
        %2836 = vmatprep.subr.bf16.mxu0 0
        %2837 = vmatpush1.bf16.msra.mxu0 %v2829
        %2838 = vmatprep.subr.bf16.mxu0 0
        %2839 = vmatpush1.bf16.msra.mxu0 %v2830
        %2840 = vmatprep.subr.bf16.mxu0 0
        %2841 = vmatpush1.bf16.msra.mxu0 0
        %2842 = vmatprep.subr.bf16.mxu0 0
        %2843 = vmatpush1.bf16.msra.mxu0 0
        %2844 = vmatprep.subr.bf16.mxu0 0
        %2845 = vmatpush1.bf16.msra.mxu0 0
        %2846 = vmatprep.subr.bf16.mxu0 0
        %2847 = vmatpush1.bf16.msra.mxu0 0
        %2848 = vmatprep.subr.bf16.mxu0 0
        %2849 = vmatpush1.bf16.msra.mxu0 0
        %2850 = vmatprep.subr.bf16.mxu0 0
        %2851 = vmatpush1.bf16.msra.mxu0 0
        %2852 = vmatprep.subr.bf16.mxu0 0
        %2853 = vmatpush1.bf16.msra.mxu0 0
        %2854 = vmatprep.subr.bf16.mxu0 0
        %2855 = vmatpush1.bf16.msra.mxu0 0
        %2856 = vmatprep.subr.bf16.mxu0 0
        %2857 = vmatpush1.bf16.msra.mxu0 0
        %2858 = vmatprep.subr.bf16.mxu0 0
        %2859 = vmatpush1.bf16.msra.mxu0 0
        %2860 = vmatprep.subr.bf16.mxu0 0
        %2861 = vmatpush1.bf16.msra.mxu0 0
        %2862 = vmatprep.subr.bf16.mxu0 0
        %2863 = vmatpush1.bf16.msra.mxu0 0
        %2864 = vmatprep.subr.bf16.mxu0 0
        %2865 = vmatpush1.bf16.msra.mxu0 0
        %2866 = vmatprep.subr.bf16.mxu0 0
        %2867 = vmatpush1.bf16.msra.mxu0 0
        %2868 = vmatprep.mubr.bf16.mxu0 0
        %2869 = vmatmul.mubr.bf16.gmra.mrb[0].mxu0 %v2834
        %v2870 = vpop.f32.mrb[0].mxu0
        %v2871 = vadd.f32 %v2819, %v2870
        %v2872 = vpop.f32.mrb[0].mxu0
        %v2873 = vpop.f32.mrb[0].mxu0
        %v2874 = vadd.f32 %v2819, %v2873
        %v2875 = vpop.f32.mrb[0].mxu0
        %2876 = vdwg.mxu0
        %v2877 = vmul.f32 %v2871, 0.35355338
        %v2878 = vmul.f32 %v2874, 0.35355338
        %2881 = vrot.lane.b32.xlu0 %v2871, 96
        %v2882 = vpop.permute.xlu0 %2881
        %2883 = vrot.lane.b32.xlu0 %v2874, 96
        %v2884 = vpop.permute.xlu0 %2883
        %v2886 = vsel %vm1631, %v2877, 0
        %v2889 = vsel %vm1631, %v2878, 0
        %v2891 = vsel %vm1631, %v2882, 0
        %v2893 = vsel %vm1631, %v2884, 0
        %2895 = vmatprep.subr.mxu0 0.0
        %2896 = vmatpush1.xpose.msra.mxu0 %v2891
        %2897 = vmatprep.subr.mxu0 0.0
        %2898 = vmatpush1.xpose.msra.mxu0 %v2893
        %2899 = vmatprep.subr.mxu0 0.0
        %2900 = vmatpush1.xpose.msra.mxu0 0.0
        %2901 = vmatprep.subr.mxu0 0.0
        %2902 = vmatpush1.xpose.msra.mxu0 0.0
        %2903 = vmatprep.subr.mxu0 0.0
        %2904 = vmatpush1.xpose.msra.mxu0 0.0
        %2905 = vmatprep.subr.mxu0 0.0
        %2906 = vmatpush1.xpose.msra.mxu0 0.0
        %2907 = vmatprep.subr.mxu0 0.0
        %2908 = vmatpush1.xpose.msra.mxu0 0.0
        %2909 = vmatprep.subr.mxu0 0.0
        %2910 = vmatpush1.xpose.msra.mxu0 0.0
        %2911 = vmatprep.subr.mxu0 0.0
        %2912 = vmatpush1.xpose.msra.mxu0 0.0
        %2913 = vmatprep.subr.mxu0 0.0
        %2914 = vmatpush1.xpose.msra.mxu0 0.0
        %2915 = vmatprep.subr.mxu0 0.0
        %2916 = vmatpush1.xpose.msra.mxu0 0.0
        %2917 = vmatprep.subr.mxu0 0.0
        %2918 = vmatpush1.xpose.msra.mxu0 0.0
        %2919 = vmatprep.subr.mxu0 0.0
        %2920 = vmatpush1.xpose.msra.mxu0 0.0
        %2921 = vmatprep.subr.mxu0 0.0
        %2922 = vmatpush1.xpose.msra.mxu0 0.0
        %2923 = vmatprep.subr.mxu0 0.0
        %2924 = vmatpush1.xpose.msra.mxu0 0.0
        %2925 = vmatprep.subr.mxu0 0.0
        %2926 = vmatpush1.xpose.msra.mxu0 0.0
        %2927 = vmatprep.subr.mxu0 0.0
        %2928 = vmatpush1.xpose.msra.mxu0 0.0
        %2929 = vmatprep.subr.mxu0 0.0
        %2930 = vmatpush1.xpose.msra.mxu0 0.0
        %2931 = vmatprep.subr.mxu0 0.0
        %2932 = vmatpush1.xpose.msra.mxu0 0.0
        %2933 = vmatprep.subr.mxu0 0.0
        %2934 = vmatpush1.xpose.msra.mxu0 0.0
        %2935 = vmatprep.subr.mxu0 0.0
        %2936 = vmatpush1.xpose.msra.mxu0 0.0
        %2937 = vmatprep.subr.mxu0 0.0
        %2938 = vmatpush1.xpose.msra.mxu0 0.0
        %2939 = vmatprep.subr.mxu0 0.0
        %2940 = vmatpush1.xpose.msra.mxu0 0.0
        %2941 = vmatprep.subr.mxu0 0.0
        %2942 = vmatpush1.xpose.msra.mxu0 0.0
        %2943 = vmatprep.subr.mxu0 0.0
        %2944 = vmatpush1.xpose.msra.mxu0 0.0
        %2945 = vmatprep.subr.mxu0 0.0
        %2946 = vmatpush1.xpose.msra.mxu0 0.0
        %2947 = vmatprep.subr.mxu0 0.0
        %2948 = vmatpush1.xpose.msra.mxu0 0.0
        %2949 = vmatprep.subr.mxu0 0.0
        %2950 = vmatpush1.xpose.msra.mxu0 0.0
        %2951 = vmatprep.subr.mxu0 0.0
        %2952 = vmatpush1.xpose.msra.mxu0 0.0
        %2953 = vmatprep.subr.mxu0 0.0
        %2954 = vmatpush1.xpose.msra.mxu0 0.0
        %2955 = vmatprep.subr.mxu0 0.0
        %2956 = vmatpush1.xpose.msra.mxu0 0.0
        %2957 = vmatprep.subr.mxu0 0.0
        %2958 = vmatpush1.xpose.msra.mxu0 0.0
        %2959 = vmatprep.mubr.f32.mxu0 0.0
        %2960 = vmatmul.mubr.f32.gmra.mrb[0].mxu0 %v2886
        %v2961 = vpop.f32.mrb[0].mxu0
        %v2962 = vadd.f32 %v1514, %v2961
        %v2963 = vpop.f32.mrb[0].mxu0
        %2964 = vmatprep.mubr.f32.mxu0 0.0
        %2965 = vmatmul.mubr.f32.gmra.mrb[0].mxu0 %v2889
        %v2966 = vpop.f32.mrb[0].mxu0
        %v2967 = vadd.f32 %v1515, %v2966
        %v2968 = vpop.f32.mrb[0].mxu0
        %2969 = vdwg.mxu0
        %v2970 = vsel %vm1717, %v2962, -inf
        %2971 = vmax.xlane.f32.xlu0 %v2970
        %v2972 = vpop.xlane.xlu0 %2971
        %v2973 = vsel %vm1717, %v2967, -inf
        %2974 = vmax.xlane.f32.xlu0 %v2973
        %v2975 = vpop.xlane.xlu0 %2974
        %v2976 = vsub.f32 %v2962, %v2972
        %v2977 = vsub.f32 %v2967, %v2975
        %v2978 = vmul.f32 %v2976, 1.442695
        %v2979 = vpow.pop %v2978
        %v2980 = vmul.f32 %v2977, 1.442695
        %v2981 = vpow.pop %v2980
        %v2982 = vsel %vm1717, %v2979, 0.0
        %2983 = vadd.xlane.f32.xlu0 %v2982
        %v2984 = vpop.xlane.xlu0 %2983
        %v2985 = vsel %vm1717, %v2981, 0.0
        %2986 = vadd.xlane.f32.xlu0 %v2985
        %v2987 = vpop.xlane.xlu0 %2986
        %v2988 = vrcp.pop %v2984
        %v2989 = vmul.f32 %v2979, %v2988
        %v2990 = vrcp.pop %v2987
        %v2991 = vmul.f32 %v2981, %v2990
        %2992 = vrot.lane.b32.xlu0 %v2871, 64
        %v2993 = vpop.permute.xlu0 %2992
        %2994 = vrot.lane.b32.xlu0 %v2874, 64
        %v2995 = vpop.permute.xlu0 %2994
        %v2999 = vsel %vm1717, %v2989, 0
        %v3002 = vsel %vm1717, %v2991, 0
        %3004 = vmatprep.subr.mxu0 0.0
        %3005 = vmatpush1.msra.mxu0 %v2993
        %3006 = vmatprep.subr.mxu0 0.0
        %3007 = vmatpush1.msra.mxu0 %v2995
        %3008 = vmatprep.subr.mxu0 0.0
        %3009 = vmatpush1.msra.mxu0 0.0
        %3010 = vmatprep.subr.mxu0 0.0
        %3011 = vmatpush1.msra.mxu0 0.0
        %3012 = vmatprep.subr.mxu0 0.0
        %3013 = vmatpush1.msra.mxu0 0.0
        %3014 = vmatprep.subr.mxu0 0.0
        %3015 = vmatpush1.msra.mxu0 0.0
        %3016 = vmatprep.subr.mxu0 0.0
        %3017 = vmatpush1.msra.mxu0 0.0
        %3018 = vmatprep.subr.mxu0 0.0
        %3019 = vmatpush1.msra.mxu0 0.0
        %3020 = vmatprep.subr.mxu0 0.0
        %3021 = vmatpush1.msra.mxu0 0.0
        %3022 = vmatprep.subr.mxu0 0.0
        %3023 = vmatpush1.msra.mxu0 0.0
        %3024 = vmatprep.subr.mxu0 0.0
        %3025 = vmatpush1.msra.mxu0 0.0
        %3026 = vmatprep.subr.mxu0 0.0
        %3027 = vmatpush1.msra.mxu0 0.0
        %3028 = vmatprep.subr.mxu0 0.0
        %3029 = vmatpush1.msra.mxu0 0.0
        %3030 = vmatprep.subr.mxu0 0.0
        %3031 = vmatpush1.msra.mxu0 0.0
        %3032 = vmatprep.subr.mxu0 0.0
        %3033 = vmatpush1.msra.mxu0 0.0
        %3034 = vmatprep.subr.mxu0 0.0
        %3035 = vmatpush1.msra.mxu0 0.0
        %3036 = vmatprep.subr.mxu0 0.0
        %3037 = vmatpush1.msra.mxu0 0.0
        %3038 = vmatprep.subr.mxu0 0.0
        %3039 = vmatpush1.msra.mxu0 0.0
        %3040 = vmatprep.subr.mxu0 0.0
        %3041 = vmatpush1.msra.mxu0 0.0
        %3042 = vmatprep.subr.mxu0 0.0
        %3043 = vmatpush1.msra.mxu0 0.0
        %3044 = vmatprep.subr.mxu0 0.0
        %3045 = vmatpush1.msra.mxu0 0.0
        %3046 = vmatprep.subr.mxu0 0.0
        %3047 = vmatpush1.msra.mxu0 0.0
        %3048 = vmatprep.subr.mxu0 0.0
        %3049 = vmatpush1.msra.mxu0 0.0
        %3050 = vmatprep.subr.mxu0 0.0
        %3051 = vmatpush1.msra.mxu0 0.0
        %3052 = vmatprep.subr.mxu0 0.0
        %3053 = vmatpush1.msra.mxu0 0.0
        %3054 = vmatprep.subr.mxu0 0.0
        %3055 = vmatpush1.msra.mxu0 0.0
        %3056 = vmatprep.subr.mxu0 0.0
        %3057 = vmatpush1.msra.mxu0 0.0
        %3058 = vmatprep.subr.mxu0 0.0
        %3059 = vmatpush1.msra.mxu0 0.0
        %3060 = vmatprep.subr.mxu0 0.0
        %3061 = vmatpush1.msra.mxu0 0.0
        %3062 = vmatprep.subr.mxu0 0.0
        %3063 = vmatpush1.msra.mxu0 0.0
        %3064 = vmatprep.subr.mxu0 0.0
        %3065 = vmatpush1.msra.mxu0 0.0
        %3066 = vmatprep.subr.mxu0 0.0
        %3067 = vmatpush1.msra.mxu0 0.0
        %3068 = vmatprep.mubr.f32.mxu0 0.0
        %3069 = vmatmul.mubr.f32.gmra.mrb[0].mxu0 %v2999
        %v3070 = vpop.f32.mrb[0].mxu0
        %v3071 = vadd.f32 0.0, %v3070
        %v3072 = vpop.f32.mrb[0].mxu0
        %3073 = vmatprep.mubr.f32.mxu0 0.0
        %3074 = vmatmul.mubr.f32.gmra.mrb[0].mxu0 %v3002
        %v3075 = vpop.f32.mrb[0].mxu0
        %v3076 = vadd.f32 0.0, %v3075
        %v3077 = vpop.f32.mrb[0].mxu0
        %3078 = vdwg.mxu0
        %3079 = vrot.lane.b32.xlu0 %v2877, 120
        %v3080 = vpop.permute.xlu0 %3079
        %3081 = vrot.lane.b32.xlu0 %v2878, 120
        %v3082 = vpop.permute.xlu0 %3081
        %3083 = vrot.lane.b32.xlu0 %v2871, 88
        %v3084 = vpop.permute.xlu0 %3083
        %3085 = vrot.lane.b32.xlu0 %v2874, 88
        %v3086 = vpop.permute.xlu0 %3085
        %v3087 = vsel %vm1631, %v3080, 0
        %v3089 = vsel %vm1631, %v3082, 0
        %v3091 = vsel %vm1631, %v3084, 0
        %v3093 = vsel %vm1631, %v3086, 0
        %3095 = vmatprep.subr.mxu0 0.0
        %3096 = vmatpush1.xpose.msra.mxu0 %v3091
        %3097 = vmatprep.subr.mxu0 0.0
        %3098 = vmatpush1.xpose.msra.mxu0 %v3093
        %3099 = vmatprep.subr.mxu0 0.0
        %3100 = vmatpush1.xpose.msra.mxu0 0.0
        %3101 = vmatprep.subr.mxu0 0.0
        %3102 = vmatpush1.xpose.msra.mxu0 0.0
        %3103 = vmatprep.subr.mxu0 0.0
        %3104 = vmatpush1.xpose.msra.mxu0 0.0
        %3105 = vmatprep.subr.mxu0 0.0
        %3106 = vmatpush1.xpose.msra.mxu0 0.0
        %3107 = vmatprep.subr.mxu0 0.0
        %3108 = vmatpush1.xpose.msra.mxu0 0.0
        %3109 = vmatprep.subr.mxu0 0.0
        %3110 = vmatpush1.xpose.msra.mxu0 0.0
        %3111 = vmatprep.subr.mxu0 0.0
        %3112 = vmatpush1.xpose.msra.mxu0 0.0
        %3113 = vmatprep.subr.mxu0 0.0
        %3114 = vmatpush1.xpose.msra.mxu0 0.0
        %3115 = vmatprep.subr.mxu0 0.0
        %3116 = vmatpush1.xpose.msra.mxu0 0.0
        %3117 = vmatprep.subr.mxu0 0.0
        %3118 = vmatpush1.xpose.msra.mxu0 0.0
        %3119 = vmatprep.subr.mxu0 0.0
        %3120 = vmatpush1.xpose.msra.mxu0 0.0
        %3121 = vmatprep.subr.mxu0 0.0
        %3122 = vmatpush1.xpose.msra.mxu0 0.0
        %3123 = vmatprep.subr.mxu0 0.0
        %3124 = vmatpush1.xpose.msra.mxu0 0.0
        %3125 = vmatprep.subr.mxu0 0.0
        %3126 = vmatpush1.xpose.msra.mxu0 0.0
        %3127 = vmatprep.subr.mxu0 0.0
        %3128 = vmatpush1.xpose.msra.mxu0 0.0
        %3129 = vmatprep.subr.mxu0 0.0
        %3130 = vmatpush1.xpose.msra.mxu0 0.0
        %3131 = vmatprep.subr.mxu0 0.0
        %3132 = vmatpush1.xpose.msra.mxu0 0.0
        %3133 = vmatprep.subr.mxu0 0.0
        %3134 = vmatpush1.xpose.msra.mxu0 0.0
        %3135 = vmatprep.subr.mxu0 0.0
        %3136 = vmatpush1.xpose.msra.mxu0 0.0
        %3137 = vmatprep.subr.mxu0 0.0
        %3138 = vmatpush1.xpose.msra.mxu0 0.0
        %3139 = vmatprep.subr.mxu0 0.0
        %3140 = vmatpush1.xpose.msra.mxu0 0.0
        %3141 = vmatprep.subr.mxu0 0.0
        %3142 = vmatpush1.xpose.msra.mxu0 0.0
        %3143 = vmatprep.subr.mxu0 0.0
        %3144 = vmatpush1.xpose.msra.mxu0 0.0
        %3145 = vmatprep.subr.mxu0 0.0
        %3146 = vmatpush1.xpose.msra.mxu0 0.0
        %3147 = vmatprep.subr.mxu0 0.0
        %3148 = vmatpush1.xpose.msra.mxu0 0.0
        %3149 = vmatprep.subr.mxu0 0.0
        %3150 = vmatpush1.xpose.msra.mxu0 0.0
        %3151 = vmatprep.subr.mxu0 0.0
        %3152 = vmatpush1.xpose.msra.mxu0 0.0
        %3153 = vmatprep.subr.mxu0 0.0
        %3154 = vmatpush1.xpose.msra.mxu0 0.0
        %3155 = vmatprep.subr.mxu0 0.0
        %3156 = vmatpush1.xpose.msra.mxu0 0.0
        %3157 = vmatprep.subr.mxu0 0.0
        %3158 = vmatpush1.xpose.msra.mxu0 0.0
        %3159 = vmatprep.mubr.f32.mxu0 0.0
        %3160 = vmatmul.mubr.f32.gmra.mrb[0].mxu0 %v3087
        %v3161 = vpop.f32.mrb[0].mxu0
        %v3162 = vadd.f32 %v1514, %v3161
        %v3163 = vpop.f32.mrb[0].mxu0
        %3164 = vmatprep.mubr.f32.mxu0 0.0
        %3165 = vmatmul.mubr.f32.gmra.mrb[0].mxu0 %v3089
        %v3166 = vpop.f32.mrb[0].mxu0
        %v3167 = vadd.f32 %v1515, %v3166
        %v3168 = vpop.f32.mrb[0].mxu0
        %3169 = vdwg.mxu0
        %v3170 = vsel %vm1717, %v3162, -inf
        %3171 = vmax.xlane.f32.xlu0 %v3170
        %v3172 = vpop.xlane.xlu0 %3171
        %v3173 = vsel %vm1717, %v3167, -inf
        %3174 = vmax.xlane.f32.xlu0 %v3173
        %v3175 = vpop.xlane.xlu0 %3174
        %v3176 = vsub.f32 %v3162, %v3172
        %v3177 = vsub.f32 %v3167, %v3175
        %v3178 = vmul.f32 %v3176, 1.442695
        %v3179 = vpow.pop %v3178
        %v3180 = vmul.f32 %v3177, 1.442695
        %v3181 = vpow.pop %v3180
        %v3182 = vsel %vm1717, %v3179, 0.0
        %3183 = vadd.xlane.f32.xlu0 %v3182
        %v3184 = vpop.xlane.xlu0 %3183
        %v3185 = vsel %vm1717, %v3181, 0.0
        %3186 = vadd.xlane.f32.xlu0 %v3185
        %v3187 = vpop.xlane.xlu0 %3186
        %v3188 = vrcp.pop %v3184
        %v3189 = vmul.f32 %v3179, %v3188
        %v3190 = vrcp.pop %v3187
        %v3191 = vmul.f32 %v3181, %v3190
        %3192 = vrot.lane.b32.xlu0 %v2871, 56
        %v3193 = vpop.permute.xlu0 %3192
        %3194 = vrot.lane.b32.xlu0 %v2874, 56
        %v3195 = vpop.permute.xlu0 %3194
        %v3199 = vsel %vm1717, %v3189, 0
        %v3202 = vsel %vm1717, %v3191, 0
        %3204 = vmatprep.subr.mxu0 0.0
        %3205 = vmatpush1.msra.mxu0 %v3193
        %3206 = vmatprep.subr.mxu0 0.0
        %3207 = vmatpush1.msra.mxu0 %v3195
        %3208 = vmatprep.subr.mxu0 0.0
        %3209 = vmatpush1.msra.mxu0 0.0
        %3210 = vmatprep.subr.mxu0 0.0
        %3211 = vmatpush1.msra.mxu0 0.0
        %3212 = vmatprep.subr.mxu0 0.0
        %3213 = vmatpush1.msra.mxu0 0.0
        %3214 = vmatprep.subr.mxu0 0.0
        %3215 = vmatpush1.msra.mxu0 0.0
        %3216 = vmatprep.subr.mxu0 0.0
        %3217 = vmatpush1.msra.mxu0 0.0
        %3218 = vmatprep.subr.mxu0 0.0
        %3219 = vmatpush1.msra.mxu0 0.0
        %3220 = vmatprep.subr.mxu0 0.0
        %3221 = vmatpush1.msra.mxu0 0.0
        %3222 = vmatprep.subr.mxu0 0.0
        %3223 = vmatpush1.msra.mxu0 0.0
        %3224 = vmatprep.subr.mxu0 0.0
        %3225 = vmatpush1.msra.mxu0 0.0
        %3226 = vmatprep.subr.mxu0 0.0
        %3227 = vmatpush1.msra.mxu0 0.0
        %3228 = vmatprep.subr.mxu0 0.0
        %3229 = vmatpush1.msra.mxu0 0.0
        %3230 = vmatprep.subr.mxu0 0.0
        %3231 = vmatpush1.msra.mxu0 0.0
        %3232 = vmatprep.subr.mxu0 0.0
        %3233 = vmatpush1.msra.mxu0 0.0
        %3234 = vmatprep.subr.mxu0 0.0
        %3235 = vmatpush1.msra.mxu0 0.0
        %3236 = vmatprep.subr.mxu0 0.0
        %3237 = vmatpush1.msra.mxu0 0.0
        %3238 = vmatprep.subr.mxu0 0.0
        %3239 = vmatpush1.msra.mxu0 0.0
        %3240 = vmatprep.subr.mxu0 0.0
        %3241 = vmatpush1.msra.mxu0 0.0
        %3242 = vmatprep.subr.mxu0 0.0
        %3243 = vmatpush1.msra.mxu0 0.0
        %3244 = vmatprep.subr.mxu0 0.0
        %3245 = vmatpush1.msra.mxu0 0.0
        %3246 = vmatprep.subr.mxu0 0.0
        %3247 = vmatpush1.msra.mxu0 0.0
        %3248 = vmatprep.subr.mxu0 0.0
        %3249 = vmatpush1.msra.mxu0 0.0
        %3250 = vmatprep.subr.mxu0 0.0
        %3251 = vmatpush1.msra.mxu0 0.0
        %3252 = vmatprep.subr.mxu0 0.0
        %3253 = vmatpush1.msra.mxu0 0.0
        %3254 = vmatprep.subr.mxu0 0.0
        %3255 = vmatpush1.msra.mxu0 0.0
        %3256 = vmatprep.subr.mxu0 0.0
        %3257 = vmatpush1.msra.mxu0 0.0
        %3258 = vmatprep.subr.mxu0 0.0
        %3259 = vmatpush1.msra.mxu0 0.0
        %3260 = vmatprep.subr.mxu0 0.0
        %3261 = vmatpush1.msra.mxu0 0.0
        %3262 = vmatprep.subr.mxu0 0.0
        %3263 = vmatpush1.msra.mxu0 0.0
        %3264 = vmatprep.subr.mxu0 0.0
        %3265 = vmatpush1.msra.mxu0 0.0
        %3266 = vmatprep.subr.mxu0 0.0
        %3267 = vmatpush1.msra.mxu0 0.0
        %3268 = vmatprep.mubr.f32.mxu0 0.0
        %3269 = vmatmul.mubr.f32.gmra.mrb[0].mxu0 %v3199
        %v3270 = vpop.f32.mrb[0].mxu0
        %v3271 = vadd.f32 0.0, %v3270
        %v3272 = vpop.f32.mrb[0].mxu0
        %3273 = vmatprep.mubr.f32.mxu0 0.0
        %3274 = vmatmul.mubr.f32.gmra.mrb[0].mxu0 %v3202
        %v3275 = vpop.f32.mrb[0].mxu0
        %v3276 = vadd.f32 0.0, %v3275
        %v3277 = vpop.f32.mrb[0].mxu0
        %3278 = vdwg.mxu0
        %3279 = vrot.lane.b32.xlu0 %v2877, 112
        %v3280 = vpop.permute.xlu0 %3279
        %3281 = vrot.lane.b32.xlu0 %v2878, 112
        %v3282 = vpop.permute.xlu0 %3281
        %3283 = vrot.lane.b32.xlu0 %v2871, 80
        %v3284 = vpop.permute.xlu0 %3283
        %3285 = vrot.lane.b32.xlu0 %v2874, 80
        %v3286 = vpop.permute.xlu0 %3285
        %v3287 = vsel %vm1631, %v3280, 0
        %v3289 = vsel %vm1631, %v3282, 0
        %v3291 = vsel %vm1631, %v3284, 0
        %v3293 = vsel %vm1631, %v3286, 0
        %3295 = vmatprep.subr.mxu0 0.0
        %3296 = vmatpush1.xpose.msra.mxu0 %v3291
        %3297 = vmatprep.subr.mxu0 0.0
        %3298 = vmatpush1.xpose.msra.mxu0 %v3293
        %3299 = vmatprep.subr.mxu0 0.0
        %3300 = vmatpush1.xpose.msra.mxu0 0.0
        %3301 = vmatprep.subr.mxu0 0.0
        %3302 = vmatpush1.xpose.msra.mxu0 0.0
        %3303 = vmatprep.subr.mxu0 0.0
        %3304 = vmatpush1.xpose.msra.mxu0 0.0
        %3305 = vmatprep.subr.mxu0 0.0
        %3306 = vmatpush1.xpose.msra.mxu0 0.0
        %3307 = vmatprep.subr.mxu0 0.0
        %3308 = vmatpush1.xpose.msra.mxu0 0.0
        %3309 = vmatprep.subr.mxu0 0.0
        %3310 = vmatpush1.xpose.msra.mxu0 0.0
        %3311 = vmatprep.subr.mxu0 0.0
        %3312 = vmatpush1.xpose.msra.mxu0 0.0
        %3313 = vmatprep.subr.mxu0 0.0
        %3314 = vmatpush1.xpose.msra.mxu0 0.0
        %3315 = vmatprep.subr.mxu0 0.0
        %3316 = vmatpush1.xpose.msra.mxu0 0.0
        %3317 = vmatprep.subr.mxu0 0.0
        %3318 = vmatpush1.xpose.msra.mxu0 0.0
        %3319 = vmatprep.subr.mxu0 0.0
        %3320 = vmatpush1.xpose.msra.mxu0 0.0
        %3321 = vmatprep.subr.mxu0 0.0
        %3322 = vmatpush1.xpose.msra.mxu0 0.0
        %3323 = vmatprep.subr.mxu0 0.0
        %3324 = vmatpush1.xpose.msra.mxu0 0.0
        %3325 = vmatprep.subr.mxu0 0.0
        %3326 = vmatpush1.xpose.msra.mxu0 0.0
        %3327 = vmatprep.subr.mxu0 0.0
        %3328 = vmatpush1.xpose.msra.mxu0 0.0
        %3329 = vmatprep.subr.mxu0 0.0
        %3330 = vmatpush1.xpose.msra.mxu0 0.0
        %3331 = vmatprep.subr.mxu0 0.0
        %3332 = vmatpush1.xpose.msra.mxu0 0.0
        %3333 = vmatprep.subr.mxu0 0.0
        %3334 = vmatpush1.xpose.msra.mxu0 0.0
        %3335 = vmatprep.subr.mxu0 0.0
        %3336 = vmatpush1.xpose.msra.mxu0 0.0
        %3337 = vmatprep.subr.mxu0 0.0
        %3338 = vmatpush1.xpose.msra.mxu0 0.0
        %3339 = vmatprep.subr.mxu0 0.0
        %3340 = vmatpush1.xpose.msra.mxu0 0.0
        %3341 = vmatprep.subr.mxu0 0.0
        %3342 = vmatpush1.xpose.msra.mxu0 0.0
        %3343 = vmatprep.subr.mxu0 0.0
        %3344 = vmatpush1.xpose.msra.mxu0 0.0
        %3345 = vmatprep.subr.mxu0 0.0
        %3346 = vmatpush1.xpose.msra.mxu0 0.0
        %3347 = vmatprep.subr.mxu0 0.0
        %3348 = vmatpush1.xpose.msra.mxu0 0.0
        %3349 = vmatprep.subr.mxu0 0.0
        %3350 = vmatpush1.xpose.msra.mxu0 0.0
        %3351 = vmatprep.subr.mxu0 0.0
        %3352 = vmatpush1.xpose.msra.mxu0 0.0
        %3353 = vmatprep.subr.mxu0 0.0
        %3354 = vmatpush1.xpose.msra.mxu0 0.0
        %3355 = vmatprep.subr.mxu0 0.0
        %3356 = vmatpush1.xpose.msra.mxu0 0.0
        %3357 = vmatprep.subr.mxu0 0.0
        %3358 = vmatpush1.xpose.msra.mxu0 0.0
        %3359 = vmatprep.mubr.f32.mxu0 0.0
        %3360 = vmatmul.mubr.f32.gmra.mrb[0].mxu0 %v3287
        %v3361 = vpop.f32.mrb[0].mxu0
        %v3362 = vadd.f32 %v1514, %v3361
        %v3363 = vpop.f32.mrb[0].mxu0
        %3364 = vmatprep.mubr.f32.mxu0 0.0
        %3365 = vmatmul.mubr.f32.gmra.mrb[0].mxu0 %v3289
        %v3366 = vpop.f32.mrb[0].mxu0
        %v3367 = vadd.f32 %v1515, %v3366
        %v3368 = vpop.f32.mrb[0].mxu0
        %3369 = vdwg.mxu0
        %v3370 = vsel %vm1717, %v3362, -inf
        %3371 = vmax.xlane.f32.xlu0 %v3370
        %v3372 = vpop.xlane.xlu0 %3371
        %v3373 = vsel %vm1717, %v3367, -inf
        %3374 = vmax.xlane.f32.xlu0 %v3373
        %v3375 = vpop.xlane.xlu0 %3374
        %v3376 = vsub.f32 %v3362, %v3372
        %v3377 = vsub.f32 %v3367, %v3375
        %v3378 = vmul.f32 %v3376, 1.442695
        %v3379 = vpow.pop %v3378
        %v3380 = vmul.f32 %v3377, 1.442695
        %v3381 = vpow.pop %v3380
        %v3382 = vsel %vm1717, %v3379, 0.0
        %3383 = vadd.xlane.f32.xlu0 %v3382
        %v3384 = vpop.xlane.xlu0 %3383
        %v3385 = vsel %vm1717, %v3381, 0.0
        %3386 = vadd.xlane.f32.xlu0 %v3385
        %v3387 = vpop.xlane.xlu0 %3386
        %v3388 = vrcp.pop %v3384
        %v3389 = vmul.f32 %v3379, %v3388
        %v3390 = vrcp.pop %v3387
        %v3391 = vmul.f32 %v3381, %v3390
        %3392 = vrot.lane.b32.xlu0 %v2871, 48
        %v3393 = vpop.permute.xlu0 %3392
        %3394 = vrot.lane.b32.xlu0 %v2874, 48
        %v3395 = vpop.permute.xlu0 %3394
        %v3399 = vsel %vm1717, %v3389, 0
        %v3402 = vsel %vm1717, %v3391, 0
        %3404 = vmatprep.subr.mxu0 0.0
        %3405 = vmatpush1.msra.mxu0 %v3393
        %3406 = vmatprep.subr.mxu0 0.0
        %3407 = vmatpush1.msra.mxu0 %v3395
        %3408 = vmatprep.subr.mxu0 0.0
        %3409 = vmatpush1.msra.mxu0 0.0
        %3410 = vmatprep.subr.mxu0 0.0
        %3411 = vmatpush1.msra.mxu0 0.0
        %3412 = vmatprep.subr.mxu0 0.0
        %3413 = vmatpush1.msra.mxu0 0.0
        %3414 = vmatprep.subr.mxu0 0.0
        %3415 = vmatpush1.msra.mxu0 0.0
        %3416 = vmatprep.subr.mxu0 0.0
        %3417 = vmatpush1.msra.mxu0 0.0
        %3418 = vmatprep.subr.mxu0 0.0
        %3419 = vmatpush1.msra.mxu0 0.0
        %3420 = vmatprep.subr.mxu0 0.0
        %3421 = vmatpush1.msra.mxu0 0.0
        %3422 = vmatprep.subr.mxu0 0.0
        %3423 = vmatpush1.msra.mxu0 0.0
        %3424 = vmatprep.subr.mxu0 0.0
        %3425 = vmatpush1.msra.mxu0 0.0
        %3426 = vmatprep.subr.mxu0 0.0
        %3427 = vmatpush1.msra.mxu0 0.0
        %3428 = vmatprep.subr.mxu0 0.0
        %3429 = vmatpush1.msra.mxu0 0.0
        %3430 = vmatprep.subr.mxu0 0.0
        %3431 = vmatpush1.msra.mxu0 0.0
        %3432 = vmatprep.subr.mxu0 0.0
        %3433 = vmatpush1.msra.mxu0 0.0
        %3434 = vmatprep.subr.mxu0 0.0
        %3435 = vmatpush1.msra.mxu0 0.0
        %3436 = vmatprep.subr.mxu0 0.0
        %3437 = vmatpush1.msra.mxu0 0.0
        %3438 = vmatprep.subr.mxu0 0.0
        %3439 = vmatpush1.msra.mxu0 0.0
        %3440 = vmatprep.subr.mxu0 0.0
        %3441 = vmatpush1.msra.mxu0 0.0
        %3442 = vmatprep.subr.mxu0 0.0
        %3443 = vmatpush1.msra.mxu0 0.0
        %3444 = vmatprep.subr.mxu0 0.0
        %3445 = vmatpush1.msra.mxu0 0.0
        %3446 = vmatprep.subr.mxu0 0.0
        %3447 = vmatpush1.msra.mxu0 0.0
        %3448 = vmatprep.subr.mxu0 0.0
        %3449 = vmatpush1.msra.mxu0 0.0
        %3450 = vmatprep.subr.mxu0 0.0
        %3451 = vmatpush1.msra.mxu0 0.0
        %3452 = vmatprep.subr.mxu0 0.0
        %3453 = vmatpush1.msra.mxu0 0.0
        %3454 = vmatprep.subr.mxu0 0.0
        %3455 = vmatpush1.msra.mxu0 0.0
        %3456 = vmatprep.subr.mxu0 0.0
        %3457 = vmatpush1.msra.mxu0 0.0
        %3458 = vmatprep.subr.mxu0 0.0
        %3459 = vmatpush1.msra.mxu0 0.0
        %3460 = vmatprep.subr.mxu0 0.0
        %3461 = vmatpush1.msra.mxu0 0.0
        %3462 = vmatprep.subr.mxu0 0.0
        %3463 = vmatpush1.msra.mxu0 0.0
        %3464 = vmatprep.subr.mxu0 0.0
        %3465 = vmatpush1.msra.mxu0 0.0
        %3466 = vmatprep.subr.mxu0 0.0
        %3467 = vmatpush1.msra.mxu0 0.0
        %3468 = vmatprep.mubr.f32.mxu0 0.0
        %3469 = vmatmul.mubr.f32.gmra.mrb[0].mxu0 %v3399
        %v3470 = vpop.f32.mrb[0].mxu0
        %v3471 = vadd.f32 0.0, %v3470
        %v3472 = vpop.f32.mrb[0].mxu0
        %3473 = vmatprep.mubr.f32.mxu0 0.0
        %3474 = vmatmul.mubr.f32.gmra.mrb[0].mxu0 %v3402
        %v3475 = vpop.f32.mrb[0].mxu0
        %v3476 = vadd.f32 0.0, %v3475
        %v3477 = vpop.f32.mrb[0].mxu0
        %3478 = vdwg.mxu0
        %3479 = vrot.lane.b32.xlu0 %v2877, 104
        %v3480 = vpop.permute.xlu0 %3479
        %3481 = vrot.lane.b32.xlu0 %v2878, 104
        %v3482 = vpop.permute.xlu0 %3481
        %3483 = vrot.lane.b32.xlu0 %v2871, 72
        %v3484 = vpop.permute.xlu0 %3483
        %3485 = vrot.lane.b32.xlu0 %v2874, 72
        %v3486 = vpop.permute.xlu0 %3485
        %v3487 = vsel %vm1631, %v3480, 0
        %v3489 = vsel %vm1631, %v3482, 0
        %v3491 = vsel %vm1631, %v3484, 0
        %v3493 = vsel %vm1631, %v3486, 0
        %3495 = vmatprep.subr.mxu0 0.0
        %3496 = vmatpush1.xpose.msra.mxu0 %v3491
        %3497 = vmatprep.subr.mxu0 0.0
        %3498 = vmatpush1.xpose.msra.mxu0 %v3493
        %3499 = vmatprep.subr.mxu0 0.0
        %3500 = vmatpush1.xpose.msra.mxu0 0.0
        %3501 = vmatprep.subr.mxu0 0.0
        %3502 = vmatpush1.xpose.msra.mxu0 0.0
        %3503 = vmatprep.subr.mxu0 0.0
        %3504 = vmatpush1.xpose.msra.mxu0 0.0
        %3505 = vmatprep.subr.mxu0 0.0
        %3506 = vmatpush1.xpose.msra.mxu0 0.0
        %3507 = vmatprep.subr.mxu0 0.0
        %3508 = vmatpush1.xpose.msra.mxu0 0.0
        %3509 = vmatprep.subr.mxu0 0.0
        %3510 = vmatpush1.xpose.msra.mxu0 0.0
        %3511 = vmatprep.subr.mxu0 0.0
        %3512 = vmatpush1.xpose.msra.mxu0 0.0
        %3513 = vmatprep.subr.mxu0 0.0
        %3514 = vmatpush1.xpose.msra.mxu0 0.0
        %3515 = vmatprep.subr.mxu0 0.0
        %3516 = vmatpush1.xpose.msra.mxu0 0.0
        %3517 = vmatprep.subr.mxu0 0.0
        %3518 = vmatpush1.xpose.msra.mxu0 0.0
        %3519 = vmatprep.subr.mxu0 0.0
        %3520 = vmatpush1.xpose.msra.mxu0 0.0
        %3521 = vmatprep.subr.mxu0 0.0
        %3522 = vmatpush1.xpose.msra.mxu0 0.0
        %3523 = vmatprep.subr.mxu0 0.0
        %3524 = vmatpush1.xpose.msra.mxu0 0.0
        %3525 = vmatprep.subr.mxu0 0.0
        %3526 = vmatpush1.xpose.msra.mxu0 0.0
        %3527 = vmatprep.subr.mxu0 0.0
        %3528 = vmatpush1.xpose.msra.mxu0 0.0
        %3529 = vmatprep.subr.mxu0 0.0
        %3530 = vmatpush1.xpose.msra.mxu0 0.0
        %3531 = vmatprep.subr.mxu0 0.0
        %3532 = vmatpush1.xpose.msra.mxu0 0.0
        %3533 = vmatprep.subr.mxu0 0.0
        %3534 = vmatpush1.xpose.msra.mxu0 0.0
        %3535 = vmatprep.subr.mxu0 0.0
        %3536 = vmatpush1.xpose.msra.mxu0 0.0
        %3537 = vmatprep.subr.mxu0 0.0
        %3538 = vmatpush1.xpose.msra.mxu0 0.0
        %3539 = vmatprep.subr.mxu0 0.0
        %3540 = vmatpush1.xpose.msra.mxu0 0.0
        %3541 = vmatprep.subr.mxu0 0.0
        %3542 = vmatpush1.xpose.msra.mxu0 0.0
        %3543 = vmatprep.subr.mxu0 0.0
        %3544 = vmatpush1.xpose.msra.mxu0 0.0
        %3545 = vmatprep.subr.mxu0 0.0
        %3546 = vmatpush1.xpose.msra.mxu0 0.0
        %3547 = vmatprep.subr.mxu0 0.0
        %3548 = vmatpush1.xpose.msra.mxu0 0.0
        %3549 = vmatprep.subr.mxu0 0.0
        %3550 = vmatpush1.xpose.msra.mxu0 0.0
        %3551 = vmatprep.subr.mxu0 0.0
        %3552 = vmatpush1.xpose.msra.mxu0 0.0
        %3553 = vmatprep.subr.mxu0 0.0
        %3554 = vmatpush1.xpose.msra.mxu0 0.0
        %3555 = vmatprep.subr.mxu0 0.0
        %3556 = vmatpush1.xpose.msra.mxu0 0.0
        %3557 = vmatprep.subr.mxu0 0.0
        %3558 = vmatpush1.xpose.msra.mxu0 0.0
        %3559 = vmatprep.mubr.f32.mxu0 0.0
        %3560 = vmatmul.mubr.f32.gmra.mrb[0].mxu0 %v3487
        %v3561 = vpop.f32.mrb[0].mxu0
        %v3562 = vadd.f32 %v1514, %v3561
        %v3563 = vpop.f32.mrb[0].mxu0
        %3564 = vmatprep.mubr.f32.mxu0 0.0
        %3565 = vmatmul.mubr.f32.gmra.mrb[0].mxu0 %v3489
        %v3566 = vpop.f32.mrb[0].mxu0
        %v3567 = vadd.f32 %v1515, %v3566
        %v3568 = vpop.f32.mrb[0].mxu0
        %3569 = vdwg.mxu0
        %v3570 = vsel %vm1717, %v3562, -inf
        %3571 = vmax.xlane.f32.xlu0 %v3570
        %v3572 = vpop.xlane.xlu0 %3571
        %v3573 = vsel %vm1717, %v3567, -inf
        %3574 = vmax.xlane.f32.xlu0 %v3573
        %v3575 = vpop.xlane.xlu0 %3574
        %v3576 = vsub.f32 %v3562, %v3572
        %v3577 = vsub.f32 %v3567, %v3575
        %v3578 = vmul.f32 %v3576, 1.442695
        %v3579 = vpow.pop %v3578
        %v3580 = vmul.f32 %v3577, 1.442695
        %v3581 = vpow.pop %v3580
        %v3582 = vsel %vm1717, %v3579, 0.0
        %3583 = vadd.xlane.f32.xlu0 %v3582
        %v3584 = vpop.xlane.xlu0 %3583
        %v3585 = vsel %vm1717, %v3581, 0.0
        %3586 = vadd.xlane.f32.xlu0 %v3585
        %v3587 = vpop.xlane.xlu0 %3586
        %v3588 = vrcp.pop %v3584
        %v3589 = vmul.f32 %v3579, %v3588
        %v3590 = vrcp.pop %v3587
        %v3591 = vmul.f32 %v3581, %v3590
        %3592 = vrot.lane.b32.xlu0 %v2871, 40
        %v3593 = vpop.permute.xlu0 %3592
        %3594 = vrot.lane.b32.xlu0 %v2874, 40
        %v3595 = vpop.permute.xlu0 %3594
        %v3599 = vsel %vm1717, %v3589, 0
        %v3602 = vsel %vm1717, %v3591, 0
        %3604 = vmatprep.subr.mxu0 0.0
        %3605 = vmatpush1.msra.mxu0 %v3593
        %3606 = vmatprep.subr.mxu0 0.0
        %3607 = vmatpush1.msra.mxu0 %v3595
        %3608 = vmatprep.subr.mxu0 0.0
        %3609 = vmatpush1.msra.mxu0 0.0
        %3610 = vmatprep.subr.mxu0 0.0
        %3611 = vmatpush1.msra.mxu0 0.0
        %3612 = vmatprep.subr.mxu0 0.0
        %3613 = vmatpush1.msra.mxu0 0.0
        %3614 = vmatprep.subr.mxu0 0.0
        %3615 = vmatpush1.msra.mxu0 0.0
        %3616 = vmatprep.subr.mxu0 0.0
        %3617 = vmatpush1.msra.mxu0 0.0
        %3618 = vmatprep.subr.mxu0 0.0
        %3619 = vmatpush1.msra.mxu0 0.0
        %3620 = vmatprep.subr.mxu0 0.0
        %3621 = vmatpush1.msra.mxu0 0.0
        %3622 = vmatprep.subr.mxu0 0.0
        %3623 = vmatpush1.msra.mxu0 0.0
        %3624 = vmatprep.subr.mxu0 0.0
        %3625 = vmatpush1.msra.mxu0 0.0
        %3626 = vmatprep.subr.mxu0 0.0
        %3627 = vmatpush1.msra.mxu0 0.0
        %3628 = vmatprep.subr.mxu0 0.0
        %3629 = vmatpush1.msra.mxu0 0.0
        %3630 = vmatprep.subr.mxu0 0.0
        %3631 = vmatpush1.msra.mxu0 0.0
        %3632 = vmatprep.subr.mxu0 0.0
        %3633 = vmatpush1.msra.mxu0 0.0
        %3634 = vmatprep.subr.mxu0 0.0
        %3635 = vmatpush1.msra.mxu0 0.0
        %3636 = vmatprep.subr.mxu0 0.0
        %3637 = vmatpush1.msra.mxu0 0.0
        %3638 = vmatprep.subr.mxu0 0.0
        %3639 = vmatpush1.msra.mxu0 0.0
        %3640 = vmatprep.subr.mxu0 0.0
        %3641 = vmatpush1.msra.mxu0 0.0
        %3642 = vmatprep.subr.mxu0 0.0
        %3643 = vmatpush1.msra.mxu0 0.0
        %3644 = vmatprep.subr.mxu0 0.0
        %3645 = vmatpush1.msra.mxu0 0.0
        %3646 = vmatprep.subr.mxu0 0.0
        %3647 = vmatpush1.msra.mxu0 0.0
        %3648 = vmatprep.subr.mxu0 0.0
        %3649 = vmatpush1.msra.mxu0 0.0
        %3650 = vmatprep.subr.mxu0 0.0
        %3651 = vmatpush1.msra.mxu0 0.0
        %3652 = vmatprep.subr.mxu0 0.0
        %3653 = vmatpush1.msra.mxu0 0.0
        %3654 = vmatprep.subr.mxu0 0.0
        %3655 = vmatpush1.msra.mxu0 0.0
        %3656 = vmatprep.subr.mxu0 0.0
        %3657 = vmatpush1.msra.mxu0 0.0
        %3658 = vmatprep.subr.mxu0 0.0
        %3659 = vmatpush1.msra.mxu0 0.0
        %3660 = vmatprep.subr.mxu0 0.0
        %3661 = vmatpush1.msra.mxu0 0.0
        %3662 = vmatprep.subr.mxu0 0.0
        %3663 = vmatpush1.msra.mxu0 0.0
        %3664 = vmatprep.subr.mxu0 0.0
        %3665 = vmatpush1.msra.mxu0 0.0
        %3666 = vmatprep.subr.mxu0 0.0
        %3667 = vmatpush1.msra.mxu0 0.0
        %3668 = vmatprep.mubr.f32.mxu0 0.0
        %3669 = vmatmul.mubr.f32.gmra.mrb[0].mxu0 %v3599
        %v3670 = vpop.f32.mrb[0].mxu0
        %v3671 = vadd.f32 0.0, %v3670
        %v3672 = vpop.f32.mrb[0].mxu0
        %3673 = vmatprep.mubr.f32.mxu0 0.0
        %3674 = vmatmul.mubr.f32.gmra.mrb[0].mxu0 %v3602
        %v3675 = vpop.f32.mrb[0].mxu0
        %v3676 = vadd.f32 0.0, %v3675
        %v3677 = vpop.f32.mrb[0].mxu0
        %3678 = vdwg.mxu0
        %3681 = vrot.lane.b32.xlu0 %v3271, 8
        %v3682 = vpop.permute.xlu0 %3681
        %3683 = vrot.lane.b32.xlu0 %v3276, 8
        %v3684 = vpop.permute.xlu0 %3683
        %3689 = vrot.lane.b32.xlu0 %v3471, 16
        %v3690 = vpop.permute.xlu0 %3689
        %3691 = vrot.lane.b32.xlu0 %v3476, 16
        %v3692 = vpop.permute.xlu0 %3691
        %3697 = vrot.lane.b32.xlu0 %v3671, 24
        %v3698 = vpop.permute.xlu0 %3697
        %3699 = vrot.lane.b32.xlu0 %v3676, 24
        %v3700 = vpop.permute.xlu0 %3699
        %v3703 = vsel %vm1631, %v3071, %v3682
        %v3704 = vsel %vm1631, %v3076, %v3684
        %v3705 = vsel %vm1717, %v3703, %v3690
        %v3706 = vsel %vm1717, %v3704, %v3692
        %v3707 = vsel %vm2455, %v3705, %v3698
        %v3708 = vsel %vm2455, %v3706, %v3700
        %v3709 = vpack.c.bf16 %v3708, %v3707
        %s3710 = scalar_lea.vmem %s8, 16
        %v3711 = vld [vmem:[%s3710] sm:$0xf]
        %v3712 = vld [vmem:[%s3710 + $0x4] sm:$0xf]
        %v3713 = vld [vmem:[%s3710 + $0x8] sm:$0xf]
        %v3714 = vld [vmem:[%s3710 + $0xc] sm:$0xf]
        %s3715 = scalar_lea.vmem %s9, 1
        %v3716 = vld [vmem:[%s3715] sm:$0x1]
        %v3718 = vlaneseq
        %v3719 = vshrl.u32 %v3718, 7
        %v3720 = vsub.s32 0, %v3719
        %v3721 = vrot.slane %v3716, %v3720
        %v3727 = vunpack.c.l.b16 %v3711
        %v3728 = vunpack.c.l.b16 %v3712
        %v3729 = vunpack.c.l.b16 %v3713
        %v3730 = vunpack.c.l.b16 %v3714
        %v3731 = vpack.c.b16 %v3728, %v3727
        %v3732 = vpack.c.b16 %v3730, %v3729
        %v3736 = vsel %vm1474, %v3709, 0
        %3738 = vmatprep.subr.bf16.mxu0 0
        %3739 = vmatpush1.bf16.msra.mxu0 %v3731
        %3740 = vmatprep.subr.bf16.mxu0 0
        %3741 = vmatpush1.bf16.msra.mxu0 %v3732
        %3742 = vmatprep.subr.bf16.mxu0 0
        %3743 = vmatpush1.bf16.msra.mxu0 0
        %3744 = vmatprep.subr.bf16.mxu0 0
        %3745 = vmatpush1.bf16.msra.mxu0 0
        %3746 = vmatprep.subr.bf16.mxu0 0
        %3747 = vmatpush1.bf16.msra.mxu0 0
        %3748 = vmatprep.subr.bf16.mxu0 0
        %3749 = vmatpush1.bf16.msra.mxu0 0
        %3750 = vmatprep.subr.bf16.mxu0 0
        %3751 = vmatpush1.bf16.msra.mxu0 0
        %3752 = vmatprep.subr.bf16.mxu0 0
        %3753 = vmatpush1.bf16.msra.mxu0 0
        %3754 = vmatprep.subr.bf16.mxu0 0
        %3755 = vmatpush1.bf16.msra.mxu0 0
        %3756 = vmatprep.subr.bf16.mxu0 0
        %3757 = vmatpush1.bf16.msra.mxu0 0
        %3758 = vmatprep.subr.bf16.mxu0 0
        %3759 = vmatpush1.bf16.msra.mxu0 0
        %3760 = vmatprep.subr.bf16.mxu0 0
        %3761 = vmatpush1.bf16.msra.mxu0 0
        %3762 = vmatprep.subr.bf16.mxu0 0
        %3763 = vmatpush1.bf16.msra.mxu0 0
        %3764 = vmatprep.subr.bf16.mxu0 0
        %3765 = vmatpush1.bf16.msra.mxu0 0
        %3766 = vmatprep.subr.bf16.mxu0 0
        %3767 = vmatpush1.bf16.msra.mxu0 0
        %3768 = vmatprep.subr.bf16.mxu0 0
        %3769 = vmatpush1.bf16.msra.mxu0 0
        %3770 = vmatprep.mubr.bf16.mxu0 0
        %3771 = vmatmul.mubr.bf16.gmra.mrb[0].mxu0 %v3736
        %v3772 = vpop.f32.mrb[0].mxu0
        %v3773 = vadd.f32 %v3721, %v3772
        %v3774 = vpop.f32.mrb[0].mxu0
        %v3775 = vpop.f32.mrb[0].mxu0
        %v3776 = vadd.f32 %v3721, %v3775
        %v3777 = vpop.f32.mrb[0].mxu0
        %3778 = vdwg.mxu0
        %v3779 = vadd.f32 %v2765, %v3773
        %v3780 = vadd.f32 %v2766, %v3776
        %v3781 = vsel %vm1474, %v3779, 0.0
        %3782 = vadd.xlane.f32.xlu0 %v3781
        %v3783 = vpop.xlane.xlu0 %3782
        %v3784 = vsel %vm1474, %v3780, 0.0
        %3785 = vadd.xlane.f32.xlu0 %v3784
        %v3786 = vpop.xlane.xlu0 %3785
        %v3787 = vmul.f32 %v3783, %v1481
        %v3788 = vmul.f32 %v3786, %v1481
        %v3789 = vsub.f32 %v3779, %v3787
        %v3790 = vsub.f32 %v3780, %v3788
        %v3791 = vmul.f32 %v3789, %v3789
        %v3792 = vmul.f32 %v3790, %v3790
        %v3793 = vsel %vm1474, %v3791, 0.0
        %3794 = vadd.xlane.f32.xlu0 %v3793
        %v3795 = vpop.xlane.xlu0 %3794
        %v3796 = vsel %vm1474, %v3792, 0.0
        %3797 = vadd.xlane.f32.xlu0 %v3796
        %v3798 = vpop.xlane.xlu0 %3797
        %v3799 = vmul.f32 %v3795, %v1481
        %v3800 = vmul.f32 %v3798, %v1481
        %v3801 = vadd.f32 %v3799, 1e-05
        %v3802 = vadd.f32 %v3800, 1e-05
        %v3803 = vrsqrt.pop %v3801
        %v3804 = vrsqrt.pop %v3802
        %v3805 = vmul.f32 %v3789, %v3803
        %v3806 = vmul.f32 %v3790, %v3804
        %v3807 = vlaneseq
        %v3808 = vshrl.u32 %v3807, 7
        %v3809 = vsub.s32 2, %v3808
        %v3810 = vrot.slane %v2768, %v3809
        %v3811 = vmul.f32 %v3805, %v3810
        %v3812 = vmul.f32 %v3806, %v3810
        %v3813 = vlaneseq
        %v3814 = vshrl.u32 %v3813, 7
        %v3815 = vsub.s32 3, %v3814
        %v3816 = vrot.slane %v2768, %v3815
        %v3817 = vadd.f32 %v3811, %v3816
        %v3818 = vadd.f32 %v3812, %v3816
        %v3819 = vpack.c.bf16 %v3818, %v3817
        %s3820 = scalar_lea.vmem %s10, 16
        %v3821 = vld [vmem:[%s3820] sm:$0xf]
        %v3822 = vld [vmem:[%s3820 + $0x4] sm:$0xf]
        %v3823 = vld [vmem:[%s3820 + $0x8] sm:$0xf]
        %v3824 = vld [vmem:[%s3820 + $0xc] sm:$0xf]
        %s3825 = scalar_lea.vmem %s11, 1
        %v3826 = vld [vmem:[%s3825] sm:$0x1]
        %v3828 = vlaneseq
        %v3829 = vshrl.u32 %v3828, 7
        %v3830 = vsub.s32 0, %v3829
        %v3831 = vrot.slane %v3826, %v3830
        %v3837 = vunpack.c.l.b16 %v3821
        %v3838 = vunpack.c.l.b16 %v3822
        %v3839 = vunpack.c.l.b16 %v3823
        %v3840 = vunpack.c.l.b16 %v3824
        %v3841 = vpack.c.b16 %v3838, %v3837
        %v3842 = vpack.c.b16 %v3840, %v3839
        %v3846 = vsel %vm1474, %v3819, 0
        %3848 = vmatprep.subr.bf16.mxu0 0
        %3849 = vmatpush1.bf16.msra.mxu0 %v3841
        %3850 = vmatprep.subr.bf16.mxu0 0
        %3851 = vmatpush1.bf16.msra.mxu0 %v3842
        %3852 = vmatprep.subr.bf16.mxu0 0
        %3853 = vmatpush1.bf16.msra.mxu0 0
        %3854 = vmatprep.subr.bf16.mxu0 0
        %3855 = vmatpush1.bf16.msra.mxu0 0
        %3856 = vmatprep.subr.bf16.mxu0 0
        %3857 = vmatpush1.bf16.msra.mxu0 0
        %3858 = vmatprep.subr.bf16.mxu0 0
        %3859 = vmatpush1.bf16.msra.mxu0 0
        %3860 = vmatprep.subr.bf16.mxu0 0
        %3861 = vmatpush1.bf16.msra.mxu0 0
        %3862 = vmatprep.subr.bf16.mxu0 0
        %3863 = vmatpush1.bf16.msra.mxu0 0
        %3864 = vmatprep.subr.bf16.mxu0 0
        %3865 = vmatpush1.bf16.msra.mxu0 0
        %3866 = vmatprep.subr.bf16.mxu0 0
        %3867 = vmatpush1.bf16.msra.mxu0 0
        %3868 = vmatprep.subr.bf16.mxu0 0
        %3869 = vmatpush1.bf16.msra.mxu0 0
        %3870 = vmatprep.subr.bf16.mxu0 0
        %3871 = vmatpush1.bf16.msra.mxu0 0
        %3872 = vmatprep.subr.bf16.mxu0 0
        %3873 = vmatpush1.bf16.msra.mxu0 0
        %3874 = vmatprep.subr.bf16.mxu0 0
        %3875 = vmatpush1.bf16.msra.mxu0 0
        %3876 = vmatprep.subr.bf16.mxu0 0
        %3877 = vmatpush1.bf16.msra.mxu0 0
        %3878 = vmatprep.subr.bf16.mxu0 0
        %3879 = vmatpush1.bf16.msra.mxu0 0
        %3880 = vmatprep.mubr.bf16.mxu0 0
        %3881 = vmatmul.mubr.bf16.gmra.mrb[0].mxu0 %v3846
        %v3882 = vpop.f32.mrb[0].mxu0
        %v3883 = vadd.f32 %v3831, %v3882
        %v3884 = vpop.f32.mrb[0].mxu0
        %v3885 = vpop.f32.mrb[0].mxu0
        %v3886 = vadd.f32 %v3831, %v3885
        %v3887 = vpop.f32.mrb[0].mxu0
        %3888 = vdwg.mxu0
        %v3889 = vmul.f32 %v3883, 1.702
        %v3890 = vmul.f32 %v3886, 1.702
        %v3891 = vxor.u32 %v3889, 2147483648
        %v3892 = vxor.u32 %v3890, 2147483648
        %v3893 = vmul.f32 %v3891, 1.442695
        %v3894 = vpow.pop %v3893
        %v3895 = vmul.f32 %v3892, 1.442695
        %v3896 = vpow.pop %v3895
        %v3897 = vadd.f32 %v3894, 1.0
        %v3898 = vadd.f32 %v3896, 1.0
        %v3899 = vrcp.pop %v3897
        %v3900 = vmul.f32 1.0, %v3899
        %v3901 = vrcp.pop %v3898
        %v3902 = vmul.f32 1.0, %v3901
        %v3903 = vmul.f32 %v3883, %v3900
        %v3904 = vmul.f32 %v3886, %v3902
        %v3905 = vpack.c.bf16 %v3904, %v3903
        %s3906 = scalar_lea.vmem %s12, 64
        %v3907 = vld [vmem:[%s3906] sm:$0xf]
        %v3908 = vld [vmem:[%s3906 + $0x4] sm:$0xf]
        %v3909 = vld [vmem:[%s3906 + $0x8] sm:$0xf]
        %v3910 = vld [vmem:[%s3906 + $0xc] sm:$0xf]
        %v3911 = vld [vmem:[%s3906 + $0x10] sm:$0xf]
        %v3912 = vld [vmem:[%s3906 + $0x14] sm:$0xf]
        %v3913 = vld [vmem:[%s3906 + $0x18] sm:$0xf]
        %v3914 = vld [vmem:[%s3906 + $0x1c] sm:$0xf]
        %v3915 = vld [vmem:[%s3906 + $0x20] sm:$0xf]
        %v3916 = vld [vmem:[%s3906 + $0x24] sm:$0xf]
        %v3917 = vld [vmem:[%s3906 + $0x28] sm:$0xf]
        %v3918 = vld [vmem:[%s3906 + $0x2c] sm:$0xf]
        %v3919 = vld [vmem:[%s3906 + $0x30] sm:$0xf]
        %v3920 = vld [vmem:[%s3906 + $0x34] sm:$0xf]
        %v3921 = vld [vmem:[%s3906 + $0x38] sm:$0xf]
        %v3922 = vld [vmem:[%s3906 + $0x3c] sm:$0xf]
        %v3939 = vunpack.c.l.b16 %v3907
        %v3940 = vunpack.c.l.b16 %v3908
        %v3941 = vunpack.c.l.b16 %v3909
        %v3942 = vunpack.c.l.b16 %v3910
        %v3943 = vunpack.c.l.b16 %v3911
        %v3944 = vunpack.c.l.b16 %v3912
        %v3945 = vunpack.c.l.b16 %v3913
        %v3946 = vunpack.c.l.b16 %v3914
        %v3947 = vunpack.c.l.b16 %v3915
        %v3948 = vunpack.c.l.b16 %v3916
        %v3949 = vunpack.c.l.b16 %v3917
        %v3950 = vunpack.c.l.b16 %v3918
        %v3951 = vunpack.c.l.b16 %v3919
        %v3952 = vunpack.c.l.b16 %v3920
        %v3953 = vunpack.c.l.b16 %v3921
        %v3954 = vunpack.c.l.b16 %v3922
        %v3955 = vpack.c.b16 %v3940, %v3939
        %v3956 = vpack.c.b16 %v3942, %v3941
        %v3957 = vpack.c.b16 %v3944, %v3943
        %v3958 = vpack.c.b16 %v3946, %v3945
        %v3959 = vpack.c.b16 %v3948, %v3947
        %v3960 = vpack.c.b16 %v3950, %v3949
        %v3961 = vpack.c.b16 %v3952, %v3951
        %v3962 = vpack.c.b16 %v3954, %v3953
        %3971 = vmatprep.subr.bf16.mxu0 0
        %3972 = vmatpush1.bf16.msra.mxu0 %v3955
        %3973 = vmatprep.subr.bf16.mxu0 0
        %3974 = vmatpush1.bf16.msra.mxu0 %v3956
        %3975 = vmatprep.subr.bf16.mxu0 0
        %3976 = vmatpush1.bf16.msra.mxu0 %v3957
        %3977 = vmatprep.subr.bf16.mxu0 0
        %3978 = vmatpush1.bf16.msra.mxu0 %v3958
        %3979 = vmatprep.subr.bf16.mxu0 0
        %3980 = vmatpush1.bf16.msra.mxu0 %v3959
        %3981 = vmatprep.subr.bf16.mxu0 0
        %3982 = vmatpush1.bf16.msra.mxu0 %v3960
        %3983 = vmatprep.subr.bf16.mxu0 0
        %3984 = vmatpush1.bf16.msra.mxu0 %v3961
        %3985 = vmatprep.subr.bf16.mxu0 0
        %3986 = vmatpush1.bf16.msra.mxu0 %v3962
        %3987 = vmatprep.subr.bf16.mxu0 0
        %3988 = vmatpush1.bf16.msra.mxu0 0
        %3989 = vmatprep.subr.bf16.mxu0 0
        %3990 = vmatpush1.bf16.msra.mxu0 0
        %3991 = vmatprep.subr.bf16.mxu0 0
        %3992 = vmatpush1.bf16.msra.mxu0 0
        %3993 = vmatprep.subr.bf16.mxu0 0
        %3994 = vmatpush1.bf16.msra.mxu0 0
        %3995 = vmatprep.subr.bf16.mxu0 0
        %3996 = vmatpush1.bf16.msra.mxu0 0
        %3997 = vmatprep.subr.bf16.mxu0 0
        %3998 = vmatpush1.bf16.msra.mxu0 0
        %3999 = vmatprep.subr.bf16.mxu0 0
        %4000 = vmatpush1.bf16.msra.mxu0 0
        %4001 = vmatprep.subr.bf16.mxu0 0
        %4002 = vmatpush1.bf16.msra.mxu0 0
        %4003 = vmatprep.mubr.bf16.mxu0 0
        %4004 = vmatmul.mubr.bf16.gmra.mrb[0].mxu0 %v3905
        %v4005 = vpop.f32.mrb[0].mxu0
        %v4006 = vadd.f32 0.0, %v4005
        %v4007 = vpop.f32.mrb[0].mxu0
        %v4008 = vpop.f32.mrb[0].mxu0
        %v4009 = vadd.f32 0.0, %v4008
        %v4010 = vpop.f32.mrb[0].mxu0
        %4011 = vdwg.mxu0
        %v4012 = vadd.f32 %v3779, %v4006
        %v4013 = vadd.f32 %v3780, %v4009
        %s4014 = scalar_lea.vmem %s13, 1
        %v4015 = vld [vmem:[%s4014] sm:$0x1]
        %v4017 = vlaneseq
        %v4018 = vshrl.u32 %v4017, 7
        %v4019 = vsub.s32 0, %v4018
        %v4020 = vrot.slane %v4015, %v4019
        %v4022 = vadd.f32 %v4012, %v4020
        %v4023 = vadd.f32 %v4013, %v4020
        %v4025 = vrot.slane %v4023, 7
        %v4027 = vsel %vm1453, %v4022, %v4025
        %v4028 = vld [vmem:[%s14] sm:$0x1]
        %v4029 = vld [vmem:[%s14 + $0x1] sm:$0x1]
        %vm4030 = vcmask 254976
        %v4031 = vsel %vm4030, %v4027, 0.0
        %4032 = vadd.xlane.f32.xlu0 %v4031
        %v4033 = vpop.xlane.xlu0 %4032
        %v4034 = vmul.f32 %v4033, %v1481
        %v4035 = vsub.f32 %v4027, %v4034
        %v4036 = vmul.f32 %v4035, %v4035
        %v4037 = vsel %vm4030, %v4036, 0.0
        %4038 = vadd.xlane.f32.xlu0 %v4037
        %v4039 = vpop.xlane.xlu0 %4038
        %v4040 = vmul.f32 %v4039, %v1481
        %v4041 = vadd.f32 %v4040, 1e-05
        %v4042 = vrsqrt.pop %v4041
        %v4043 = vmul.f32 %v4035, %v4042
        %v4044 = vlaneseq
        %v4045 = vshrl.u32 %v4044, 7
        %v4046 = vsub.s32 0, %v4045
        %v4047 = vrot.slane %v4028, %v4046
        %v4048 = vmul.f32 %v4043, %v4047
        %v4049 = vlaneseq
        %v4050 = vshrl.u32 %v4049, 7
        %v4051 = vsub.s32 0, %v4050
        %v4052 = vrot.slane %v4029, %v4051
        %v4053 = vadd.f32 %v4048, %v4052
        %v4054 = vpack.c.bf16 %v4053, %v4053
        %v4055 = vld [vmem:[%s15] sm:$0xf]
        %v4056 = vld [vmem:[%s15 + $0x4] sm:$0xf]
        %v4057 = vld [vmem:[%s15 + $0x8] sm:$0xf]
        %v4058 = vld [vmem:[%s15 + $0xc] sm:$0xf]
        %v4063 = vunpack.c.l.b16 %v4055
        %v4064 = vunpack.c.l.b16 %v4056
        %v4065 = vunpack.c.l.b16 %v4057
        %v4066 = vunpack.c.l.b16 %v4058
        %v4067 = vpack.c.b16 %v4064, %v4063
        %v4068 = vpack.c.b16 %v4066, %v4065
        %v4072 = vsel %vm1474, %v4054, 0
        %4074 = vmatprep.subr.bf16.mxu0 0
        %4075 = vmatpush1.bf16.msra.mxu0 %v4067
        %4076 = vmatprep.subr.bf16.mxu0 0
        %4077 = vmatpush1.bf16.msra.mxu0 %v4068
        %4078 = vmatprep.subr.bf16.mxu0 0
        %4079 = vmatpush1.bf16.msra.mxu0 0
        %4080 = vmatprep.subr.bf16.mxu0 0
        %4081 = vmatpush1.bf16.msra.mxu0 0
        %4082 = vmatprep.subr.bf16.mxu0 0
        %4083 = vmatpush1.bf16.msra.mxu0 0
        %4084 = vmatprep.subr.bf16.mxu0 0
        %4085 = vmatpush1.bf16.msra.mxu0 0
        %4086 = vmatprep.subr.bf16.mxu0 0
        %4087 = vmatpush1.bf16.msra.mxu0 0
        %4088 = vmatprep.subr.bf16.mxu0 0
        %4089 = vmatpush1.bf16.msra.mxu0 0
        %4090 = vmatprep.subr.bf16.mxu0 0
        %4091 = vmatpush1.bf16.msra.mxu0 0
        %4092 = vmatprep.subr.bf16.mxu0 0
        %4093 = vmatpush1.bf16.msra.mxu0 0
        %4094 = vmatprep.subr.bf16.mxu0 0
        %4095 = vmatpush1.bf16.msra.mxu0 0
        %4096 = vmatprep.subr.bf16.mxu0 0
        %4097 = vmatpush1.bf16.msra.mxu0 0
        %4098 = vmatprep.subr.bf16.mxu0 0
        %4099 = vmatpush1.bf16.msra.mxu0 0
        %4100 = vmatprep.subr.bf16.mxu0 0
        %4101 = vmatpush1.bf16.msra.mxu0 0
        %4102 = vmatprep.subr.bf16.mxu0 0
        %4103 = vmatpush1.bf16.msra.mxu0 0
        %4104 = vmatprep.subr.bf16.mxu0 0
        %4105 = vmatpush1.bf16.msra.mxu0 0
        %4106 = vmatprep.mubr.bf16.mxu0 0
        %4107 = vmatmul.mubr.bf16.gmra.mrb[0].mxu0 %v4072
        %v4108 = vpop.f32.mrb[0].mxu0
        %v4109 = vadd.f32 0.0, %v4108
        %v4110 = vpop.f32.mrb[0].mxu0
        %v4111 = vpop.f32.mrb[0].mxu0
        %v4112 = vpop.f32.mrb[0].mxu0
        %4113 = vdwg.mxu0
        %4114 = vst [vmem:[%s514] sm:$0x3] %v4109
        %s4115 = sand.u32 %s379, 1
        %s4116 = scalar_lea.sflag [#allocation3], %s4115
        %s4117 = sand.u32 %s379, 1
        %s4118 = smul.addr %s4117, 2
        %s4119 = scalar_lea.vmem [#allocation2], %s4118
        // Predicated region
        $region85: #{clip_vision_forward.1} parent=83 // pred_check
          %p4120 = pneg %p389
        $region86: #{clip_vision_forward.1} parent=83 // pred_check_branch
          %4122 = sbr.rel (%p4120) target = $region88
        $region87: #{clip_vision_forward.1} parent=83 // pred_region
          %s4124 = ssub.s32 32, 32
          %4125 = vsyncadd %s4116, %s4124
          %s4126 = smul.addr %s30, 32
          %s4127 = scalar_lea.hbm %s16, %s4126
          %s4129 = sshll.u32 %s4119, 4
          %s4130 = int_to_ptr.vmem [resolvable:$true] %s4129
          %4132 = dma.vmem_to_hbm [thread:$0]  %s4130, 32, %s4127, %s4116
        $region88: #{clip_vision_forward.1} parent=83 // pred_fallthru
          _
      $region84: #{clip_vision_forward.1} parent=5 // pred_fallthru
        _
      %p4133 = scmp.le.s32.totalorder 2, %s25
      // Predicated region
      $region89: #{clip_vision_forward.1} parent=5 // pred_check
        %p4134 = pneg %p4133
      $region90: #{clip_vision_forward.1} parent=5 // pred_check_branch
        %4136 = sbr.rel (%p4134) target = $region92
      $region91: #{clip_vision_forward.1} parent=5 // pred_region
        %s4137 = ssub.s32 %s25, 2
        // Predicated region
        $region93: #{clip_vision_forward.1} parent=91 // pred_check
          %p4138 = pneg %p395
        $region94: #{clip_vision_forward.1} parent=91 // pred_check_branch
          %4140 = sbr.rel (%p4138) target = $region96
        $region95: #{clip_vision_forward.1} parent=91 // pred_region
          %s4141 = sand.u32 %s380, 1
          %s4142 = scalar_lea.sflag [#allocation3], %s4141
          %s4143 = sand.u32 %s380, 1
          %s4144 = smul.addr %s4143, 2
          %s4145 = scalar_lea.vmem [#allocation2], %s4144
          %4146 = dma.done %s4142, 32
        $region96: #{clip_vision_forward.1} parent=91 // pred_fallthru
          _
      $region92: #{clip_vision_forward.1} parent=5 // pred_fallthru
        _
    $region6: #{clip_vision_forward.1} parent=1 // loop_footer
      %s29 = sadd.s32 1, %s25
    $region7: #{clip_vision_forward.1} parent=1 // loop_footer_branch
      %24 = sbr.rel target = $region3
    $region8: #{clip_vision_forward.1} parent=1 // loop_exit
      _
    %4147 = vsyncpa [#allocation3], 1
    %s4148 = scalar_lea.sflag [#allocation3], 1
    %4149 = vsyncpa %s4148, 1

</llo_original>
